<compile_context>
chip_gen: v5e
topology: v5e:2x2
jax: 0.10.0
libtpu: 0.0.40
codegen_flags: <defaults>
</compile_context>

<pallas_src>
import jax
import jax.numpy as jnp
from jax import lax
from jax.experimental import pallas as pl
from jax.experimental.pallas import tpu as pltpu

# ----------------------------- model hyper-params -----------------------------
N_VOCAB = 256
H_DIM = 128          # encoder hidden / emb_dim
Z_DIM = 128          # latent dim == decoder hidden
EMB_DIM = H_DIM
P_WORD_DROPOUT = 0.3
UNK_IDX, PAD_IDX, START_IDX, EOS_IDX = 0, 1, 2, 3

SEQ_LEN = 8
MBSIZE = 8


# ------------------------------- Pallas kernel ---------------------------------
def _gru_step(h, gi, gh, b_hn_b, H):
    """PyTorch nn.GRU gate math, gate order [r, z, n].

    gi already contains x@W_ih + (b_ir+b_hr, b_iz+b_hz, b_in); gh = h@W_hh (no bias);
    b_hn_b is the only hidden bias that cannot be folded (multiplied by r), pre-broadcast
    to (B, H) outside the unrolled loop.
    """
    r = jax.nn.sigmoid(gi[:, :H] + gh[:, :H])
    zg = jax.nn.sigmoid(gi[:, H:2 * H] + gh[:, H:2 * H])
    n = jnp.tanh(gi[:, 2 * H:] + r * (gh[:, 2 * H:] + b_hn_b))
    return (1.0 - zg) * n + zg * h


def vae_kernel(enc_emb_ref, dec_emb_ref, eps_ref, onehot_ref,
               enc_wih_ref, enc_whh_ref, enc_bi_ref, enc_bhn_ref,
               qw_ref, qb_ref,
               dec_wih_e_ref, dec_zcat_ref, dec_bi_ref, dec_bhn_ref,
               whh_fc_ref, fcb_ref,
               recon_ref, kl_ref,
               gi_enc_ref, gi_dec_ref):
    """Whole RNN_VAE forward in one invocation (no grid): losses out, nothing else."""
    seq, B, H3 = gi_enc_ref.shape
    H = enc_whh_ref.shape[0]
    Z = qw_ref.shape[1] // 2
    V = fcb_ref.shape[1]

    # ---- Hoisted input projections: one (seq*B,E)x(E,3H) bf16 MXU op each. ----
    gi_enc_ref[...] = (
        jnp.dot(enc_emb_ref[...], enc_wih_ref[...], preferred_element_type=jnp.float32)
        + enc_bi_ref[...]
    ).reshape(seq, B, H3)
    gi_dec_ref[...] = (
        jnp.dot(dec_emb_ref[...], dec_wih_e_ref[...], preferred_element_type=jnp.float32)
        + dec_bi_ref[...]
    ).reshape(seq, B, H3)

    # ---- Encoder GRU recurrence (h stays in vregs; fully unrolled, seq is static). ----
    enc_bhn_b = jnp.broadcast_to(enc_bhn_ref[...], (B, H))
    h = jnp.zeros((B, H), jnp.float32)               # encoder h0 = 0 (PyTorch `None`)
    for t in range(seq):
        gh = jnp.dot(h.astype(jnp.bfloat16), enc_whh_ref[...],
                     preferred_element_type=jnp.float32)
        h = _gru_step(h, gi_enc_ref[t], gh, enc_bhn_b, H)

    # ---- Fused q_mu / q_logvar (one (B,H)x(H,2Z) matmul) + fused KL. ----
    mulv = jnp.dot(h.astype(jnp.bfloat16), qw_ref[...],
                   preferred_element_type=jnp.float32) + qb_ref[...]
    mu = mulv[:, :Z]
    lv = mulv[:, Z:]
    per_row = 0.5 * jnp.sum(jnp.exp(lv) + mu * mu - 1.0 - lv, axis=1, keepdims=True)
    kl_ref[...] = jnp.sum(per_row, axis=0, keepdims=True) / jnp.float32(B)

    # ---- sample_z: reparameterization + whole-(B,Z)-tensor L2 normalization. ----
    z = mu + jnp.exp(lv * 0.5) * eps_ref[...]        # eps is (1,Z), shared across batch
    nsq = jnp.sum(jnp.sum(z * z, axis=1, keepdims=True), axis=0, keepdims=True)
    z = z * lax.rsqrt(nsq)

    # ---- Decoder z projections, one (B,Z)x(Z,6H) matmul: [gi_z | gh_0] = z @ [Wih_z|Whh]. ----
    zp = jnp.dot(z.astype(jnp.bfloat16), dec_zcat_ref[...],
                 preferred_element_type=jnp.float32)             # (B, 6H)
    gi_dec_ref[...] = gi_dec_ref[...] + zp[:, :H3]               # one-shot gi_z add (off chain)
    gh_cur = zp[:, H3:]                                          # gh for h0 = z

    dec_bhn_b = jnp.broadcast_to(dec_bhn_ref[...], (B, H))
    fcb_b = jnp.broadcast_to(fcb_ref[...], (B, V))

    # ---- Decoder GRU + decoder_fc + CE; one fused (B,H)x(H,3H+V) matmul per step. ----
    h = z                                                        # decoder h0 = z
    ce_rows = jnp.zeros((B, 1), jnp.float32)
    for t in range(seq):
        h = _gru_step(h, gi_dec_ref[t], gh_cur, dec_bhn_b, H)
        comb = jnp.dot(h.astype(jnp.bfloat16), whh_fc_ref[...],
                       preferred_element_type=jnp.float32)       # (B, 3H + V)
        gh_cur = comb[:, :H3]                                    # gh for step t+1
        logits = comb[:, H3:] + fcb_b                            # (B, V) logits for step t
        m = jnp.max(logits, axis=-1, keepdims=True)
        lse = m + jnp.log(jnp.sum(jnp.exp(logits - m), axis=-1, keepdims=True))
        tgt_logit = jnp.sum(onehot_ref[t] * logits, axis=-1, keepdims=True)
        ce_rows = ce_rows + (lse - tgt_logit)                    # (B,1) VPU add, off XLU

    # F.cross_entropy(size_average=True): mean over ALL seq*B positions (no ignore_index).
    recon_ref[...] = jnp.sum(ce_rows, axis=0, keepdims=True) / jnp.float32(seq * B)


def rnn_vae_pallas(enc_emb, dec_emb, eps, onehot,
                   enc_wih, enc_whh, enc_bi, enc_bhn, q_w, q_b,
                   dec_wih_e, dec_zcat, dec_bi, dec_bhn, whh_fc, fc_b,
                   *, seq, B):
    H = enc_whh.shape[0]
    recon, kl = pl.pallas_call(
        vae_kernel,
        out_shape=(jax.ShapeDtypeStruct((1, 1), jnp.float32),
                   jax.ShapeDtypeStruct((1, 1), jnp.float32)),
        scratch_shapes=[pltpu.VMEM((seq, B, 3 * H), jnp.float32),
                        pltpu.VMEM((seq, B, 3 * H), jnp.float32)],
    )(enc_emb, dec_emb, eps, onehot,
      enc_wih, enc_whh, enc_bi, enc_bhn, q_w, q_b,
      dec_wih_e, dec_zcat, dec_bi, dec_bhn, whh_fc, fc_b)
    return recon[0, 0], kl[0, 0]


# ------------------------------ parameter init ---------------------------------
def init_params(key):
    def uni(k, shape, fan_in):
        bound = 1.0 / jnp.sqrt(jnp.float32(fan_in))
        return jax.random.uniform(k, shape, jnp.float32, -bound, bound)

    keys = jax.random.split(key, 16)
    dec_in = EMB_DIM + Z_DIM

    emb = jax.random.normal(keys[0], (N_VOCAB, EMB_DIM), jnp.float32)
    emb = emb.at[PAD_IDX].set(0.0)  # nn.Embedding(padding_idx=PAD_IDX)

    params = dict(
        emb=emb,
        # encoder GRU (input EMB_DIM, hidden H_DIM); weights stored as (in, 3H), order [r,z,n]
        enc_wih=uni(keys[1], (EMB_DIM, 3 * H_DIM), H_DIM),
        enc_whh=uni(keys[2], (H_DIM, 3 * H_DIM), H_DIM),
        enc_bih=uni(keys[3], (1, 3 * H_DIM), H_DIM),
        enc_bhh=uni(keys[4], (1, 3 * H_DIM), H_DIM),
        # q_mu / q_logvar linears (h_dim -> z_dim), stored as (in, out)
        q_mu_w=uni(keys[5], (H_DIM, Z_DIM), H_DIM),
        q_mu_b=uni(keys[6], (1, Z_DIM), H_DIM),
        q_lv_w=uni(keys[7], (H_DIM, Z_DIM), H_DIM),
        q_lv_b=uni(keys[8], (1, Z_DIM), H_DIM),
        # decoder GRU (input EMB_DIM + Z_DIM, hidden Z_DIM)
        # (nn.GRU dropout=0.3 has no effect with a single layer)
        dec_wih=uni(keys[9], (dec_in, 3 * Z_DIM), Z_DIM),
        dec_whh=uni(keys[10], (Z_DIM, 3 * Z_DIM), Z_DIM),
        dec_bih=uni(keys[11], (1, 3 * Z_DIM), Z_DIM),
        dec_bhh=uni(keys[12], (1, 3 * Z_DIM), Z_DIM),
        # decoder_fc (z_dim -> n_vocab)
        fc_w=uni(keys[13], (Z_DIM, N_VOCAB), Z_DIM),
        fc_b=uni(keys[14], (1, N_VOCAB), Z_DIM),
    )
    return params


# ------------------------------ forward pass ------------------------------------
@jax.jit
def rnn_vae_forward(sentence, params, rng_key):
    """sentence: (seq_len, mbsize) int32 word indices. Returns (recon_loss, kl)."""
    seq_len, mbsize = sentence.shape
    k_eps, k_drop = jax.random.split(rng_key)
    bf = jnp.bfloat16

    # decoder targets: sentence shifted left, padded with PAD_IDX; one-hot for in-kernel CE
    pad_words = jnp.full((1, mbsize), PAD_IDX, dtype=sentence.dtype)
    dec_targets = jnp.concatenate([sentence[1:], pad_words], axis=0)
    onehot = jax.nn.one_hot(dec_targets, N_VOCAB, dtype=jnp.float32)      # (seq, B, V)

    # ---------- trace-time parameter folding + bf16 MXU-operand casts (free under jit) ----------
    enc_bi = params["enc_bih"] + jnp.concatenate(
        [params["enc_bhh"][:, :2 * H_DIM], jnp.zeros((1, H_DIM), jnp.float32)], axis=1)
    enc_bhn = params["enc_bhh"][:, 2 * H_DIM:]
    dec_bi = params["dec_bih"] + jnp.concatenate(
        [params["dec_bhh"][:, :2 * Z_DIM], jnp.zeros((1, Z_DIM), jnp.float32)], axis=1)
    dec_bhn = params["dec_bhh"][:, 2 * Z_DIM:]
    enc_wih = params["enc_wih"].astype(bf)
    enc_whh = params["enc_whh"].astype(bf)
    q_w = jnp.concatenate([params["q_mu_w"], params["q_lv_w"]], axis=1).astype(bf)   # (H, 2Z)
    q_b = jnp.concatenate([params["q_mu_b"], params["q_lv_b"]], axis=1)              # (1, 2Z)
    dec_wih_e = params["dec_wih"][:EMB_DIM].astype(bf)                               # (E, 3H)
    dec_zcat = jnp.concatenate(                                                      # (Z, 6H)
        [params["dec_wih"][EMB_DIM:], params["dec_whh"]], axis=1).astype(bf)
    whh_fc = jnp.concatenate([params["dec_whh"], params["fc_w"]], axis=1).astype(bf) # (Z, 3H+V)
    fc_b = params["fc_b"]

    # TODO(synk): embedding gather + RNG sampling stay in plain JAX (data-dependent glue).
    enc_emb = jnp.take(params["emb"], sentence, axis=0).astype(bf).reshape(
        seq_len * mbsize, EMB_DIM)
    drop_mask = jax.random.bernoulli(k_drop, P_WORD_DROPOUT, sentence.shape)
    dec_inputs = jnp.where(drop_mask, jnp.int32(UNK_IDX), sentence)
    dec_emb = jnp.take(params["emb"], dec_inputs, axis=0).astype(bf).reshape(
        seq_len * mbsize, EMB_DIM)
    eps = jax.random.normal(k_eps, (1, Z_DIM), jnp.float32)   # torch.randn(z_dim): shared over batch

    # ---------- single fused Pallas kernel: encoder + sample_z + decoder + losses ----------
    recon, kl = rnn_vae_pallas(
        enc_emb, dec_emb, eps, onehot,
        enc_wih, enc_whh, enc_bi, enc_bhn, q_w, q_b,
        dec_wih_e, dec_zcat, dec_bi, dec_bhn, whh_fc, fc_b,
        seq=seq_len, B=mbsize)
    return recon, kl


# ----------------------------------- main ---------------------------------------
if __name__ == "__main__":
    root = jax.random.PRNGKey(0)
    k_param, k_data, k_fwd = jax.random.split(root, 3)

    params = init_params(k_param)
    sentence = jax.random.randint(k_data, (SEQ_LEN, MBSIZE), 0, N_VOCAB, dtype=jnp.int32)

    recon_loss, kl = rnn_vae_forward(sentence, params, k_fwd)
    jax.block_until_ready((recon_loss, kl))

    assert recon_loss.shape == () and kl.shape == ()
    assert jnp.isfinite(recon_loss) and jnp.isfinite(kl)
    print("KERNEL_OK")
</pallas_src>

<mosaic_0001>
module attributes {stable_mosaic.version = 11 : i64} {
  func.func @vae_kernel(%arg0: memref<64x128xbf16, #tpu.memory_space<vmem>>, %arg1: memref<64x128xbf16, #tpu.memory_space<vmem>>, %arg2: memref<1x128xf32, #tpu.memory_space<vmem>>, %arg3: memref<8x8x256xf32, #tpu.memory_space<vmem>>, %arg4: memref<128x384xbf16, #tpu.memory_space<vmem>>, %arg5: memref<128x384xbf16, #tpu.memory_space<vmem>>, %arg6: memref<1x384xf32, #tpu.memory_space<vmem>>, %arg7: memref<1x128xf32, #tpu.memory_space<vmem>>, %arg8: memref<128x256xbf16, #tpu.memory_space<vmem>>, %arg9: memref<1x256xf32, #tpu.memory_space<vmem>>, %arg10: memref<128x384xbf16, #tpu.memory_space<vmem>>, %arg11: memref<128x768xbf16, #tpu.memory_space<vmem>>, %arg12: memref<1x384xf32, #tpu.memory_space<vmem>>, %arg13: memref<1x128xf32, #tpu.memory_space<vmem>>, %arg14: memref<128x640xbf16, #tpu.memory_space<vmem>>, %arg15: memref<1x256xf32, #tpu.memory_space<vmem>>, %arg16: memref<1x1xf32, #tpu.memory_space<vmem>>, %arg17: memref<1x1xf32, #tpu.memory_space<vmem>>, %arg18: memref<8x8x384xf32, #tpu.memory_space<vmem>>, %arg19: memref<8x8x384xf32, #tpu.memory_space<vmem>>) attributes {dimension_semantics = [], scalar_prefetch = 0 : i64, scratch_operands = 2 : i64, tpu.core_type = #tpu.core_type<tc>} {
    %c0 = arith.constant 0 : index
    %c0_0 = arith.constant 0 : index
    %0 = vector.load %arg0[%c0, %c0_0] : memref<64x128xbf16, #tpu.memory_space<vmem>>, vector<64x128xbf16>
    %c0_1 = arith.constant 0 : index
    %c0_2 = arith.constant 0 : index
    %1 = vector.load %arg4[%c0_1, %c0_2] : memref<128x384xbf16, #tpu.memory_space<vmem>>, vector<128x384xbf16>
    %cst = arith.constant dense<0.000000e+00> : vector<64x384xf32>
    %2 = tpu.matmul %0, %1, %cst {dimension_numbers = #tpu.dot_dimension_numbers<[1], [0], [0], [1], [0, 0, 1, 1], [], []>} : vector<64x128xbf16>, vector<128x384xbf16>, vector<64x384xf32> -> vector<64x384xf32>
    %c0_3 = arith.constant 0 : index
    %c0_4 = arith.constant 0 : index
    %3 = vector.load %arg6[%c0_3, %c0_4] : memref<1x384xf32, #tpu.memory_space<vmem>>, vector<1x384xf32>
    %4 = vector.broadcast %3 : vector<1x384xf32> to vector<64x384xf32>
    %5 = arith.addf %2, %4 : vector<64x384xf32>
    %6 = vector.shape_cast %5 : vector<64x384xf32> to vector<8x8x384xf32>
    %c0_5 = arith.constant 0 : index
    %c0_6 = arith.constant 0 : index
    %c0_7 = arith.constant 0 : index
    %7 = vector.load %arg18[%c0_5, %c0_6, %c0_7] : memref<8x8x384xf32, #tpu.memory_space<vmem>>, vector<8x8x384xf32>
    tpu.vector_store %arg18[%c0_5, %c0_6, %c0_7], %6 {strides = array<i32>} : memref<8x8x384xf32, #tpu.memory_space<vmem>>, vector<8x8x384xf32>,
    %c0_8 = arith.constant 0 : index
    %c0_9 = arith.constant 0 : index
    %8 = vector.load %arg1[%c0_8, %c0_9] : memref<64x128xbf16, #tpu.memory_space<vmem>>, vector<64x128xbf16>
    %c0_10 = arith.constant 0 : index
    %c0_11 = arith.constant 0 : index
    %9 = vector.load %arg10[%c0_10, %c0_11] : memref<128x384xbf16, #tpu.memory_space<vmem>>, vector<128x384xbf16>
    %cst_12 = arith.constant dense<0.000000e+00> : vector<64x384xf32>
    %10 = tpu.matmul %8, %9, %cst_12 {dimension_numbers = #tpu.dot_dimension_numbers<[1], [0], [0], [1], [0, 0, 1, 1], [], []>} : vector<64x128xbf16>, vector<128x384xbf16>, vector<64x384xf32> -> vector<64x384xf32>
    %c0_13 = arith.constant 0 : index
    %c0_14 = arith.constant 0 : index
    %11 = vector.load %arg12[%c0_13, %c0_14] : memref<1x384xf32, #tpu.memory_space<vmem>>, vector<1x384xf32>
    %12 = vector.broadcast %11 : vector<1x384xf32> to vector<64x384xf32>
    %13 = arith.addf %10, %12 : vector<64x384xf32>
    %14 = vector.shape_cast %13 : vector<64x384xf32> to vector<8x8x384xf32>
    %c0_15 = arith.constant 0 : index
    %c0_16 = arith.constant 0 : index
    %c0_17 = arith.constant 0 : index
    %15 = vector.load %arg19[%c0_15, %c0_16, %c0_17] : memref<8x8x384xf32, #tpu.memory_space<vmem>>, vector<8x8x384xf32>
    tpu.vector_store %arg19[%c0_15, %c0_16, %c0_17], %14 {strides = array<i32>} : memref<8x8x384xf32, #tpu.memory_space<vmem>>, vector<8x8x384xf32>,
    %c0_18 = arith.constant 0 : index
    %c0_19 = arith.constant 0 : index
    %16 = vector.load %arg7[%c0_18, %c0_19] : memref<1x128xf32, #tpu.memory_space<vmem>>, vector<1x128xf32>
    %17 = vector.shape_cast %16 : vector<1x128xf32> to vector<1x128xf32>
    %18 = vector.broadcast %17 : vector<1x128xf32> to vector<8x128xf32>
    %cst_20 = arith.constant 0.000000e+00 : f32
    %19 = vector.broadcast %cst_20 : f32 to vector<8x128xf32>
    %20 = arith.truncf %19 : vector<8x128xf32> to vector<8x128xbf16>
    %c0_21 = arith.constant 0 : index
    %c0_22 = arith.constant 0 : index
    %21 = vector.load %arg5[%c0_21, %c0_22] : memref<128x384xbf16, #tpu.memory_space<vmem>>, vector<128x384xbf16>
    %cst_23 = arith.constant dense<0.000000e+00> : vector<8x384xf32>
    %22 = tpu.matmul %20, %21, %cst_23 {dimension_numbers = #tpu.dot_dimension_numbers<[1], [0], [0], [1], [0, 0, 1, 1], [], []>} : vector<8x128xbf16>, vector<128x384xbf16>, vector<8x384xf32> -> vector<8x384xf32>
    %c0_24 = arith.constant 0 : index
    %c0_25 = arith.constant 0 : index
    %c0_26 = arith.constant 0 : index
    %23 = vector.load %arg18[%c0_24, %c0_25, %c0_26] : memref<8x8x384xf32, #tpu.memory_space<vmem>>, vector<1x8x384xf32>
    %24 = vector.shape_cast %23 : vector<1x8x384xf32> to vector<8x384xf32>
    %25 = vector.extract_strided_slice %24 {offsets = [0, 0], sizes = [8, 128], strides = [1, 1]} : vector<8x384xf32> to vector<8x128xf32>
    %26 = vector.extract_strided_slice %22 {offsets = [0, 0], sizes = [8, 128], strides = [1, 1]} : vector<8x384xf32> to vector<8x128xf32>
    %27 = arith.addf %25, %26 : vector<8x128xf32>
    %28 = arith.negf %27 : vector<8x128xf32>
    %29 = math.exp %28 : vector<8x128xf32>
    %cst_27 = arith.constant 1.000000e+00 : f32
    %30 = vector.broadcast %cst_27 : f32 to vector<8x128xf32>
    %31 = arith.addf %30, %29 : vector<8x128xf32>
    %32 = arith.divf %30, %31 : vector<8x128xf32>
    %33 = vector.extract_strided_slice %24 {offsets = [0, 128], sizes = [8, 128], strides = [1, 1]} : vector<8x384xf32> to vector<8x128xf32>
    %34 = vector.extract_strided_slice %22 {offsets = [0, 128], sizes = [8, 128], strides = [1, 1]} : vector<8x384xf32> to vector<8x128xf32>
    %35 = arith.addf %33, %34 : vector<8x128xf32>
    %36 = arith.negf %35 : vector<8x128xf32>
    %37 = math.exp %36 : vector<8x128xf32>
    %cst_28 = arith.constant 1.000000e+00 : f32
    %38 = vector.broadcast %cst_28 : f32 to vector<8x128xf32>
    %39 = arith.addf %38, %37 : vector<8x128xf32>
    %40 = arith.divf %38, %39 : vector<8x128xf32>
    %41 = vector.extract_strided_slice %24 {offsets = [0, 256], sizes = [8, 128], strides = [1, 1]} : vector<8x384xf32> to vector<8x128xf32>
    %42 = vector.extract_strided_slice %22 {offsets = [0, 256], sizes = [8, 128], strides = [1, 1]} : vector<8x384xf32> to vector<8x128xf32>
    %43 = arith.addf %42, %18 : vector<8x128xf32>
    %44 = arith.mulf %32, %43 : vector<8x128xf32>
    %45 = arith.addf %41, %44 : vector<8x128xf32>
    %46 = math.tanh %45 : vector<8x128xf32>
    %cst_29 = arith.constant 1.000000e+00 : f32
    %47 = vector.broadcast %cst_29 : f32 to vector<8x128xf32>
    %48 = arith.subf %47, %40 : vector<8x128xf32>
    %49 = arith.mulf %48, %46 : vector<8x128xf32>
    %50 = arith.mulf %40, %19 : vector<8x128xf32>
    %51 = arith.addf %49, %50 : vector<8x128xf32>
    %52 = arith.truncf %51 : vector<8x128xf32> to vector<8x128xbf16>
    %c0_30 = arith.constant 0 : index
    %c0_31 = arith.constant 0 : index
    %53 = vector.load %arg5[%c0_30, %c0_31] : memref<128x384xbf16, #tpu.memory_space<vmem>>, vector<128x384xbf16>
    %cst_32 = arith.constant dense<0.000000e+00> : vector<8x384xf32>
    %54 = tpu.matmul %52, %53, %cst_32 {dimension_numbers = #tpu.dot_dimension_numbers<[1], [0], [0], [1], [0, 0, 1, 1], [], []>} : vector<8x128xbf16>, vector<128x384xbf16>, vector<8x384xf32> -> vector<8x384xf32>
    %c1 = arith.constant 1 : index
    %c0_33 = arith.constant 0 : index
    %c0_34 = arith.constant 0 : index
    %55 = vector.load %arg18[%c1, %c0_33, %c0_34] : memref<8x8x384xf32, #tpu.memory_space<vmem>>, vector<1x8x384xf32>
    %56 = vector.shape_cast %55 : vector<1x8x384xf32> to vector<8x384xf32>
    %57 = vector.extract_strided_slice %56 {offsets = [0, 0], sizes = [8, 128], strides = [1, 1]} : vector<8x384xf32> to vector<8x128xf32>
    %58 = vector.extract_strided_slice %54 {offsets = [0, 0], sizes = [8, 128], strides = [1, 1]} : vector<8x384xf32> to vector<8x128xf32>
    %59 = arith.addf %57, %58 : vector<8x128xf32>
    %60 = arith.negf %59 : vector<8x128xf32>
    %61 = math.exp %60 : vector<8x128xf32>
    %cst_35 = arith.constant 1.000000e+00 : f32
    %62 = vector.broadcast %cst_35 : f32 to vector<8x128xf32>
    %63 = arith.addf %62, %61 : vector<8x128xf32>
    %64 = arith.divf %62, %63 : vector<8x128xf32>
    %65 = vector.extract_strided_slice %56 {offsets = [0, 128], sizes = [8, 128], strides = [1, 1]} : vector<8x384xf32> to vector<8x128xf32>
    %66 = vector.extract_strided_slice %54 {offsets = [0, 128], sizes = [8, 128], strides = [1, 1]} : vector<8x384xf32> to vector<8x128xf32>
    %67 = arith.addf %65, %66 : vector<8x128xf32>
    %68 = arith.negf %67 : vector<8x128xf32>
    %69 = math.exp %68 : vector<8x128xf32>
    %cst_36 = arith.constant 1.000000e+00 : f32
    %70 = vector.broadcast %cst_36 : f32 to vector<8x128xf32>
    %71 = arith.addf %70, %69 : vector<8x128xf32>
    %72 = arith.divf %70, %71 : vector<8x128xf32>
    %73 = vector.extract_strided_slice %56 {offsets = [0, 256], sizes = [8, 128], strides = [1, 1]} : vector<8x384xf32> to vector<8x128xf32>
    %74 = vector.extract_strided_slice %54 {offsets = [0, 256], sizes = [8, 128], strides = [1, 1]} : vector<8x384xf32> to vector<8x128xf32>
    %75 = arith.addf %74, %18 : vector<8x128xf32>
    %76 = arith.mulf %64, %75 : vector<8x128xf32>
    %77 = arith.addf %73, %76 : vector<8x128xf32>
    %78 = math.tanh %77 : vector<8x128xf32>
    %cst_37 = arith.constant 1.000000e+00 : f32
    %79 = vector.broadcast %cst_37 : f32 to vector<8x128xf32>
    %80 = arith.subf %79, %72 : vector<8x128xf32>
    %81 = arith.mulf %80, %78 : vector<8x128xf32>
    %82 = arith.mulf %72, %51 : vector<8x128xf32>
    %83 = arith.addf %81, %82 : vector<8x128xf32>
    %84 = arith.truncf %83 : vector<8x128xf32> to vector<8x128xbf16>
    %c0_38 = arith.constant 0 : index
    %c0_39 = arith.constant 0 : index
    %85 = vector.load %arg5[%c0_38, %c0_39] : memref<128x384xbf16, #tpu.memory_space<vmem>>, vector<128x384xbf16>
    %cst_40 = arith.constant dense<0.000000e+00> : vector<8x384xf32>
    %86 = tpu.matmul %84, %85, %cst_40 {dimension_numbers = #tpu.dot_dimension_numbers<[1], [0], [0], [1], [0, 0, 1, 1], [], []>} : vector<8x128xbf16>, vector<128x384xbf16>, vector<8x384xf32> -> vector<8x384xf32>
    %c2 = arith.constant 2 : index
    %c0_41 = arith.constant 0 : index
    %c0_42 = arith.constant 0 : index
    %87 = vector.load %arg18[%c2, %c0_41, %c0_42] : memref<8x8x384xf32, #tpu.memory_space<vmem>>, vector<1x8x384xf32>
    %88 = vector.shape_cast %87 : vector<1x8x384xf32> to vector<8x384xf32>
    %89 = vector.extract_strided_slice %88 {offsets = [0, 0], sizes = [8, 128], strides = [1, 1]} : vector<8x384xf32> to vector<8x128xf32>
    %90 = vector.extract_strided_slice %86 {offsets = [0, 0], sizes = [8, 128], strides = [1, 1]} : vector<8x384xf32> to vector<8x128xf32>
    %91 = arith.addf %89, %90 : vector<8x128xf32>
    %92 = arith.negf %91 : vector<8x128xf32>
    %93 = math.exp %92 : vector<8x128xf32>
    %cst_43 = arith.constant 1.000000e+00 : f32
    %94 = vector.broadcast %cst_43 : f32 to vector<8x128xf32>
    %95 = arith.addf %94, %93 : vector<8x128xf32>
    %96 = arith.divf %94, %95 : vector<8x128xf32>
    %97 = vector.extract_strided_slice %88 {offsets = [0, 128], sizes = [8, 128], strides = [1, 1]} : vector<8x384xf32> to vector<8x128xf32>
    %98 = vector.extract_strided_slice %86 {offsets = [0, 128], sizes = [8, 128], strides = [1, 1]} : vector<8x384xf32> to vector<8x128xf32>
    %99 = arith.addf %97, %98 : vector<8x128xf32>
    %100 = arith.negf %99 : vector<8x128xf32>
    %101 = math.exp %100 : vector<8x128xf32>
    %cst_44 = arith.constant 1.000000e+00 : f32
    %102 = vector.broadcast %cst_44 : f32 to vector<8x128xf32>
    %103 = arith.addf %102, %101 : vector<8x128xf32>
    %104 = arith.divf %102, %103 : vector<8x128xf32>
    %105 = vector.extract_strided_slice %88 {offsets = [0, 256], sizes = [8, 128], strides = [1, 1]} : vector<8x384xf32> to vector<8x128xf32>
    %106 = vector.extract_strided_slice %86 {offsets = [0, 256], sizes = [8, 128], strides = [1, 1]} : vector<8x384xf32> to vector<8x128xf32>
    %107 = arith.addf %106, %18 : vector<8x128xf32>
    %108 = arith.mulf %96, %107 : vector<8x128xf32>
    %109 = arith.addf %105, %108 : vector<8x128xf32>
    %110 = math.tanh %109 : vector<8x128xf32>
    %cst_45 = arith.constant 1.000000e+00 : f32
    %111 = vector.broadcast %cst_45 : f32 to vector<8x128xf32>
    %112 = arith.subf %111, %104 : vector<8x128xf32>
    %113 = arith.mulf %112, %110 : vector<8x128xf32>
    %114 = arith.mulf %104, %83 : vector<8x128xf32>
    %115 = arith.addf %113, %114 : vector<8x128xf32>
    %116 = arith.truncf %115 : vector<8x128xf32> to vector<8x128xbf16>
    %c0_46 = arith.constant 0 : index
    %c0_47 = arith.constant 0 : index
    %117 = vector.load %arg5[%c0_46, %c0_47] : memref<128x384xbf16, #tpu.memory_space<vmem>>, vector<128x384xbf16>
    %cst_48 = arith.constant dense<0.000000e+00> : vector<8x384xf32>
    %118 = tpu.matmul %116, %117, %cst_48 {dimension_numbers = #tpu.dot_dimension_numbers<[1], [0], [0], [1], [0, 0, 1, 1], [], []>} : vector<8x128xbf16>, vector<128x384xbf16>, vector<8x384xf32> -> vector<8x384xf32>
    %c3 = arith.constant 3 : index
    %c0_49 = arith.constant 0 : index
    %c0_50 = arith.constant 0 : index
    %119 = vector.load %arg18[%c3, %c0_49, %c0_50] : memref<8x8x384xf32, #tpu.memory_space<vmem>>, vector<1x8x384xf32>
    %120 = vector.shape_cast %119 : vector<1x8x384xf32> to vector<8x384xf32>
    %121 = vector.extract_strided_slice %120 {offsets = [0, 0], sizes = [8, 128], strides = [1, 1]} : vector<8x384xf32> to vector<8x128xf32>
    %122 = vector.extract_strided_slice %118 {offsets = [0, 0], sizes = [8, 128], strides = [1, 1]} : vector<8x384xf32> to vector<8x128xf32>
    %123 = arith.addf %121, %122 : vector<8x128xf32>
    %124 = arith.negf %123 : vector<8x128xf32>
    %125 = math.exp %124 : vector<8x128xf32>
    %cst_51 = arith.constant 1.000000e+00 : f32
    %126 = vector.broadcast %cst_51 : f32 to vector<8x128xf32>
    %127 = arith.addf %126, %125 : vector<8x128xf32>
    %128 = arith.divf %126, %127 : vector<8x128xf32>
    %129 = vector.extract_strided_slice %120 {offsets = [0, 128], sizes = [8, 128], strides = [1, 1]} : vector<8x384xf32> to vector<8x128xf32>
    %130 = vector.extract_strided_slice %118 {offsets = [0, 128], sizes = [8, 128], strides = [1, 1]} : vector<8x384xf32> to vector<8x128xf32>
    %131 = arith.addf %129, %130 : vector<8x128xf32>
    %132 = arith.negf %131 : vector<8x128xf32>
    %133 = math.exp %132 : vector<8x128xf32>
    %cst_52 = arith.constant 1.000000e+00 : f32
    %134 = vector.broadcast %cst_52 : f32 to vector<8x128xf32>
    %135 = arith.addf %134, %133 : vector<8x128xf32>
    %136 = arith.divf %134, %135 : vector<8x128xf32>
    %137 = vector.extract_strided_slice %120 {offsets = [0, 256], sizes = [8, 128], strides = [1, 1]} : vector<8x384xf32> to vector<8x128xf32>
    %138 = vector.extract_strided_slice %118 {offsets = [0, 256], sizes = [8, 128], strides = [1, 1]} : vector<8x384xf32> to vector<8x128xf32>
    %139 = arith.addf %138, %18 : vector<8x128xf32>
    %140 = arith.mulf %128, %139 : vector<8x128xf32>
    %141 = arith.addf %137, %140 : vector<8x128xf32>
    %142 = math.tanh %141 : vector<8x128xf32>
    %cst_53 = arith.constant 1.000000e+00 : f32
    %143 = vector.broadcast %cst_53 : f32 to vector<8x128xf32>
    %144 = arith.subf %143, %136 : vector<8x128xf32>
    %145 = arith.mulf %144, %142 : vector<8x128xf32>
    %146 = arith.mulf %136, %115 : vector<8x128xf32>
    %147 = arith.addf %145, %146 : vector<8x128xf32>
    %148 = arith.truncf %147 : vector<8x128xf32> to vector<8x128xbf16>
    %c0_54 = arith.constant 0 : index
    %c0_55 = arith.constant 0 : index
    %149 = vector.load %arg5[%c0_54, %c0_55] : memref<128x384xbf16, #tpu.memory_space<vmem>>, vector<128x384xbf16>
    %cst_56 = arith.constant dense<0.000000e+00> : vector<8x384xf32>
    %150 = tpu.matmul %148, %149, %cst_56 {dimension_numbers = #tpu.dot_dimension_numbers<[1], [0], [0], [1], [0, 0, 1, 1], [], []>} : vector<8x128xbf16>, vector<128x384xbf16>, vector<8x384xf32> -> vector<8x384xf32>
    %c4 = arith.constant 4 : index
    %c0_57 = arith.constant 0 : index
    %c0_58 = arith.constant 0 : index
    %151 = vector.load %arg18[%c4, %c0_57, %c0_58] : memref<8x8x384xf32, #tpu.memory_space<vmem>>, vector<1x8x384xf32>
    %152 = vector.shape_cast %151 : vector<1x8x384xf32> to vector<8x384xf32>
    %153 = vector.extract_strided_slice %152 {offsets = [0, 0], sizes = [8, 128], strides = [1, 1]} : vector<8x384xf32> to vector<8x128xf32>
    %154 = vector.extract_strided_slice %150 {offsets = [0, 0], sizes = [8, 128], strides = [1, 1]} : vector<8x384xf32> to vector<8x128xf32>
    %155 = arith.addf %153, %154 : vector<8x128xf32>
    %156 = arith.negf %155 : vector<8x128xf32>
    %157 = math.exp %156 : vector<8x128xf32>
    %cst_59 = arith.constant 1.000000e+00 : f32
    %158 = vector.broadcast %cst_59 : f32 to vector<8x128xf32>
    %159 = arith.addf %158, %157 : vector<8x128xf32>
    %160 = arith.divf %158, %159 : vector<8x128xf32>
    %161 = vector.extract_strided_slice %152 {offsets = [0, 128], sizes = [8, 128], strides = [1, 1]} : vector<8x384xf32> to vector<8x128xf32>
    %162 = vector.extract_strided_slice %150 {offsets = [0, 128], sizes = [8, 128], strides = [1, 1]} : vector<8x384xf32> to vector<8x128xf32>
    %163 = arith.addf %161, %162 : vector<8x128xf32>
    %164 = arith.negf %163 : vector<8x128xf32>
    %165 = math.exp %164 : vector<8x128xf32>
    %cst_60 = arith.constant 1.000000e+00 : f32
    %166 = vector.broadcast %cst_60 : f32 to vector<8x128xf32>
    %167 = arith.addf %166, %165 : vector<8x128xf32>
    %168 = arith.divf %166, %167 : vector<8x128xf32>
    %169 = vector.extract_strided_slice %152 {offsets = [0, 256], sizes = [8, 128], strides = [1, 1]} : vector<8x384xf32> to vector<8x128xf32>
    %170 = vector.extract_strided_slice %150 {offsets = [0, 256], sizes = [8, 128], strides = [1, 1]} : vector<8x384xf32> to vector<8x128xf32>
    %171 = arith.addf %170, %18 : vector<8x128xf32>
    %172 = arith.mulf %160, %171 : vector<8x128xf32>
    %173 = arith.addf %169, %172 : vector<8x128xf32>
    %174 = math.tanh %173 : vector<8x128xf32>
    %cst_61 = arith.constant 1.000000e+00 : f32
    %175 = vector.broadcast %cst_61 : f32 to vector<8x128xf32>
    %176 = arith.subf %175, %168 : vector<8x128xf32>
    %177 = arith.mulf %176, %174 : vector<8x128xf32>
    %178 = arith.mulf %168, %147 : vector<8x128xf32>
    %179 = arith.addf %177, %178 : vector<8x128xf32>
    %180 = arith.truncf %179 : vector<8x128xf32> to vector<8x128xbf16>
    %c0_62 = arith.constant 0 : index
    %c0_63 = arith.constant 0 : index
    %181 = vector.load %arg5[%c0_62, %c0_63] : memref<128x384xbf16, #tpu.memory_space<vmem>>, vector<128x384xbf16>
    %cst_64 = arith.constant dense<0.000000e+00> : vector<8x384xf32>
    %182 = tpu.matmul %180, %181, %cst_64 {dimension_numbers = #tpu.dot_dimension_numbers<[1], [0], [0], [1], [0, 0, 1, 1], [], []>} : vector<8x128xbf16>, vector<128x384xbf16>, vector<8x384xf32> -> vector<8x384xf32>
    %c5 = arith.constant 5 : index
    %c0_65 = arith.constant 0 : index
    %c0_66 = arith.constant 0 : index
    %183 = vector.load %arg18[%c5, %c0_65, %c0_66] : memref<8x8x384xf32, #tpu.memory_space<vmem>>, vector<1x8x384xf32>
    %184 = vector.shape_cast %183 : vector<1x8x384xf32> to vector<8x384xf32>
    %185 = vector.extract_strided_slice %184 {offsets = [0, 0], sizes = [8, 128], strides = [1, 1]} : vector<8x384xf32> to vector<8x128xf32>
    %186 = vector.extract_strided_slice %182 {offsets = [0, 0], sizes = [8, 128], strides = [1, 1]} : vector<8x384xf32> to vector<8x128xf32>
    %187 = arith.addf %185, %186 : vector<8x128xf32>
    %188 = arith.negf %187 : vector<8x128xf32>
    %189 = math.exp %188 : vector<8x128xf32>
    %cst_67 = arith.constant 1.000000e+00 : f32
    %190 = vector.broadcast %cst_67 : f32 to vector<8x128xf32>
    %191 = arith.addf %190, %189 : vector<8x128xf32>
    %192 = arith.divf %190, %191 : vector<8x128xf32>
    %193 = vector.extract_strided_slice %184 {offsets = [0, 128], sizes = [8, 128], strides = [1, 1]} : vector<8x384xf32> to vector<8x128xf32>
    %194 = vector.extract_strided_slice %182 {offsets = [0, 128], sizes = [8, 128], strides = [1, 1]} : vector<8x384xf32> to vector<8x128xf32>
    %195 = arith.addf %193, %194 : vector<8x128xf32>
    %196 = arith.negf %195 : vector<8x128xf32>
    %197 = math.exp %196 : vector<8x128xf32>
    %cst_68 = arith.constant 1.000000e+00 : f32
    %198 = vector.broadcast %cst_68 : f32 to vector<8x128xf32>
    %199 = arith.addf %198, %197 : vector<8x128xf32>
    %200 = arith.divf %198, %199 : vector<8x128xf32>
    %201 = vector.extract_strided_slice %184 {offsets = [0, 256], sizes = [8, 128], strides = [1, 1]} : vector<8x384xf32> to vector<8x128xf32>
    %202 = vector.extract_strided_slice %182 {offsets = [0, 256], sizes = [8, 128], strides = [1, 1]} : vector<8x384xf32> to vector<8x128xf32>
    %203 = arith.addf %202, %18 : vector<8x128xf32>
    %204 = arith.mulf %192, %203 : vector<8x128xf32>
    %205 = arith.addf %201, %204 : vector<8x128xf32>
    %206 = math.tanh %205 : vector<8x128xf32>
    %cst_69 = arith.constant 1.000000e+00 : f32
    %207 = vector.broadcast %cst_69 : f32 to vector<8x128xf32>
    %208 = arith.subf %207, %200 : vector<8x128xf32>
    %209 = arith.mulf %208, %206 : vector<8x128xf32>
    %210 = arith.mulf %200, %179 : vector<8x128xf32>
    %211 = arith.addf %209, %210 : vector<8x128xf32>
    %212 = arith.truncf %211 : vector<8x128xf32> to vector<8x128xbf16>
    %c0_70 = arith.constant 0 : index
    %c0_71 = arith.constant 0 : index
    %213 = vector.load %arg5[%c0_70, %c0_71] : memref<128x384xbf16, #tpu.memory_space<vmem>>, vector<128x384xbf16>
    %cst_72 = arith.constant dense<0.000000e+00> : vector<8x384xf32>
    %214 = tpu.matmul %212, %213, %cst_72 {dimension_numbers = #tpu.dot_dimension_numbers<[1], [0], [0], [1], [0, 0, 1, 1], [], []>} : vector<8x128xbf16>, vector<128x384xbf16>, vector<8x384xf32> -> vector<8x384xf32>
    %c6 = arith.constant 6 : index
    %c0_73 = arith.constant 0 : index
    %c0_74 = arith.constant 0 : index
    %215 = vector.load %arg18[%c6, %c0_73, %c0_74] : memref<8x8x384xf32, #tpu.memory_space<vmem>>, vector<1x8x384xf32>
    %216 = vector.shape_cast %215 : vector<1x8x384xf32> to vector<8x384xf32>
    %217 = vector.extract_strided_slice %216 {offsets = [0, 0], sizes = [8, 128], strides = [1, 1]} : vector<8x384xf32> to vector<8x128xf32>
    %218 = vector.extract_strided_slice %214 {offsets = [0, 0], sizes = [8, 128], strides = [1, 1]} : vector<8x384xf32> to vector<8x128xf32>
    %219 = arith.addf %217, %218 : vector<8x128xf32>
    %220 = arith.negf %219 : vector<8x128xf32>
    %221 = math.exp %220 : vector<8x128xf32>
    %cst_75 = arith.constant 1.000000e+00 : f32
    %222 = vector.broadcast %cst_75 : f32 to vector<8x128xf32>
    %223 = arith.addf %222, %221 : vector<8x128xf32>
    %224 = arith.divf %222, %223 : vector<8x128xf32>
    %225 = vector.extract_strided_slice %216 {offsets = [0, 128], sizes = [8, 128], strides = [1, 1]} : vector<8x384xf32> to vector<8x128xf32>
    %226 = vector.extract_strided_slice %214 {offsets = [0, 128], sizes = [8, 128], strides = [1, 1]} : vector<8x384xf32> to vector<8x128xf32>
    %227 = arith.addf %225, %226 : vector<8x128xf32>
    %228 = arith.negf %227 : vector<8x128xf32>
    %229 = math.exp %228 : vector<8x128xf32>
    %cst_76 = arith.constant 1.000000e+00 : f32
    %230 = vector.broadcast %cst_76 : f32 to vector<8x128xf32>
    %231 = arith.addf %230, %229 : vector<8x128xf32>
    %232 = arith.divf %230, %231 : vector<8x128xf32>
    %233 = vector.extract_strided_slice %216 {offsets = [0, 256], sizes = [8, 128], strides = [1, 1]} : vector<8x384xf32> to vector<8x128xf32>
    %234 = vector.extract_strided_slice %214 {offsets = [0, 256], sizes = [8, 128], strides = [1, 1]} : vector<8x384xf32> to vector<8x128xf32>
    %235 = arith.addf %234, %18 : vector<8x128xf32>
    %236 = arith.mulf %224, %235 : vector<8x128xf32>
    %237 = arith.addf %233, %236 : vector<8x128xf32>
    %238 = math.tanh %237 : vector<8x128xf32>
    %cst_77 = arith.constant 1.000000e+00 : f32
    %239 = vector.broadcast %cst_77 : f32 to vector<8x128xf32>
    %240 = arith.subf %239, %232 : vector<8x128xf32>
    %241 = arith.mulf %240, %238 : vector<8x128xf32>
    %242 = arith.mulf %232, %211 : vector<8x128xf32>
    %243 = arith.addf %241, %242 : vector<8x128xf32>
    %244 = arith.truncf %243 : vector<8x128xf32> to vector<8x128xbf16>
    %c0_78 = arith.constant 0 : index
    %c0_79 = arith.constant 0 : index
    %245 = vector.load %arg5[%c0_78, %c0_79] : memref<128x384xbf16, #tpu.memory_space<vmem>>, vector<128x384xbf16>
    %cst_80 = arith.constant dense<0.000000e+00> : vector<8x384xf32>
    %246 = tpu.matmul %244, %245, %cst_80 {dimension_numbers = #tpu.dot_dimension_numbers<[1], [0], [0], [1], [0, 0, 1, 1], [], []>} : vector<8x128xbf16>, vector<128x384xbf16>, vector<8x384xf32> -> vector<8x384xf32>
    %c7 = arith.constant 7 : index
    %c0_81 = arith.constant 0 : index
    %c0_82 = arith.constant 0 : index
    %247 = vector.load %arg18[%c7, %c0_81, %c0_82] : memref<8x8x384xf32, #tpu.memory_space<vmem>>, vector<1x8x384xf32>
    %248 = vector.shape_cast %247 : vector<1x8x384xf32> to vector<8x384xf32>
    %249 = vector.extract_strided_slice %248 {offsets = [0, 0], sizes = [8, 128], strides = [1, 1]} : vector<8x384xf32> to vector<8x128xf32>
    %250 = vector.extract_strided_slice %246 {offsets = [0, 0], sizes = [8, 128], strides = [1, 1]} : vector<8x384xf32> to vector<8x128xf32>
    %251 = arith.addf %249, %250 : vector<8x128xf32>
    %252 = arith.negf %251 : vector<8x128xf32>
    %253 = math.exp %252 : vector<8x128xf32>
    %cst_83 = arith.constant 1.000000e+00 : f32
    %254 = vector.broadcast %cst_83 : f32 to vector<8x128xf32>
    %255 = arith.addf %254, %253 : vector<8x128xf32>
    %256 = arith.divf %254, %255 : vector<8x128xf32>
    %257 = vector.extract_strided_slice %248 {offsets = [0, 128], sizes = [8, 128], strides = [1, 1]} : vector<8x384xf32> to vector<8x128xf32>
    %258 = vector.extract_strided_slice %246 {offsets = [0, 128], sizes = [8, 128], strides = [1, 1]} : vector<8x384xf32> to vector<8x128xf32>
    %259 = arith.addf %257, %258 : vector<8x128xf32>
    %260 = arith.negf %259 : vector<8x128xf32>
    %261 = math.exp %260 : vector<8x128xf32>
    %cst_84 = arith.constant 1.000000e+00 : f32
    %262 = vector.broadcast %cst_84 : f32 to vector<8x128xf32>
    %263 = arith.addf %262, %261 : vector<8x128xf32>
    %264 = arith.divf %262, %263 : vector<8x128xf32>
    %265 = vector.extract_strided_slice %248 {offsets = [0, 256], sizes = [8, 128], strides = [1, 1]} : vector<8x384xf32> to vector<8x128xf32>
    %266 = vector.extract_strided_slice %246 {offsets = [0, 256], sizes = [8, 128], strides = [1, 1]} : vector<8x384xf32> to vector<8x128xf32>
    %267 = arith.addf %266, %18 : vector<8x128xf32>
    %268 = arith.mulf %256, %267 : vector<8x128xf32>
    %269 = arith.addf %265, %268 : vector<8x128xf32>
    %270 = math.tanh %269 : vector<8x128xf32>
    %cst_85 = arith.constant 1.000000e+00 : f32
    %271 = vector.broadcast %cst_85 : f32 to vector<8x128xf32>
    %272 = arith.subf %271, %264 : vector<8x128xf32>
    %273 = arith.mulf %272, %270 : vector<8x128xf32>
    %274 = arith.mulf %264, %243 : vector<8x128xf32>
    %275 = arith.addf %273, %274 : vector<8x128xf32>
    %276 = arith.truncf %275 : vector<8x128xf32> to vector<8x128xbf16>
    %c0_86 = arith.constant 0 : index
    %c0_87 = arith.constant 0 : index
    %277 = vector.load %arg8[%c0_86, %c0_87] : memref<128x256xbf16, #tpu.memory_space<vmem>>, vector<128x256xbf16>
    %cst_88 = arith.constant dense<0.000000e+00> : vector<8x256xf32>
    %278 = tpu.matmul %276, %277, %cst_88 {dimension_numbers = #tpu.dot_dimension_numbers<[1], [0], [0], [1], [0, 0, 1, 1], [], []>} : vector<8x128xbf16>, vector<128x256xbf16>, vector<8x256xf32> -> vector<8x256xf32>
    %c0_89 = arith.constant 0 : index
    %c0_90 = arith.constant 0 : index
    %279 = vector.load %arg9[%c0_89, %c0_90] : memref<1x256xf32, #tpu.memory_space<vmem>>, vector<1x256xf32>
    %280 = vector.broadcast %279 : vector<1x256xf32> to vector<8x256xf32>
    %281 = arith.addf %278, %280 : vector<8x256xf32>
    %282 = vector.extract_strided_slice %281 {offsets = [0, 0], sizes = [8, 128], strides = [1, 1]} : vector<8x256xf32> to vector<8x128xf32>
    %283 = vector.extract_strided_slice %281 {offsets = [0, 128], sizes = [8, 128], strides = [1, 1]} : vector<8x256xf32> to vector<8x128xf32>
    %284 = math.exp %283 : vector<8x128xf32>
    %285 = arith.mulf %282, %282 : vector<8x128xf32>
    %286 = arith.addf %284, %285 : vector<8x128xf32>
    %cst_91 = arith.constant 1.000000e+00 : f32
    %287 = vector.broadcast %cst_91 : f32 to vector<8x128xf32>
    %288 = arith.subf %286, %287 : vector<8x128xf32>
    %289 = arith.subf %288, %283 : vector<8x128xf32>
    %cst_92 = arith.constant dense<0.000000e+00> : vector<8xf32>
    %290 = vector.multi_reduction <add>, %289, %cst_92 [1] : vector<8x128xf32> to vector<8xf32>
    %291 = vector.shape_cast %290 : vector<8xf32> to vector<8x1xf32>
    %cst_93 = arith.constant 5.000000e-01 : f32
    %292 = vector.broadcast %cst_93 : f32 to vector<8x1xf32>
    %293 = arith.mulf %292, %291 : vector<8x1xf32>
    %cst_94 = arith.constant dense<0.000000e+00> : vector<1xf32>
    %294 = vector.multi_reduction <add>, %293, %cst_94 [0] : vector<8x1xf32> to vector<1xf32>
    %295 = vector.shape_cast %294 : vector<1xf32> to vector<1x1xf32>
    %cst_95 = arith.constant 8.000000e+00 : f32
    %296 = vector.broadcast %cst_95 : f32 to vector<1x1xf32>
    %297 = arith.divf %295, %296 : vector<1x1xf32>
    %c0_96 = arith.constant 0 : index
    %c0_97 = arith.constant 0 : index
    %298 = vector.load %arg17[%c0_96, %c0_97] : memref<1x1xf32, #tpu.memory_space<vmem>>, vector<1x1xf32>
    tpu.vector_store %arg17[%c0_96, %c0_97], %297 {strides = array<i32>} : memref<1x1xf32, #tpu.memory_space<vmem>>, vector<1x1xf32>,
    %cst_98 = arith.constant 5.000000e-01 : f32
    %299 = vector.broadcast %cst_98 : f32 to vector<8x128xf32>
    %300 = arith.mulf %283, %299 : vector<8x128xf32>
    %301 = math.exp %300 : vector<8x128xf32>
    %c0_99 = arith.constant 0 : index
    %c0_100 = arith.constant 0 : index
    %302 = vector.load %arg2[%c0_99, %c0_100] : memref<1x128xf32, #tpu.memory_space<vmem>>, vector<1x128xf32>
    %303 = vector.broadcast %302 : vector<1x128xf32> to vector<8x128xf32>
    %304 = arith.mulf %301, %303 : vector<8x128xf32>
    %305 = arith.addf %282, %304 : vector<8x128xf32>
    %306 = arith.mulf %305, %305 : vector<8x128xf32>
    %cst_101 = arith.constant dense<0.000000e+00> : vector<8xf32>
    %307 = vector.multi_reduction <add>, %306, %cst_101 [1] : vector<8x128xf32> to vector<8xf32>
    %308 = vector.shape_cast %307 : vector<8xf32> to vector<8x1xf32>
    %cst_102 = arith.constant dense<0.000000e+00> : vector<1xf32>
    %309 = vector.multi_reduction <add>, %308, %cst_102 [0] : vector<8x1xf32> to vector<1xf32>
    %310 = vector.shape_cast %309 : vector<1xf32> to vector<1x1xf32>
    %311 = math.rsqrt %310 : vector<1x1xf32>
    %312 = vector.broadcast %311 : vector<1x1xf32> to vector<8x128xf32>
    %313 = arith.mulf %305, %312 : vector<8x128xf32>
    %314 = arith.truncf %313 : vector<8x128xf32> to vector<8x128xbf16>
    %c0_103 = arith.constant 0 : index
    %c0_104 = arith.constant 0 : index
    %315 = vector.load %arg11[%c0_103, %c0_104] : memref<128x768xbf16, #tpu.memory_space<vmem>>, vector<128x768xbf16>
    %cst_105 = arith.constant dense<0.000000e+00> : vector<8x768xf32>
    %316 = tpu.matmul %314, %315, %cst_105 {dimension_numbers = #tpu.dot_dimension_numbers<[1], [0], [0], [1], [0, 0, 1, 1], [], []>} : vector<8x128xbf16>, vector<128x768xbf16>, vector<8x768xf32> -> vector<8x768xf32>
    %c0_106 = arith.constant 0 : index
    %c0_107 = arith.constant 0 : index
    %c0_108 = arith.constant 0 : index
    %317 = vector.load %arg19[%c0_106, %c0_107, %c0_108] : memref<8x8x384xf32, #tpu.memory_space<vmem>>, vector<8x8x384xf32>
    %318 = vector.extract_strided_slice %316 {offsets = [0, 0], sizes = [8, 384], strides = [1, 1]} : vector<8x768xf32> to vector<8x384xf32>
    %319 = vector.shape_cast %318 : vector<8x384xf32> to vector<1x8x384xf32>
    %320 = vector.broadcast %319 : vector<1x8x384xf32> to vector<8x8x384xf32>
    %321 = arith.addf %317, %320 : vector<8x8x384xf32>
    %c0_109 = arith.constant 0 : index
    %c0_110 = arith.constant 0 : index
    %c0_111 = arith.constant 0 : index
    %322 = vector.load %arg19[%c0_109, %c0_110, %c0_111] : memref<8x8x384xf32, #tpu.memory_space<vmem>>, vector<8x8x384xf32>
    tpu.vector_store %arg19[%c0_109, %c0_110, %c0_111], %321 {strides = array<i32>} : memref<8x8x384xf32, #tpu.memory_space<vmem>>, vector<8x8x384xf32>,
    %323 = vector.extract_strided_slice %316 {offsets = [0, 384], sizes = [8, 384], strides = [1, 1]} : vector<8x768xf32> to vector<8x384xf32>
    %c0_112 = arith.constant 0 : index
    %c0_113 = arith.constant 0 : index
    %324 = vector.load %arg13[%c0_112, %c0_113] : memref<1x128xf32, #tpu.memory_space<vmem>>, vector<1x128xf32>
    %325 = vector.shape_cast %324 : vector<1x128xf32> to vector<1x128xf32>
    %326 = vector.broadcast %325 : vector<1x128xf32> to vector<8x128xf32>
    %c0_114 = arith.constant 0 : index
    %c0_115 = arith.constant 0 : index
    %327 = vector.load %arg15[%c0_114, %c0_115] : memref<1x256xf32, #tpu.memory_space<vmem>>, vector<1x256xf32>
    %328 = vector.shape_cast %327 : vector<1x256xf32> to vector<1x256xf32>
    %329 = vector.broadcast %328 : vector<1x256xf32> to vector<8x256xf32>
    %cst_116 = arith.constant 0.000000e+00 : f32
    %330 = vector.broadcast %cst_116 : f32 to vector<8x1xf32>
    %c0_117 = arith.constant 0 : index
    %c0_118 = arith.constant 0 : index
    %c0_119 = arith.constant 0 : index
    %331 = vector.load %arg19[%c0_117, %c0_118, %c0_119] : memref<8x8x384xf32, #tpu.memory_space<vmem>>, vector<1x8x384xf32>
    %332 = vector.shape_cast %331 : vector<1x8x384xf32> to vector<8x384xf32>
    %333 = vector.extract_strided_slice %332 {offsets = [0, 0], sizes = [8, 128], strides = [1, 1]} : vector<8x384xf32> to vector<8x128xf32>
    %334 = vector.extract_strided_slice %323 {offsets = [0, 0], sizes = [8, 128], strides = [1, 1]} : vector<8x384xf32> to vector<8x128xf32>
    %335 = arith.addf %333, %334 : vector<8x128xf32>
    %336 = arith.negf %335 : vector<8x128xf32>
    %337 = math.exp %336 : vector<8x128xf32>
    %cst_120 = arith.constant 1.000000e+00 : f32
    %338 = vector.broadcast %cst_120 : f32 to vector<8x128xf32>
    %339 = arith.addf %338, %337 : vector<8x128xf32>
    %340 = arith.divf %338, %339 : vector<8x128xf32>
    %341 = vector.extract_strided_slice %332 {offsets = [0, 128], sizes = [8, 128], strides = [1, 1]} : vector<8x384xf32> to vector<8x128xf32>
    %342 = vector.extract_strided_slice %323 {offsets = [0, 128], sizes = [8, 128], strides = [1, 1]} : vector<8x384xf32> to vector<8x128xf32>
    %343 = arith.addf %341, %342 : vector<8x128xf32>
    %344 = arith.negf %343 : vector<8x128xf32>
    %345 = math.exp %344 : vector<8x128xf32>
    %cst_121 = arith.constant 1.000000e+00 : f32
    %346 = vector.broadcast %cst_121 : f32 to vector<8x128xf32>
    %347 = arith.addf %346, %345 : vector<8x128xf32>
    %348 = arith.divf %346, %347 : vector<8x128xf32>
    %349 = vector.extract_strided_slice %332 {offsets = [0, 256], sizes = [8, 128], strides = [1, 1]} : vector<8x384xf32> to vector<8x128xf32>
    %350 = vector.extract_strided_slice %323 {offsets = [0, 256], sizes = [8, 128], strides = [1, 1]} : vector<8x384xf32> to vector<8x128xf32>
    %351 = arith.addf %350, %326 : vector<8x128xf32>
    %352 = arith.mulf %340, %351 : vector<8x128xf32>
    %353 = arith.addf %349, %352 : vector<8x128xf32>
    %354 = math.tanh %353 : vector<8x128xf32>
    %cst_122 = arith.constant 1.000000e+00 : f32
    %355 = vector.broadcast %cst_122 : f32 to vector<8x128xf32>
    %356 = arith.subf %355, %348 : vector<8x128xf32>
    %357 = arith.mulf %356, %354 : vector<8x128xf32>
    %358 = arith.mulf %348, %313 : vector<8x128xf32>
    %359 = arith.addf %357, %358 : vector<8x128xf32>
    %360 = arith.truncf %359 : vector<8x128xf32> to vector<8x128xbf16>
    %c0_123 = arith.constant 0 : index
    %c0_124 = arith.constant 0 : index
    %361 = vector.load %arg14[%c0_123, %c0_124] : memref<128x640xbf16, #tpu.memory_space<vmem>>, vector<128x640xbf16>
    %cst_125 = arith.constant dense<0.000000e+00> : vector<8x640xf32>
    %362 = tpu.matmul %360, %361, %cst_125 {dimension_numbers = #tpu.dot_dimension_numbers<[1], [0], [0], [1], [0, 0, 1, 1], [], []>} : vector<8x128xbf16>, vector<128x640xbf16>, vector<8x640xf32> -> vector<8x640xf32>
    %363 = vector.extract_strided_slice %362 {offsets = [0, 0], sizes = [8, 384], strides = [1, 1]} : vector<8x640xf32> to vector<8x384xf32>
    %364 = vector.extract_strided_slice %362 {offsets = [0, 384], sizes = [8, 256], strides = [1, 1]} : vector<8x640xf32> to vector<8x256xf32>
    %365 = arith.addf %364, %329 : vector<8x256xf32>
    %cst_126 = arith.constant dense<0xFF800000> : vector<8xf32>
    %366 = vector.multi_reduction <maximumf>, %365, %cst_126 [1] : vector<8x256xf32> to vector<8xf32>
    %367 = vector.shape_cast %366 : vector<8xf32> to vector<8x1xf32>
    %368 = vector.broadcast %367 : vector<8x1xf32> to vector<8x256xf32>
    %369 = arith.subf %365, %368 : vector<8x256xf32>
    %370 = math.exp %369 : vector<8x256xf32>
    %cst_127 = arith.constant dense<0.000000e+00> : vector<8xf32>
    %371 = vector.multi_reduction <add>, %370, %cst_127 [1] : vector<8x256xf32> to vector<8xf32>
    %372 = vector.shape_cast %371 : vector<8xf32> to vector<8x1xf32>
    %373 = math.log %372 : vector<8x1xf32>
    %374 = arith.addf %367, %373 : vector<8x1xf32>
    %c0_128 = arith.constant 0 : index
    %c0_129 = arith.constant 0 : index
    %c0_130 = arith.constant 0 : index
    %375 = vector.load %arg3[%c0_128, %c0_129, %c0_130] : memref<8x8x256xf32, #tpu.memory_space<vmem>>, vector<1x8x256xf32>
    %376 = vector.shape_cast %375 : vector<1x8x256xf32> to vector<8x256xf32>
    %377 = arith.mulf %376, %365 : vector<8x256xf32>
    %cst_131 = arith.constant dense<0.000000e+00> : vector<8xf32>
    %378 = vector.multi_reduction <add>, %377, %cst_131 [1] : vector<8x256xf32> to vector<8xf32>
    %379 = vector.shape_cast %378 : vector<8xf32> to vector<8x1xf32>
    %380 = arith.subf %374, %379 : vector<8x1xf32>
    %381 = arith.addf %330, %380 : vector<8x1xf32>
    %c1_132 = arith.constant 1 : index
    %c0_133 = arith.constant 0 : index
    %c0_134 = arith.constant 0 : index
    %382 = vector.load %arg19[%c1_132, %c0_133, %c0_134] : memref<8x8x384xf32, #tpu.memory_space<vmem>>, vector<1x8x384xf32>
    %383 = vector.shape_cast %382 : vector<1x8x384xf32> to vector<8x384xf32>
    %384 = vector.extract_strided_slice %383 {offsets = [0, 0], sizes = [8, 128], strides = [1, 1]} : vector<8x384xf32> to vector<8x128xf32>
    %385 = vector.extract_strided_slice %363 {offsets = [0, 0], sizes = [8, 128], strides = [1, 1]} : vector<8x384xf32> to vector<8x128xf32>
    %386 = arith.addf %384, %385 : vector<8x128xf32>
    %387 = arith.negf %386 : vector<8x128xf32>
    %388 = math.exp %387 : vector<8x128xf32>
    %cst_135 = arith.constant 1.000000e+00 : f32
    %389 = vector.broadcast %cst_135 : f32 to vector<8x128xf32>
    %390 = arith.addf %389, %388 : vector<8x128xf32>
    %391 = arith.divf %389, %390 : vector<8x128xf32>
    %392 = vector.extract_strided_slice %383 {offsets = [0, 128], sizes = [8, 128], strides = [1, 1]} : vector<8x384xf32> to vector<8x128xf32>
    %393 = vector.extract_strided_slice %363 {offsets = [0, 128], sizes = [8, 128], strides = [1, 1]} : vector<8x384xf32> to vector<8x128xf32>
    %394 = arith.addf %392, %393 : vector<8x128xf32>
    %395 = arith.negf %394 : vector<8x128xf32>
    %396 = math.exp %395 : vector<8x128xf32>
    %cst_136 = arith.constant 1.000000e+00 : f32
    %397 = vector.broadcast %cst_136 : f32 to vector<8x128xf32>
    %398 = arith.addf %397, %396 : vector<8x128xf32>
    %399 = arith.divf %397, %398 : vector<8x128xf32>
    %400 = vector.extract_strided_slice %383 {offsets = [0, 256], sizes = [8, 128], strides = [1, 1]} : vector<8x384xf32> to vector<8x128xf32>
    %401 = vector.extract_strided_slice %363 {offsets = [0, 256], sizes = [8, 128], strides = [1, 1]} : vector<8x384xf32> to vector<8x128xf32>
    %402 = arith.addf %401, %326 : vector<8x128xf32>
    %403 = arith.mulf %391, %402 : vector<8x128xf32>
    %404 = arith.addf %400, %403 : vector<8x128xf32>
    %405 = math.tanh %404 : vector<8x128xf32>
    %cst_137 = arith.constant 1.000000e+00 : f32
    %406 = vector.broadcast %cst_137 : f32 to vector<8x128xf32>
    %407 = arith.subf %406, %399 : vector<8x128xf32>
    %408 = arith.mulf %407, %405 : vector<8x128xf32>
    %409 = arith.mulf %399, %359 : vector<8x128xf32>
    %410 = arith.addf %408, %409 : vector<8x128xf32>
    %411 = arith.truncf %410 : vector<8x128xf32> to vector<8x128xbf16>
    %c0_138 = arith.constant 0 : index
    %c0_139 = arith.constant 0 : index
    %412 = vector.load %arg14[%c0_138, %c0_139] : memref<128x640xbf16, #tpu.memory_space<vmem>>, vector<128x640xbf16>
    %cst_140 = arith.constant dense<0.000000e+00> : vector<8x640xf32>
    %413 = tpu.matmul %411, %412, %cst_140 {dimension_numbers = #tpu.dot_dimension_numbers<[1], [0], [0], [1], [0, 0, 1, 1], [], []>} : vector<8x128xbf16>, vector<128x640xbf16>, vector<8x640xf32> -> vector<8x640xf32>
    %414 = vector.extract_strided_slice %413 {offsets = [0, 0], sizes = [8, 384], strides = [1, 1]} : vector<8x640xf32> to vector<8x384xf32>
    %415 = vector.extract_strided_slice %413 {offsets = [0, 384], sizes = [8, 256], strides = [1, 1]} : vector<8x640xf32> to vector<8x256xf32>
    %416 = arith.addf %415, %329 : vector<8x256xf32>
    %cst_141 = arith.constant dense<0xFF800000> : vector<8xf32>
    %417 = vector.multi_reduction <maximumf>, %416, %cst_141 [1] : vector<8x256xf32> to vector<8xf32>
    %418 = vector.shape_cast %417 : vector<8xf32> to vector<8x1xf32>
    %419 = vector.broadcast %418 : vector<8x1xf32> to vector<8x256xf32>
    %420 = arith.subf %416, %419 : vector<8x256xf32>
    %421 = math.exp %420 : vector<8x256xf32>
    %cst_142 = arith.constant dense<0.000000e+00> : vector<8xf32>
    %422 = vector.multi_reduction <add>, %421, %cst_142 [1] : vector<8x256xf32> to vector<8xf32>
    %423 = vector.shape_cast %422 : vector<8xf32> to vector<8x1xf32>
    %424 = math.log %423 : vector<8x1xf32>
    %425 = arith.addf %418, %424 : vector<8x1xf32>
    %c1_143 = arith.constant 1 : index
    %c0_144 = arith.constant 0 : index
    %c0_145 = arith.constant 0 : index
    %426 = vector.load %arg3[%c1_143, %c0_144, %c0_145] : memref<8x8x256xf32, #tpu.memory_space<vmem>>, vector<1x8x256xf32>
    %427 = vector.shape_cast %426 : vector<1x8x256xf32> to vector<8x256xf32>
    %428 = arith.mulf %427, %416 : vector<8x256xf32>
    %cst_146 = arith.constant dense<0.000000e+00> : vector<8xf32>
    %429 = vector.multi_reduction <add>, %428, %cst_146 [1] : vector<8x256xf32> to vector<8xf32>
    %430 = vector.shape_cast %429 : vector<8xf32> to vector<8x1xf32>
    %431 = arith.subf %425, %430 : vector<8x1xf32>
    %432 = arith.addf %381, %431 : vector<8x1xf32>
    %c2_147 = arith.constant 2 : index
    %c0_148 = arith.constant 0 : index
    %c0_149 = arith.constant 0 : index
    %433 = vector.load %arg19[%c2_147, %c0_148, %c0_149] : memref<8x8x384xf32, #tpu.memory_space<vmem>>, vector<1x8x384xf32>
    %434 = vector.shape_cast %433 : vector<1x8x384xf32> to vector<8x384xf32>
    %435 = vector.extract_strided_slice %434 {offsets = [0, 0], sizes = [8, 128], strides = [1, 1]} : vector<8x384xf32> to vector<8x128xf32>
    %436 = vector.extract_strided_slice %414 {offsets = [0, 0], sizes = [8, 128], strides = [1, 1]} : vector<8x384xf32> to vector<8x128xf32>
    %437 = arith.addf %435, %436 : vector<8x128xf32>
    %438 = arith.negf %437 : vector<8x128xf32>
    %439 = math.exp %438 : vector<8x128xf32>
    %cst_150 = arith.constant 1.000000e+00 : f32
    %440 = vector.broadcast %cst_150 : f32 to vector<8x128xf32>
    %441 = arith.addf %440, %439 : vector<8x128xf32>
    %442 = arith.divf %440, %441 : vector<8x128xf32>
    %443 = vector.extract_strided_slice %434 {offsets = [0, 128], sizes = [8, 128], strides = [1, 1]} : vector<8x384xf32> to vector<8x128xf32>
    %444 = vector.extract_strided_slice %414 {offsets = [0, 128], sizes = [8, 128], strides = [1, 1]} : vector<8x384xf32> to vector<8x128xf32>
    %445 = arith.addf %443, %444 : vector<8x128xf32>
    %446 = arith.negf %445 : vector<8x128xf32>
    %447 = math.exp %446 : vector<8x128xf32>
    %cst_151 = arith.constant 1.000000e+00 : f32
    %448 = vector.broadcast %cst_151 : f32 to vector<8x128xf32>
    %449 = arith.addf %448, %447 : vector<8x128xf32>
    %450 = arith.divf %448, %449 : vector<8x128xf32>
    %451 = vector.extract_strided_slice %434 {offsets = [0, 256], sizes = [8, 128], strides = [1, 1]} : vector<8x384xf32> to vector<8x128xf32>
    %452 = vector.extract_strided_slice %414 {offsets = [0, 256], sizes = [8, 128], strides = [1, 1]} : vector<8x384xf32> to vector<8x128xf32>
    %453 = arith.addf %452, %326 : vector<8x128xf32>
    %454 = arith.mulf %442, %453 : vector<8x128xf32>
    %455 = arith.addf %451, %454 : vector<8x128xf32>
    %456 = math.tanh %455 : vector<8x128xf32>
    %cst_152 = arith.constant 1.000000e+00 : f32
    %457 = vector.broadcast %cst_152 : f32 to vector<8x128xf32>
    %458 = arith.subf %457, %450 : vector<8x128xf32>
    %459 = arith.mulf %458, %456 : vector<8x128xf32>
    %460 = arith.mulf %450, %410 : vector<8x128xf32>
    %461 = arith.addf %459, %460 : vector<8x128xf32>
    %462 = arith.truncf %461 : vector<8x128xf32> to vector<8x128xbf16>
    %c0_153 = arith.constant 0 : index
    %c0_154 = arith.constant 0 : index
    %463 = vector.load %arg14[%c0_153, %c0_154] : memref<128x640xbf16, #tpu.memory_space<vmem>>, vector<128x640xbf16>
    %cst_155 = arith.constant dense<0.000000e+00> : vector<8x640xf32>
    %464 = tpu.matmul %462, %463, %cst_155 {dimension_numbers = #tpu.dot_dimension_numbers<[1], [0], [0], [1], [0, 0, 1, 1], [], []>} : vector<8x128xbf16>, vector<128x640xbf16>, vector<8x640xf32> -> vector<8x640xf32>
    %465 = vector.extract_strided_slice %464 {offsets = [0, 0], sizes = [8, 384], strides = [1, 1]} : vector<8x640xf32> to vector<8x384xf32>
    %466 = vector.extract_strided_slice %464 {offsets = [0, 384], sizes = [8, 256], strides = [1, 1]} : vector<8x640xf32> to vector<8x256xf32>
    %467 = arith.addf %466, %329 : vector<8x256xf32>
    %cst_156 = arith.constant dense<0xFF800000> : vector<8xf32>
    %468 = vector.multi_reduction <maximumf>, %467, %cst_156 [1] : vector<8x256xf32> to vector<8xf32>
    %469 = vector.shape_cast %468 : vector<8xf32> to vector<8x1xf32>
    %470 = vector.broadcast %469 : vector<8x1xf32> to vector<8x256xf32>
    %471 = arith.subf %467, %470 : vector<8x256xf32>
    %472 = math.exp %471 : vector<8x256xf32>
    %cst_157 = arith.constant dense<0.000000e+00> : vector<8xf32>
    %473 = vector.multi_reduction <add>, %472, %cst_157 [1] : vector<8x256xf32> to vector<8xf32>
    %474 = vector.shape_cast %473 : vector<8xf32> to vector<8x1xf32>
    %475 = math.log %474 : vector<8x1xf32>
    %476 = arith.addf %469, %475 : vector<8x1xf32>
    %c2_158 = arith.constant 2 : index
    %c0_159 = arith.constant 0 : index
    %c0_160 = arith.constant 0 : index
    %477 = vector.load %arg3[%c2_158, %c0_159, %c0_160] : memref<8x8x256xf32, #tpu.memory_space<vmem>>, vector<1x8x256xf32>
    %478 = vector.shape_cast %477 : vector<1x8x256xf32> to vector<8x256xf32>
    %479 = arith.mulf %478, %467 : vector<8x256xf32>
    %cst_161 = arith.constant dense<0.000000e+00> : vector<8xf32>
    %480 = vector.multi_reduction <add>, %479, %cst_161 [1] : vector<8x256xf32> to vector<8xf32>
    %481 = vector.shape_cast %480 : vector<8xf32> to vector<8x1xf32>
    %482 = arith.subf %476, %481 : vector<8x1xf32>
    %483 = arith.addf %432, %482 : vector<8x1xf32>
    %c3_162 = arith.constant 3 : index
    %c0_163 = arith.constant 0 : index
    %c0_164 = arith.constant 0 : index
    %484 = vector.load %arg19[%c3_162, %c0_163, %c0_164] : memref<8x8x384xf32, #tpu.memory_space<vmem>>, vector<1x8x384xf32>
    %485 = vector.shape_cast %484 : vector<1x8x384xf32> to vector<8x384xf32>
    %486 = vector.extract_strided_slice %485 {offsets = [0, 0], sizes = [8, 128], strides = [1, 1]} : vector<8x384xf32> to vector<8x128xf32>
    %487 = vector.extract_strided_slice %465 {offsets = [0, 0], sizes = [8, 128], strides = [1, 1]} : vector<8x384xf32> to vector<8x128xf32>
    %488 = arith.addf %486, %487 : vector<8x128xf32>
    %489 = arith.negf %488 : vector<8x128xf32>
    %490 = math.exp %489 : vector<8x128xf32>
    %cst_165 = arith.constant 1.000000e+00 : f32
    %491 = vector.broadcast %cst_165 : f32 to vector<8x128xf32>
    %492 = arith.addf %491, %490 : vector<8x128xf32>
    %493 = arith.divf %491, %492 : vector<8x128xf32>
    %494 = vector.extract_strided_slice %485 {offsets = [0, 128], sizes = [8, 128], strides = [1, 1]} : vector<8x384xf32> to vector<8x128xf32>
    %495 = vector.extract_strided_slice %465 {offsets = [0, 128], sizes = [8, 128], strides = [1, 1]} : vector<8x384xf32> to vector<8x128xf32>
    %496 = arith.addf %494, %495 : vector<8x128xf32>
    %497 = arith.negf %496 : vector<8x128xf32>
    %498 = math.exp %497 : vector<8x128xf32>
    %cst_166 = arith.constant 1.000000e+00 : f32
    %499 = vector.broadcast %cst_166 : f32 to vector<8x128xf32>
    %500 = arith.addf %499, %498 : vector<8x128xf32>
    %501 = arith.divf %499, %500 : vector<8x128xf32>
    %502 = vector.extract_strided_slice %485 {offsets = [0, 256], sizes = [8, 128], strides = [1, 1]} : vector<8x384xf32> to vector<8x128xf32>
    %503 = vector.extract_strided_slice %465 {offsets = [0, 256], sizes = [8, 128], strides = [1, 1]} : vector<8x384xf32> to vector<8x128xf32>
    %504 = arith.addf %503, %326 : vector<8x128xf32>
    %505 = arith.mulf %493, %504 : vector<8x128xf32>
    %506 = arith.addf %502, %505 : vector<8x128xf32>
    %507 = math.tanh %506 : vector<8x128xf32>
    %cst_167 = arith.constant 1.000000e+00 : f32
    %508 = vector.broadcast %cst_167 : f32 to vector<8x128xf32>
    %509 = arith.subf %508, %501 : vector<8x128xf32>
    %510 = arith.mulf %509, %507 : vector<8x128xf32>
    %511 = arith.mulf %501, %461 : vector<8x128xf32>
    %512 = arith.addf %510, %511 : vector<8x128xf32>
    %513 = arith.truncf %512 : vector<8x128xf32> to vector<8x128xbf16>
    %c0_168 = arith.constant 0 : index
    %c0_169 = arith.constant 0 : index
    %514 = vector.load %arg14[%c0_168, %c0_169] : memref<128x640xbf16, #tpu.memory_space<vmem>>, vector<128x640xbf16>
    %cst_170 = arith.constant dense<0.000000e+00> : vector<8x640xf32>
    %515 = tpu.matmul %513, %514, %cst_170 {dimension_numbers = #tpu.dot_dimension_numbers<[1], [0], [0], [1], [0, 0, 1, 1], [], []>} : vector<8x128xbf16>, vector<128x640xbf16>, vector<8x640xf32> -> vector<8x640xf32>
    %516 = vector.extract_strided_slice %515 {offsets = [0, 0], sizes = [8, 384], strides = [1, 1]} : vector<8x640xf32> to vector<8x384xf32>
    %517 = vector.extract_strided_slice %515 {offsets = [0, 384], sizes = [8, 256], strides = [1, 1]} : vector<8x640xf32> to vector<8x256xf32>
    %518 = arith.addf %517, %329 : vector<8x256xf32>
    %cst_171 = arith.constant dense<0xFF800000> : vector<8xf32>
    %519 = vector.multi_reduction <maximumf>, %518, %cst_171 [1] : vector<8x256xf32> to vector<8xf32>
    %520 = vector.shape_cast %519 : vector<8xf32> to vector<8x1xf32>
    %521 = vector.broadcast %520 : vector<8x1xf32> to vector<8x256xf32>
    %522 = arith.subf %518, %521 : vector<8x256xf32>
    %523 = math.exp %522 : vector<8x256xf32>
    %cst_172 = arith.constant dense<0.000000e+00> : vector<8xf32>
    %524 = vector.multi_reduction <add>, %523, %cst_172 [1] : vector<8x256xf32> to vector<8xf32>
    %525 = vector.shape_cast %524 : vector<8xf32> to vector<8x1xf32>
    %526 = math.log %525 : vector<8x1xf32>
    %527 = arith.addf %520, %526 : vector<8x1xf32>
    %c3_173 = arith.constant 3 : index
    %c0_174 = arith.constant 0 : index
    %c0_175 = arith.constant 0 : index
    %528 = vector.load %arg3[%c3_173, %c0_174, %c0_175] : memref<8x8x256xf32, #tpu.memory_space<vmem>>, vector<1x8x256xf32>
    %529 = vector.shape_cast %528 : vector<1x8x256xf32> to vector<8x256xf32>
    %530 = arith.mulf %529, %518 : vector<8x256xf32>
    %cst_176 = arith.constant dense<0.000000e+00> : vector<8xf32>
    %531 = vector.multi_reduction <add>, %530, %cst_176 [1] : vector<8x256xf32> to vector<8xf32>
    %532 = vector.shape_cast %531 : vector<8xf32> to vector<8x1xf32>
    %533 = arith.subf %527, %532 : vector<8x1xf32>
    %534 = arith.addf %483, %533 : vector<8x1xf32>
    %c4_177 = arith.constant 4 : index
    %c0_178 = arith.constant 0 : index
    %c0_179 = arith.constant 0 : index
    %535 = vector.load %arg19[%c4_177, %c0_178, %c0_179] : memref<8x8x384xf32, #tpu.memory_space<vmem>>, vector<1x8x384xf32>
    %536 = vector.shape_cast %535 : vector<1x8x384xf32> to vector<8x384xf32>
    %537 = vector.extract_strided_slice %536 {offsets = [0, 0], sizes = [8, 128], strides = [1, 1]} : vector<8x384xf32> to vector<8x128xf32>
    %538 = vector.extract_strided_slice %516 {offsets = [0, 0], sizes = [8, 128], strides = [1, 1]} : vector<8x384xf32> to vector<8x128xf32>
    %539 = arith.addf %537, %538 : vector<8x128xf32>
    %540 = arith.negf %539 : vector<8x128xf32>
    %541 = math.exp %540 : vector<8x128xf32>
    %cst_180 = arith.constant 1.000000e+00 : f32
    %542 = vector.broadcast %cst_180 : f32 to vector<8x128xf32>
    %543 = arith.addf %542, %541 : vector<8x128xf32>
    %544 = arith.divf %542, %543 : vector<8x128xf32>
    %545 = vector.extract_strided_slice %536 {offsets = [0, 128], sizes = [8, 128], strides = [1, 1]} : vector<8x384xf32> to vector<8x128xf32>
    %546 = vector.extract_strided_slice %516 {offsets = [0, 128], sizes = [8, 128], strides = [1, 1]} : vector<8x384xf32> to vector<8x128xf32>
    %547 = arith.addf %545, %546 : vector<8x128xf32>
    %548 = arith.negf %547 : vector<8x128xf32>
    %549 = math.exp %548 : vector<8x128xf32>
    %cst_181 = arith.constant 1.000000e+00 : f32
    %550 = vector.broadcast %cst_181 : f32 to vector<8x128xf32>
    %551 = arith.addf %550, %549 : vector<8x128xf32>
    %552 = arith.divf %550, %551 : vector<8x128xf32>
    %553 = vector.extract_strided_slice %536 {offsets = [0, 256], sizes = [8, 128], strides = [1, 1]} : vector<8x384xf32> to vector<8x128xf32>
    %554 = vector.extract_strided_slice %516 {offsets = [0, 256], sizes = [8, 128], strides = [1, 1]} : vector<8x384xf32> to vector<8x128xf32>
    %555 = arith.addf %554, %326 : vector<8x128xf32>
    %556 = arith.mulf %544, %555 : vector<8x128xf32>
    %557 = arith.addf %553, %556 : vector<8x128xf32>
    %558 = math.tanh %557 : vector<8x128xf32>
    %cst_182 = arith.constant 1.000000e+00 : f32
    %559 = vector.broadcast %cst_182 : f32 to vector<8x128xf32>
    %560 = arith.subf %559, %552 : vector<8x128xf32>
    %561 = arith.mulf %560, %558 : vector<8x128xf32>
    %562 = arith.mulf %552, %512 : vector<8x128xf32>
    %563 = arith.addf %561, %562 : vector<8x128xf32>
    %564 = arith.truncf %563 : vector<8x128xf32> to vector<8x128xbf16>
    %c0_183 = arith.constant 0 : index
    %c0_184 = arith.constant 0 : index
    %565 = vector.load %arg14[%c0_183, %c0_184] : memref<128x640xbf16, #tpu.memory_space<vmem>>, vector<128x640xbf16>
    %cst_185 = arith.constant dense<0.000000e+00> : vector<8x640xf32>
    %566 = tpu.matmul %564, %565, %cst_185 {dimension_numbers = #tpu.dot_dimension_numbers<[1], [0], [0], [1], [0, 0, 1, 1], [], []>} : vector<8x128xbf16>, vector<128x640xbf16>, vector<8x640xf32> -> vector<8x640xf32>
    %567 = vector.extract_strided_slice %566 {offsets = [0, 0], sizes = [8, 384], strides = [1, 1]} : vector<8x640xf32> to vector<8x384xf32>
    %568 = vector.extract_strided_slice %566 {offsets = [0, 384], sizes = [8, 256], strides = [1, 1]} : vector<8x640xf32> to vector<8x256xf32>
    %569 = arith.addf %568, %329 : vector<8x256xf32>
    %cst_186 = arith.constant dense<0xFF800000> : vector<8xf32>
    %570 = vector.multi_reduction <maximumf>, %569, %cst_186 [1] : vector<8x256xf32> to vector<8xf32>
    %571 = vector.shape_cast %570 : vector<8xf32> to vector<8x1xf32>
    %572 = vector.broadcast %571 : vector<8x1xf32> to vector<8x256xf32>
    %573 = arith.subf %569, %572 : vector<8x256xf32>
    %574 = math.exp %573 : vector<8x256xf32>
    %cst_187 = arith.constant dense<0.000000e+00> : vector<8xf32>
    %575 = vector.multi_reduction <add>, %574, %cst_187 [1] : vector<8x256xf32> to vector<8xf32>
    %576 = vector.shape_cast %575 : vector<8xf32> to vector<8x1xf32>
    %577 = math.log %576 : vector<8x1xf32>
    %578 = arith.addf %571, %577 : vector<8x1xf32>
    %c4_188 = arith.constant 4 : index
    %c0_189 = arith.constant 0 : index
    %c0_190 = arith.constant 0 : index
    %579 = vector.load %arg3[%c4_188, %c0_189, %c0_190] : memref<8x8x256xf32, #tpu.memory_space<vmem>>, vector<1x8x256xf32>
    %580 = vector.shape_cast %579 : vector<1x8x256xf32> to vector<8x256xf32>
    %581 = arith.mulf %580, %569 : vector<8x256xf32>
    %cst_191 = arith.constant dense<0.000000e+00> : vector<8xf32>
    %582 = vector.multi_reduction <add>, %581, %cst_191 [1] : vector<8x256xf32> to vector<8xf32>
    %583 = vector.shape_cast %582 : vector<8xf32> to vector<8x1xf32>
    %584 = arith.subf %578, %583 : vector<8x1xf32>
    %585 = arith.addf %534, %584 : vector<8x1xf32>
    %c5_192 = arith.constant 5 : index
    %c0_193 = arith.constant 0 : index
    %c0_194 = arith.constant 0 : index
    %586 = vector.load %arg19[%c5_192, %c0_193, %c0_194] : memref<8x8x384xf32, #tpu.memory_space<vmem>>, vector<1x8x384xf32>
    %587 = vector.shape_cast %586 : vector<1x8x384xf32> to vector<8x384xf32>
    %588 = vector.extract_strided_slice %587 {offsets = [0, 0], sizes = [8, 128], strides = [1, 1]} : vector<8x384xf32> to vector<8x128xf32>
    %589 = vector.extract_strided_slice %567 {offsets = [0, 0], sizes = [8, 128], strides = [1, 1]} : vector<8x384xf32> to vector<8x128xf32>
    %590 = arith.addf %588, %589 : vector<8x128xf32>
    %591 = arith.negf %590 : vector<8x128xf32>
    %592 = math.exp %591 : vector<8x128xf32>
    %cst_195 = arith.constant 1.000000e+00 : f32
    %593 = vector.broadcast %cst_195 : f32 to vector<8x128xf32>
    %594 = arith.addf %593, %592 : vector<8x128xf32>
    %595 = arith.divf %593, %594 : vector<8x128xf32>
    %596 = vector.extract_strided_slice %587 {offsets = [0, 128], sizes = [8, 128], strides = [1, 1]} : vector<8x384xf32> to vector<8x128xf32>
    %597 = vector.extract_strided_slice %567 {offsets = [0, 128], sizes = [8, 128], strides = [1, 1]} : vector<8x384xf32> to vector<8x128xf32>
    %598 = arith.addf %596, %597 : vector<8x128xf32>
    %599 = arith.negf %598 : vector<8x128xf32>
    %600 = math.exp %599 : vector<8x128xf32>
    %cst_196 = arith.constant 1.000000e+00 : f32
    %601 = vector.broadcast %cst_196 : f32 to vector<8x128xf32>
    %602 = arith.addf %601, %600 : vector<8x128xf32>
    %603 = arith.divf %601, %602 : vector<8x128xf32>
    %604 = vector.extract_strided_slice %587 {offsets = [0, 256], sizes = [8, 128], strides = [1, 1]} : vector<8x384xf32> to vector<8x128xf32>
    %605 = vector.extract_strided_slice %567 {offsets = [0, 256], sizes = [8, 128], strides = [1, 1]} : vector<8x384xf32> to vector<8x128xf32>
    %606 = arith.addf %605, %326 : vector<8x128xf32>
    %607 = arith.mulf %595, %606 : vector<8x128xf32>
    %608 = arith.addf %604, %607 : vector<8x128xf32>
    %609 = math.tanh %608 : vector<8x128xf32>
    %cst_197 = arith.constant 1.000000e+00 : f32
    %610 = vector.broadcast %cst_197 : f32 to vector<8x128xf32>
    %611 = arith.subf %610, %603 : vector<8x128xf32>
    %612 = arith.mulf %611, %609 : vector<8x128xf32>
    %613 = arith.mulf %603, %563 : vector<8x128xf32>
    %614 = arith.addf %612, %613 : vector<8x128xf32>
    %615 = arith.truncf %614 : vector<8x128xf32> to vector<8x128xbf16>
    %c0_198 = arith.constant 0 : index
    %c0_199 = arith.constant 0 : index
    %616 = vector.load %arg14[%c0_198, %c0_199] : memref<128x640xbf16, #tpu.memory_space<vmem>>, vector<128x640xbf16>
    %cst_200 = arith.constant dense<0.000000e+00> : vector<8x640xf32>
    %617 = tpu.matmul %615, %616, %cst_200 {dimension_numbers = #tpu.dot_dimension_numbers<[1], [0], [0], [1], [0, 0, 1, 1], [], []>} : vector<8x128xbf16>, vector<128x640xbf16>, vector<8x640xf32> -> vector<8x640xf32>
    %618 = vector.extract_strided_slice %617 {offsets = [0, 0], sizes = [8, 384], strides = [1, 1]} : vector<8x640xf32> to vector<8x384xf32>
    %619 = vector.extract_strided_slice %617 {offsets = [0, 384], sizes = [8, 256], strides = [1, 1]} : vector<8x640xf32> to vector<8x256xf32>
    %620 = arith.addf %619, %329 : vector<8x256xf32>
    %cst_201 = arith.constant dense<0xFF800000> : vector<8xf32>
    %621 = vector.multi_reduction <maximumf>, %620, %cst_201 [1] : vector<8x256xf32> to vector<8xf32>
    %622 = vector.shape_cast %621 : vector<8xf32> to vector<8x1xf32>
    %623 = vector.broadcast %622 : vector<8x1xf32> to vector<8x256xf32>
    %624 = arith.subf %620, %623 : vector<8x256xf32>
    %625 = math.exp %624 : vector<8x256xf32>
    %cst_202 = arith.constant dense<0.000000e+00> : vector<8xf32>
    %626 = vector.multi_reduction <add>, %625, %cst_202 [1] : vector<8x256xf32> to vector<8xf32>
    %627 = vector.shape_cast %626 : vector<8xf32> to vector<8x1xf32>
    %628 = math.log %627 : vector<8x1xf32>
    %629 = arith.addf %622, %628 : vector<8x1xf32>
    %c5_203 = arith.constant 5 : index
    %c0_204 = arith.constant 0 : index
    %c0_205 = arith.constant 0 : index
    %630 = vector.load %arg3[%c5_203, %c0_204, %c0_205] : memref<8x8x256xf32, #tpu.memory_space<vmem>>, vector<1x8x256xf32>
    %631 = vector.shape_cast %630 : vector<1x8x256xf32> to vector<8x256xf32>
    %632 = arith.mulf %631, %620 : vector<8x256xf32>
    %cst_206 = arith.constant dense<0.000000e+00> : vector<8xf32>
    %633 = vector.multi_reduction <add>, %632, %cst_206 [1] : vector<8x256xf32> to vector<8xf32>
    %634 = vector.shape_cast %633 : vector<8xf32> to vector<8x1xf32>
    %635 = arith.subf %629, %634 : vector<8x1xf32>
    %636 = arith.addf %585, %635 : vector<8x1xf32>
    %c6_207 = arith.constant 6 : index
    %c0_208 = arith.constant 0 : index
    %c0_209 = arith.constant 0 : index
    %637 = vector.load %arg19[%c6_207, %c0_208, %c0_209] : memref<8x8x384xf32, #tpu.memory_space<vmem>>, vector<1x8x384xf32>
    %638 = vector.shape_cast %637 : vector<1x8x384xf32> to vector<8x384xf32>
    %639 = vector.extract_strided_slice %638 {offsets = [0, 0], sizes = [8, 128], strides = [1, 1]} : vector<8x384xf32> to vector<8x128xf32>
    %640 = vector.extract_strided_slice %618 {offsets = [0, 0], sizes = [8, 128], strides = [1, 1]} : vector<8x384xf32> to vector<8x128xf32>
    %641 = arith.addf %639, %640 : vector<8x128xf32>
    %642 = arith.negf %641 : vector<8x128xf32>
    %643 = math.exp %642 : vector<8x128xf32>
    %cst_210 = arith.constant 1.000000e+00 : f32
    %644 = vector.broadcast %cst_210 : f32 to vector<8x128xf32>
    %645 = arith.addf %644, %643 : vector<8x128xf32>
    %646 = arith.divf %644, %645 : vector<8x128xf32>
    %647 = vector.extract_strided_slice %638 {offsets = [0, 128], sizes = [8, 128], strides = [1, 1]} : vector<8x384xf32> to vector<8x128xf32>
    %648 = vector.extract_strided_slice %618 {offsets = [0, 128], sizes = [8, 128], strides = [1, 1]} : vector<8x384xf32> to vector<8x128xf32>
    %649 = arith.addf %647, %648 : vector<8x128xf32>
    %650 = arith.negf %649 : vector<8x128xf32>
    %651 = math.exp %650 : vector<8x128xf32>
    %cst_211 = arith.constant 1.000000e+00 : f32
    %652 = vector.broadcast %cst_211 : f32 to vector<8x128xf32>
    %653 = arith.addf %652, %651 : vector<8x128xf32>
    %654 = arith.divf %652, %653 : vector<8x128xf32>
    %655 = vector.extract_strided_slice %638 {offsets = [0, 256], sizes = [8, 128], strides = [1, 1]} : vector<8x384xf32> to vector<8x128xf32>
    %656 = vector.extract_strided_slice %618 {offsets = [0, 256], sizes = [8, 128], strides = [1, 1]} : vector<8x384xf32> to vector<8x128xf32>
    %657 = arith.addf %656, %326 : vector<8x128xf32>
    %658 = arith.mulf %646, %657 : vector<8x128xf32>
    %659 = arith.addf %655, %658 : vector<8x128xf32>
    %660 = math.tanh %659 : vector<8x128xf32>
    %cst_212 = arith.constant 1.000000e+00 : f32
    %661 = vector.broadcast %cst_212 : f32 to vector<8x128xf32>
    %662 = arith.subf %661, %654 : vector<8x128xf32>
    %663 = arith.mulf %662, %660 : vector<8x128xf32>
    %664 = arith.mulf %654, %614 : vector<8x128xf32>
    %665 = arith.addf %663, %664 : vector<8x128xf32>
    %666 = arith.truncf %665 : vector<8x128xf32> to vector<8x128xbf16>
    %c0_213 = arith.constant 0 : index
    %c0_214 = arith.constant 0 : index
    %667 = vector.load %arg14[%c0_213, %c0_214] : memref<128x640xbf16, #tpu.memory_space<vmem>>, vector<128x640xbf16>
    %cst_215 = arith.constant dense<0.000000e+00> : vector<8x640xf32>
    %668 = tpu.matmul %666, %667, %cst_215 {dimension_numbers = #tpu.dot_dimension_numbers<[1], [0], [0], [1], [0, 0, 1, 1], [], []>} : vector<8x128xbf16>, vector<128x640xbf16>, vector<8x640xf32> -> vector<8x640xf32>
    %669 = vector.extract_strided_slice %668 {offsets = [0, 0], sizes = [8, 384], strides = [1, 1]} : vector<8x640xf32> to vector<8x384xf32>
    %670 = vector.extract_strided_slice %668 {offsets = [0, 384], sizes = [8, 256], strides = [1, 1]} : vector<8x640xf32> to vector<8x256xf32>
    %671 = arith.addf %670, %329 : vector<8x256xf32>
    %cst_216 = arith.constant dense<0xFF800000> : vector<8xf32>
    %672 = vector.multi_reduction <maximumf>, %671, %cst_216 [1] : vector<8x256xf32> to vector<8xf32>
    %673 = vector.shape_cast %672 : vector<8xf32> to vector<8x1xf32>
    %674 = vector.broadcast %673 : vector<8x1xf32> to vector<8x256xf32>
    %675 = arith.subf %671, %674 : vector<8x256xf32>
    %676 = math.exp %675 : vector<8x256xf32>
    %cst_217 = arith.constant dense<0.000000e+00> : vector<8xf32>
    %677 = vector.multi_reduction <add>, %676, %cst_217 [1] : vector<8x256xf32> to vector<8xf32>
    %678 = vector.shape_cast %677 : vector<8xf32> to vector<8x1xf32>
    %679 = math.log %678 : vector<8x1xf32>
    %680 = arith.addf %673, %679 : vector<8x1xf32>
    %c6_218 = arith.constant 6 : index
    %c0_219 = arith.constant 0 : index
    %c0_220 = arith.constant 0 : index
    %681 = vector.load %arg3[%c6_218, %c0_219, %c0_220] : memref<8x8x256xf32, #tpu.memory_space<vmem>>, vector<1x8x256xf32>
    %682 = vector.shape_cast %681 : vector<1x8x256xf32> to vector<8x256xf32>
    %683 = arith.mulf %682, %671 : vector<8x256xf32>
    %cst_221 = arith.constant dense<0.000000e+00> : vector<8xf32>
    %684 = vector.multi_reduction <add>, %683, %cst_221 [1] : vector<8x256xf32> to vector<8xf32>
    %685 = vector.shape_cast %684 : vector<8xf32> to vector<8x1xf32>
    %686 = arith.subf %680, %685 : vector<8x1xf32>
    %687 = arith.addf %636, %686 : vector<8x1xf32>
    %c7_222 = arith.constant 7 : index
    %c0_223 = arith.constant 0 : index
    %c0_224 = arith.constant 0 : index
    %688 = vector.load %arg19[%c7_222, %c0_223, %c0_224] : memref<8x8x384xf32, #tpu.memory_space<vmem>>, vector<1x8x384xf32>
    %689 = vector.shape_cast %688 : vector<1x8x384xf32> to vector<8x384xf32>
    %690 = vector.extract_strided_slice %689 {offsets = [0, 0], sizes = [8, 128], strides = [1, 1]} : vector<8x384xf32> to vector<8x128xf32>
    %691 = vector.extract_strided_slice %669 {offsets = [0, 0], sizes = [8, 128], strides = [1, 1]} : vector<8x384xf32> to vector<8x128xf32>
    %692 = arith.addf %690, %691 : vector<8x128xf32>
    %693 = arith.negf %692 : vector<8x128xf32>
    %694 = math.exp %693 : vector<8x128xf32>
    %cst_225 = arith.constant 1.000000e+00 : f32
    %695 = vector.broadcast %cst_225 : f32 to vector<8x128xf32>
    %696 = arith.addf %695, %694 : vector<8x128xf32>
    %697 = arith.divf %695, %696 : vector<8x128xf32>
    %698 = vector.extract_strided_slice %689 {offsets = [0, 128], sizes = [8, 128], strides = [1, 1]} : vector<8x384xf32> to vector<8x128xf32>
    %699 = vector.extract_strided_slice %669 {offsets = [0, 128], sizes = [8, 128], strides = [1, 1]} : vector<8x384xf32> to vector<8x128xf32>
    %700 = arith.addf %698, %699 : vector<8x128xf32>
    %701 = arith.negf %700 : vector<8x128xf32>
    %702 = math.exp %701 : vector<8x128xf32>
    %cst_226 = arith.constant 1.000000e+00 : f32
    %703 = vector.broadcast %cst_226 : f32 to vector<8x128xf32>
    %704 = arith.addf %703, %702 : vector<8x128xf32>
    %705 = arith.divf %703, %704 : vector<8x128xf32>
    %706 = vector.extract_strided_slice %689 {offsets = [0, 256], sizes = [8, 128], strides = [1, 1]} : vector<8x384xf32> to vector<8x128xf32>
    %707 = vector.extract_strided_slice %669 {offsets = [0, 256], sizes = [8, 128], strides = [1, 1]} : vector<8x384xf32> to vector<8x128xf32>
    %708 = arith.addf %707, %326 : vector<8x128xf32>
    %709 = arith.mulf %697, %708 : vector<8x128xf32>
    %710 = arith.addf %706, %709 : vector<8x128xf32>
    %711 = math.tanh %710 : vector<8x128xf32>
    %cst_227 = arith.constant 1.000000e+00 : f32
    %712 = vector.broadcast %cst_227 : f32 to vector<8x128xf32>
    %713 = arith.subf %712, %705 : vector<8x128xf32>
    %714 = arith.mulf %713, %711 : vector<8x128xf32>
    %715 = arith.mulf %705, %665 : vector<8x128xf32>
    %716 = arith.addf %714, %715 : vector<8x128xf32>
    %717 = arith.truncf %716 : vector<8x128xf32> to vector<8x128xbf16>
    %c0_228 = arith.constant 0 : index
    %c0_229 = arith.constant 0 : index
    %718 = vector.load %arg14[%c0_228, %c0_229] : memref<128x640xbf16, #tpu.memory_space<vmem>>, vector<128x640xbf16>
    %cst_230 = arith.constant dense<0.000000e+00> : vector<8x640xf32>
    %719 = tpu.matmul %717, %718, %cst_230 {dimension_numbers = #tpu.dot_dimension_numbers<[1], [0], [0], [1], [0, 0, 1, 1], [], []>} : vector<8x128xbf16>, vector<128x640xbf16>, vector<8x640xf32> -> vector<8x640xf32>
    %720 = vector.extract_strided_slice %719 {offsets = [0, 384], sizes = [8, 256], strides = [1, 1]} : vector<8x640xf32> to vector<8x256xf32>
    %721 = arith.addf %720, %329 : vector<8x256xf32>
    %cst_231 = arith.constant dense<0xFF800000> : vector<8xf32>
    %722 = vector.multi_reduction <maximumf>, %721, %cst_231 [1] : vector<8x256xf32> to vector<8xf32>
    %723 = vector.shape_cast %722 : vector<8xf32> to vector<8x1xf32>
    %724 = vector.broadcast %723 : vector<8x1xf32> to vector<8x256xf32>
    %725 = arith.subf %721, %724 : vector<8x256xf32>
    %726 = math.exp %725 : vector<8x256xf32>
    %cst_232 = arith.constant dense<0.000000e+00> : vector<8xf32>
    %727 = vector.multi_reduction <add>, %726, %cst_232 [1] : vector<8x256xf32> to vector<8xf32>
    %728 = vector.shape_cast %727 : vector<8xf32> to vector<8x1xf32>
    %729 = math.log %728 : vector<8x1xf32>
    %730 = arith.addf %723, %729 : vector<8x1xf32>
    %c7_233 = arith.constant 7 : index
    %c0_234 = arith.constant 0 : index
    %c0_235 = arith.constant 0 : index
    %731 = vector.load %arg3[%c7_233, %c0_234, %c0_235] : memref<8x8x256xf32, #tpu.memory_space<vmem>>, vector<1x8x256xf32>
    %732 = vector.shape_cast %731 : vector<1x8x256xf32> to vector<8x256xf32>
    %733 = arith.mulf %732, %721 : vector<8x256xf32>
    %cst_236 = arith.constant dense<0.000000e+00> : vector<8xf32>
    %734 = vector.multi_reduction <add>, %733, %cst_236 [1] : vector<8x256xf32> to vector<8xf32>
    %735 = vector.shape_cast %734 : vector<8xf32> to vector<8x1xf32>
    %736 = arith.subf %730, %735 : vector<8x1xf32>
    %737 = arith.addf %687, %736 : vector<8x1xf32>
    %cst_237 = arith.constant dense<0.000000e+00> : vector<1xf32>
    %738 = vector.multi_reduction <add>, %737, %cst_237 [0] : vector<8x1xf32> to vector<1xf32>
    %739 = vector.shape_cast %738 : vector<1xf32> to vector<1x1xf32>
    %cst_238 = arith.constant 6.400000e+01 : f32
    %740 = vector.broadcast %cst_238 : f32 to vector<1x1xf32>
    %741 = arith.divf %739, %740 : vector<1x1xf32>
    %c0_239 = arith.constant 0 : index
    %c0_240 = arith.constant 0 : index
    %742 = vector.load %arg16[%c0_239, %c0_240] : memref<1x1xf32, #tpu.memory_space<vmem>>, vector<1x1xf32>
    tpu.vector_store %arg16[%c0_239, %c0_240], %741 {strides = array<i32>} : memref<1x1xf32, #tpu.memory_space<vmem>>, vector<1x1xf32>,
    return
  }
}

</mosaic_0001>

<llo_original>
// kernel: rnn_vae_forward.1
$region0: #{rnn_vae_forward.1}
  #allocation0 [shape = 'u32[]', space=smem, size = 0x4, offset = 0x4, fixed_abs, tag = 'smem constant byte address 0x4 - core index']
  #allocation1 [shape = 'u32[72,128]{1,0:T(1,128)}', space=vmem, size = 0x9000, scoped, tag = 'internal scratch']
  #allocation2 [shape = 'f32[8,8,384]{2,1,0:T(8,128)}', space=vmem, size = 0x18000, scoped, tag = 'scratch operand']
  #allocation3 [shape = 'f32[8,8,384]{2,1,0:T(8,128)}', space=vmem, size = 0x18000, scoped, tag = 'scratch operand']
  %s0 = inlined_call_operand.vmem [shape: bf16[64,128], index: 0, kind: input, shape index: {}]
  %s1 = inlined_call_operand.vmem [shape: bf16[64,128], index: 1, kind: input, shape index: {}]
  %s2 = inlined_call_operand.vmem [shape: f32[1,128], index: 2, kind: input, shape index: {}]
  %s3 = inlined_call_operand.vmem [shape: f32[8,8,256], index: 3, kind: input, shape index: {}]
  %s4 = inlined_call_operand.vmem [shape: bf16[128,384], index: 4, kind: input, shape index: {}]
  %s5 = inlined_call_operand.vmem [shape: bf16[128,384], index: 5, kind: input, shape index: {}]
  %s6 = inlined_call_operand.vmem [shape: f32[1,384], index: 6, kind: input, shape index: {}]
  %s7 = inlined_call_operand.vmem [shape: f32[1,128], index: 7, kind: input, shape index: {}]
  %s8 = inlined_call_operand.vmem [shape: bf16[128,256], index: 8, kind: input, shape index: {}]
  %s9 = inlined_call_operand.vmem [shape: f32[1,256], index: 9, kind: input, shape index: {}]
  %s10 = inlined_call_operand.vmem [shape: bf16[128,384], index: 10, kind: input, shape index: {}]
  %s11 = inlined_call_operand.vmem [shape: bf16[128,768], index: 11, kind: input, shape index: {}]
  %s12 = inlined_call_operand.vmem [shape: f32[1,384], index: 12, kind: input, shape index: {}]
  %s13 = inlined_call_operand.vmem [shape: f32[1,128], index: 13, kind: input, shape index: {}]
  %s14 = inlined_call_operand.vmem [shape: bf16[128,640], index: 14, kind: input, shape index: {}]
  %s15 = inlined_call_operand.vmem [shape: f32[1,256], index: 15, kind: input, shape index: {}]
  %s16 = inlined_call_operand.hbm [shape: f32[1,1], index: 16, kind: output, shape index: {0}]
  %s17 = inlined_call_operand.hbm [shape: f32[1,1], index: 17, kind: output, shape index: {1}]
  %18 = xla_tuple %s16, %s17
  %s19 = sld [smem:[#allocation0]]
  $region82: #{rnn_vae_forward.1} parent=0
    _
  %s21 = ssub.s32 1, %s19
  %s22 = scalar_select 0, %s21, %s19
  $region1: #{rnn_vae_forward.1} parent=0
    #allocation4 [shape = 'u8[512]{0}', space=vmem, size = 0x400, scoped, tag = 'output window, operand 0, single buffered']
    #allocation5 [shape = 's32[1]{0}', space=sflag, size = 0x4, scoped, tag = 'scoped memory for rnn_vae_forward.1']
    #allocation6 [shape = 'u8[512]{0}', space=vmem, size = 0x400, scoped, tag = 'output window, operand 1, single buffered']
    #allocation7 [shape = 's32[1]{0}', space=sflag, size = 0x4, scoped, tag = 'scoped memory for rnn_vae_forward.1']
    %23 = vsyncpa [#allocation5], 0
    %24 = vsyncpa [#allocation7], 0
    // Predicated region
    $region2: #{rnn_vae_forward.1} parent=1 // pred_check
      _
    $region3: #{rnn_vae_forward.1} parent=1 // pred_check_branch
      %26 = sbr.rel (0) target = $region5
    $region4: #{rnn_vae_forward.1} parent=1 // pred_region
      _
    $region5: #{rnn_vae_forward.1} parent=1 // pred_fallthru
      _
    // Predicated region
    $region6: #{rnn_vae_forward.1} parent=1 // pred_check
      _
    $region7: #{rnn_vae_forward.1} parent=1 // pred_check_branch
      %28 = sbr.rel (0) target = $region9
    $region8: #{rnn_vae_forward.1} parent=1 // pred_region
      _
    $region9: #{rnn_vae_forward.1} parent=1 // pred_fallthru
      _
    // Predicated region
    $region10: #{rnn_vae_forward.1} parent=1 // pred_check
      _
    $region11: #{rnn_vae_forward.1} parent=1 // pred_check_branch
      %30 = sbr.rel (0) target = $region13
    $region12: #{rnn_vae_forward.1} parent=1 // pred_region
      _
    $region13: #{rnn_vae_forward.1} parent=1 // pred_fallthru
      _
    // Predicated region
    $region14: #{rnn_vae_forward.1} parent=1 // pred_check
      _
    $region15: #{rnn_vae_forward.1} parent=1 // pred_check_branch
      %32 = sbr.rel (0) target = $region17
    $region16: #{rnn_vae_forward.1} parent=1 // pred_region
      _
    $region17: #{rnn_vae_forward.1} parent=1 // pred_fallthru
      _
    // Predicated region
    $region18: #{rnn_vae_forward.1} parent=1 // pred_check
      _
    $region19: #{rnn_vae_forward.1} parent=1 // pred_check_branch
      %34 = sbr.rel (0) target = $region21
    $region20: #{rnn_vae_forward.1} parent=1 // pred_region
      _
    $region21: #{rnn_vae_forward.1} parent=1 // pred_fallthru
      _
    // Predicated region
    $region22: #{rnn_vae_forward.1} parent=1 // pred_check
      _
    $region23: #{rnn_vae_forward.1} parent=1 // pred_check_branch
      %36 = sbr.rel (0) target = $region25
    $region24: #{rnn_vae_forward.1} parent=1 // pred_region
      _
    $region25: #{rnn_vae_forward.1} parent=1 // pred_fallthru
      _
    // Predicated region
    $region26: #{rnn_vae_forward.1} parent=1 // pred_check
      _
    $region27: #{rnn_vae_forward.1} parent=1 // pred_check_branch
      %38 = sbr.rel (0) target = $region29
    $region28: #{rnn_vae_forward.1} parent=1 // pred_region
      _
    $region29: #{rnn_vae_forward.1} parent=1 // pred_fallthru
      _
    // Predicated region
    $region30: #{rnn_vae_forward.1} parent=1 // pred_check
      _
    $region31: #{rnn_vae_forward.1} parent=1 // pred_check_branch
      %40 = sbr.rel (0) target = $region33
    $region32: #{rnn_vae_forward.1} parent=1 // pred_region
      _
    $region33: #{rnn_vae_forward.1} parent=1 // pred_fallthru
      _
    // Predicated region
    $region34: #{rnn_vae_forward.1} parent=1 // pred_check
      _
    $region35: #{rnn_vae_forward.1} parent=1 // pred_check_branch
      %42 = sbr.rel (0) target = $region37
    $region36: #{rnn_vae_forward.1} parent=1 // pred_region
      _
    $region37: #{rnn_vae_forward.1} parent=1 // pred_fallthru
      _
    // Predicated region
    $region38: #{rnn_vae_forward.1} parent=1 // pred_check
      _
    $region39: #{rnn_vae_forward.1} parent=1 // pred_check_branch
      %44 = sbr.rel (0) target = $region41
    $region40: #{rnn_vae_forward.1} parent=1 // pred_region
      _
    $region41: #{rnn_vae_forward.1} parent=1 // pred_fallthru
      _
    // Predicated region
    $region42: #{rnn_vae_forward.1} parent=1 // pred_check
      _
    $region43: #{rnn_vae_forward.1} parent=1 // pred_check_branch
      %46 = sbr.rel (0) target = $region45
    $region44: #{rnn_vae_forward.1} parent=1 // pred_region
      _
    $region45: #{rnn_vae_forward.1} parent=1 // pred_fallthru
      _
    // Predicated region
    $region46: #{rnn_vae_forward.1} parent=1 // pred_check
      _
    $region47: #{rnn_vae_forward.1} parent=1 // pred_check_branch
      %48 = sbr.rel (0) target = $region49
    $region48: #{rnn_vae_forward.1} parent=1 // pred_region
      _
    $region49: #{rnn_vae_forward.1} parent=1 // pred_fallthru
      _
    // Predicated region
    $region50: #{rnn_vae_forward.1} parent=1 // pred_check
      _
    $region51: #{rnn_vae_forward.1} parent=1 // pred_check_branch
      %50 = sbr.rel (0) target = $region53
    $region52: #{rnn_vae_forward.1} parent=1 // pred_region
      _
    $region53: #{rnn_vae_forward.1} parent=1 // pred_fallthru
      _
    // Predicated region
    $region54: #{rnn_vae_forward.1} parent=1 // pred_check
      _
    $region55: #{rnn_vae_forward.1} parent=1 // pred_check_branch
      %52 = sbr.rel (0) target = $region57
    $region56: #{rnn_vae_forward.1} parent=1 // pred_region
      _
    $region57: #{rnn_vae_forward.1} parent=1 // pred_fallthru
      _
    // Predicated region
    $region58: #{rnn_vae_forward.1} parent=1 // pred_check
      _
    $region59: #{rnn_vae_forward.1} parent=1 // pred_check_branch
      %54 = sbr.rel (0) target = $region61
    $region60: #{rnn_vae_forward.1} parent=1 // pred_region
      _
    $region61: #{rnn_vae_forward.1} parent=1 // pred_fallthru
      _
    // Predicated region
    $region62: #{rnn_vae_forward.1} parent=1 // pred_check
      _
    $region63: #{rnn_vae_forward.1} parent=1 // pred_check_branch
      %56 = sbr.rel (0) target = $region65
    $region64: #{rnn_vae_forward.1} parent=1 // pred_region
      _
    $region65: #{rnn_vae_forward.1} parent=1 // pred_fallthru
      _
    %v58 = vld [vmem:[%s0] sm:$0xf]
    %v59 = vld [vmem:[%s0 + $0x4] sm:$0xf]
    %v60 = vld [vmem:[%s0 + $0x8] sm:$0xf]
    %v61 = vld [vmem:[%s0 + $0xc] sm:$0xf]
    %v62 = vld [vmem:[%s0 + $0x10] sm:$0xf]
    %v63 = vld [vmem:[%s0 + $0x14] sm:$0xf]
    %v64 = vld [vmem:[%s0 + $0x18] sm:$0xf]
    %v65 = vld [vmem:[%s0 + $0x1c] sm:$0xf]
    %v66 = vld [vmem:[%s4] sm:$0xff]
    %v67 = vld [vmem:[%s4 + $0x8] sm:$0xf]
    %v68 = vld [vmem:[%s4 + $0xc] sm:$0xff]
    %v69 = vld [vmem:[%s4 + $0x14] sm:$0xf]
    %v70 = vld [vmem:[%s4 + $0x18] sm:$0xff]
    %v71 = vld [vmem:[%s4 + $0x20] sm:$0xf]
    %v72 = vld [vmem:[%s4 + $0x24] sm:$0xff]
    %v73 = vld [vmem:[%s4 + $0x2c] sm:$0xf]
    %v74 = vld [vmem:[%s4 + $0x30] sm:$0xff]
    %v75 = vld [vmem:[%s4 + $0x38] sm:$0xf]
    %v76 = vld [vmem:[%s4 + $0x3c] sm:$0xff]
    %v77 = vld [vmem:[%s4 + $0x44] sm:$0xf]
    %v78 = vld [vmem:[%s4 + $0x48] sm:$0xff]
    %v79 = vld [vmem:[%s4 + $0x50] sm:$0xf]
    %v80 = vld [vmem:[%s4 + $0x54] sm:$0xff]
    %v81 = vld [vmem:[%s4 + $0x5c] sm:$0xf]
    %v82 = vld [vmem:[%s4 + $0x60] sm:$0xff]
    %v83 = vld [vmem:[%s4 + $0x68] sm:$0xf]
    %v84 = vld [vmem:[%s4 + $0x6c] sm:$0xff]
    %v85 = vld [vmem:[%s4 + $0x74] sm:$0xf]
    %v86 = vld [vmem:[%s4 + $0x78] sm:$0xff]
    %v87 = vld [vmem:[%s4 + $0x80] sm:$0xf]
    %v88 = vld [vmem:[%s4 + $0x84] sm:$0xff]
    %v89 = vld [vmem:[%s4 + $0x8c] sm:$0xf]
    %v90 = vld [vmem:[%s4 + $0x90] sm:$0xff]
    %v91 = vld [vmem:[%s4 + $0x98] sm:$0xf]
    %v92 = vld [vmem:[%s4 + $0x9c] sm:$0xff]
    %v93 = vld [vmem:[%s4 + $0xa4] sm:$0xf]
    %v94 = vld [vmem:[%s4 + $0xa8] sm:$0xff]
    %v95 = vld [vmem:[%s4 + $0xb0] sm:$0xf]
    %v96 = vld [vmem:[%s4 + $0xb4] sm:$0xff]
    %v97 = vld [vmem:[%s4 + $0xbc] sm:$0xf]
    %v98 = vld [vmem:[%s6] sm:$0x7]
    %v100 = vperm.slane %v98, 0
    %v101 = vperm.slane %v98, 1
    %v102 = vperm.slane %v98, 2
    %v114 = vunpack.c.l.b16 %v58
    %v115 = vunpack.c.l.b16 %v59
    %v116 = vunpack.c.l.b16 %v60
    %v117 = vunpack.c.l.b16 %v61
    %v118 = vunpack.c.l.b16 %v62
    %v119 = vunpack.c.l.b16 %v63
    %v120 = vunpack.c.l.b16 %v64
    %v121 = vunpack.c.l.b16 %v65
    %v122 = vpack.c.b16 %v115, %v114
    %v123 = vpack.c.b16 %v117, %v116
    %v124 = vpack.c.b16 %v119, %v118
    %v125 = vpack.c.b16 %v121, %v120
    %v162 = vunpack.c.l.b16 %v66
    %v163 = vunpack.c.h.b16 %v66
    %v164 = vunpack.c.l.b16 %v67
    %v165 = vunpack.c.l.b16 %v68
    %v166 = vunpack.c.h.b16 %v68
    %v167 = vunpack.c.l.b16 %v69
    %v168 = vunpack.c.l.b16 %v70
    %v169 = vunpack.c.h.b16 %v70
    %v170 = vunpack.c.l.b16 %v71
    %v171 = vunpack.c.l.b16 %v72
    %v172 = vunpack.c.h.b16 %v72
    %v173 = vunpack.c.l.b16 %v73
    %v174 = vunpack.c.l.b16 %v74
    %v175 = vunpack.c.h.b16 %v74
    %v176 = vunpack.c.l.b16 %v75
    %v177 = vunpack.c.l.b16 %v76
    %v178 = vunpack.c.h.b16 %v76
    %v179 = vunpack.c.l.b16 %v77
    %v180 = vunpack.c.l.b16 %v78
    %v181 = vunpack.c.h.b16 %v78
    %v182 = vunpack.c.l.b16 %v79
    %v183 = vunpack.c.l.b16 %v80
    %v184 = vunpack.c.h.b16 %v80
    %v185 = vunpack.c.l.b16 %v81
    %v186 = vunpack.c.l.b16 %v82
    %v187 = vunpack.c.h.b16 %v82
    %v188 = vunpack.c.l.b16 %v83
    %v189 = vunpack.c.l.b16 %v84
    %v190 = vunpack.c.h.b16 %v84
    %v191 = vunpack.c.l.b16 %v85
    %v192 = vunpack.c.l.b16 %v86
    %v193 = vunpack.c.h.b16 %v86
    %v194 = vunpack.c.l.b16 %v87
    %v195 = vunpack.c.l.b16 %v88
    %v196 = vunpack.c.h.b16 %v88
    %v197 = vunpack.c.l.b16 %v89
    %v198 = vunpack.c.l.b16 %v90
    %v199 = vunpack.c.h.b16 %v90
    %v200 = vunpack.c.l.b16 %v91
    %v201 = vunpack.c.l.b16 %v92
    %v202 = vunpack.c.h.b16 %v92
    %v203 = vunpack.c.l.b16 %v93
    %v204 = vunpack.c.l.b16 %v94
    %v205 = vunpack.c.h.b16 %v94
    %v206 = vunpack.c.l.b16 %v95
    %v207 = vunpack.c.l.b16 %v96
    %v208 = vunpack.c.h.b16 %v96
    %v209 = vunpack.c.l.b16 %v97
    %v210 = vpack.c.b16 %v165, %v162
    %v211 = vpack.c.b16 %v166, %v163
    %v212 = vpack.c.b16 %v167, %v164
    %v213 = vpack.c.b16 %v171, %v168
    %v214 = vpack.c.b16 %v172, %v169
    %v215 = vpack.c.b16 %v173, %v170
    %v216 = vpack.c.b16 %v177, %v174
    %v217 = vpack.c.b16 %v178, %v175
    %v218 = vpack.c.b16 %v179, %v176
    %v219 = vpack.c.b16 %v183, %v180
    %v220 = vpack.c.b16 %v184, %v181
    %v221 = vpack.c.b16 %v185, %v182
    %v222 = vpack.c.b16 %v189, %v186
    %v223 = vpack.c.b16 %v190, %v187
    %v224 = vpack.c.b16 %v191, %v188
    %v225 = vpack.c.b16 %v195, %v192
    %v226 = vpack.c.b16 %v196, %v193
    %v227 = vpack.c.b16 %v197, %v194
    %v228 = vpack.c.b16 %v201, %v198
    %v229 = vpack.c.b16 %v202, %v199
    %v230 = vpack.c.b16 %v203, %v200
    %v231 = vpack.c.b16 %v207, %v204
    %v232 = vpack.c.b16 %v208, %v205
    %v233 = vpack.c.b16 %v209, %v206
    %258 = vmatpush.bf16.msra.mxu0 %v231
    %259 = vmatpush.bf16.msra.mxu0 %v228
    %260 = vmatpush.bf16.msra.mxu0 %v225
    %261 = vmatpush.bf16.msra.mxu0 %v222
    %262 = vmatpush.bf16.msra.mxu0 %v219
    %263 = vmatpush.bf16.msra.mxu0 %v216
    %264 = vmatpush.bf16.msra.mxu0 %v213
    %265 = vmatpush.bf16.msra.mxu0 %v210
    %266 = vmatmul.bf16.gmra.mxu0 %v122
    %v267 = vpop.f32.mrf.mxu0
    %v268 = vadd.f32 %v100, %v267
    %v269 = vpop.f32.mrf.mxu0
    %v270 = vadd.f32 %v100, %v269
    %271 = vmatmul.bf16.gmra.mxu0 %v123
    %v272 = vpop.f32.mrf.mxu0
    %v273 = vadd.f32 %v100, %v272
    %v274 = vpop.f32.mrf.mxu0
    %v275 = vadd.f32 %v100, %v274
    %276 = vmatmul.bf16.gmra.mxu0 %v124
    %v277 = vpop.f32.mrf.mxu0
    %v278 = vadd.f32 %v100, %v277
    %v279 = vpop.f32.mrf.mxu0
    %v280 = vadd.f32 %v100, %v279
    %281 = vmatmul.bf16.gmra.mxu0 %v125
    %v282 = vpop.f32.mrf.mxu0
    %v283 = vadd.f32 %v100, %v282
    %v284 = vpop.f32.mrf.mxu0
    %v285 = vadd.f32 %v100, %v284
    %286 = vdwg.mxu0
    %287 = vmatpush.bf16.msra.mxu0 %v232
    %288 = vmatpush.bf16.msra.mxu0 %v229
    %289 = vmatpush.bf16.msra.mxu0 %v226
    %290 = vmatpush.bf16.msra.mxu0 %v223
    %291 = vmatpush.bf16.msra.mxu0 %v220
    %292 = vmatpush.bf16.msra.mxu0 %v217
    %293 = vmatpush.bf16.msra.mxu0 %v214
    %294 = vmatpush.bf16.msra.mxu0 %v211
    %295 = vmatmul.bf16.gmra.mxu0 %v122
    %v296 = vpop.f32.mrf.mxu0
    %v297 = vadd.f32 %v101, %v296
    %v298 = vpop.f32.mrf.mxu0
    %v299 = vadd.f32 %v101, %v298
    %300 = vmatmul.bf16.gmra.mxu0 %v123
    %v301 = vpop.f32.mrf.mxu0
    %v302 = vadd.f32 %v101, %v301
    %v303 = vpop.f32.mrf.mxu0
    %v304 = vadd.f32 %v101, %v303
    %305 = vmatmul.bf16.gmra.mxu0 %v124
    %v306 = vpop.f32.mrf.mxu0
    %v307 = vadd.f32 %v101, %v306
    %v308 = vpop.f32.mrf.mxu0
    %v309 = vadd.f32 %v101, %v308
    %310 = vmatmul.bf16.gmra.mxu0 %v125
    %v311 = vpop.f32.mrf.mxu0
    %v312 = vadd.f32 %v101, %v311
    %v313 = vpop.f32.mrf.mxu0
    %v314 = vadd.f32 %v101, %v313
    %315 = vdwg.mxu0
    %316 = vmatpush.bf16.msra.mxu0 %v233
    %317 = vmatpush.bf16.msra.mxu0 %v230
    %318 = vmatpush.bf16.msra.mxu0 %v227
    %319 = vmatpush.bf16.msra.mxu0 %v224
    %320 = vmatpush.bf16.msra.mxu0 %v221
    %321 = vmatpush.bf16.msra.mxu0 %v218
    %322 = vmatpush.bf16.msra.mxu0 %v215
    %323 = vmatpush.bf16.msra.mxu0 %v212
    %324 = vmatmul.bf16.gmra.mxu0 %v122
    %v325 = vpop.f32.mrf.mxu0
    %v326 = vadd.f32 %v102, %v325
    %v327 = vpop.f32.mrf.mxu0
    %v328 = vadd.f32 %v102, %v327
    %329 = vmatmul.bf16.gmra.mxu0 %v123
    %v330 = vpop.f32.mrf.mxu0
    %v331 = vadd.f32 %v102, %v330
    %v332 = vpop.f32.mrf.mxu0
    %v333 = vadd.f32 %v102, %v332
    %334 = vmatmul.bf16.gmra.mxu0 %v124
    %v335 = vpop.f32.mrf.mxu0
    %v336 = vadd.f32 %v102, %v335
    %v337 = vpop.f32.mrf.mxu0
    %v338 = vadd.f32 %v102, %v337
    %339 = vmatmul.bf16.gmra.mxu0 %v125
    %v340 = vpop.f32.mrf.mxu0
    %v341 = vadd.f32 %v102, %v340
    %v342 = vpop.f32.mrf.mxu0
    %v343 = vadd.f32 %v102, %v342
    %344 = vdwg.mxu0
    %345 = vst [vmem:[#allocation2] sm:$0xff] %v268
    %346 = vst [vmem:[#allocation2 + $0x8] sm:$0xff] %v297
    %347 = vst [vmem:[#allocation2 + $0x10] sm:$0xff] %v326
    %348 = vst [vmem:[#allocation2 + $0x18] sm:$0xff] %v270
    %349 = vst [vmem:[#allocation2 + $0x20] sm:$0xff] %v299
    %350 = vst [vmem:[#allocation2 + $0x28] sm:$0xff] %v328
    %351 = vst [vmem:[#allocation2 + $0x30] sm:$0xff] %v273
    %352 = vst [vmem:[#allocation2 + $0x38] sm:$0xff] %v302
    %353 = vst [vmem:[#allocation2 + $0x40] sm:$0xff] %v331
    %354 = vst [vmem:[#allocation2 + $0x48] sm:$0xff] %v275
    %355 = vst [vmem:[#allocation2 + $0x50] sm:$0xff] %v304
    %356 = vst [vmem:[#allocation2 + $0x58] sm:$0xff] %v333
    %357 = vst [vmem:[#allocation2 + $0x60] sm:$0xff] %v278
    %358 = vst [vmem:[#allocation2 + $0x68] sm:$0xff] %v307
    %359 = vst [vmem:[#allocation2 + $0x70] sm:$0xff] %v336
    %360 = vst [vmem:[#allocation2 + $0x78] sm:$0xff] %v280
    %361 = vst [vmem:[#allocation2 + $0x80] sm:$0xff] %v309
    %362 = vst [vmem:[#allocation2 + $0x88] sm:$0xff] %v338
    %363 = vst [vmem:[#allocation2 + $0x90] sm:$0xff] %v283
    %364 = vst [vmem:[#allocation2 + $0x98] sm:$0xff] %v312
    %365 = vst [vmem:[#allocation2 + $0xa0] sm:$0xff] %v341
    %366 = vst [vmem:[#allocation2 + $0xa8] sm:$0xff] %v285
    %367 = vst [vmem:[#allocation2 + $0xb0] sm:$0xff] %v314
    %368 = vst [vmem:[#allocation2 + $0xb8] sm:$0xff] %v343
    %v369 = vld [vmem:[%s1] sm:$0xf]
    %v370 = vld [vmem:[%s1 + $0x4] sm:$0xf]
    %v371 = vld [vmem:[%s1 + $0x8] sm:$0xf]
    %v372 = vld [vmem:[%s1 + $0xc] sm:$0xf]
    %v373 = vld [vmem:[%s1 + $0x10] sm:$0xf]
    %v374 = vld [vmem:[%s1 + $0x14] sm:$0xf]
    %v375 = vld [vmem:[%s1 + $0x18] sm:$0xf]
    %v376 = vld [vmem:[%s1 + $0x1c] sm:$0xf]
    %v377 = vld [vmem:[%s10] sm:$0xff]
    %v378 = vld [vmem:[%s10 + $0x8] sm:$0xf]
    %v379 = vld [vmem:[%s10 + $0xc] sm:$0xff]
    %v380 = vld [vmem:[%s10 + $0x14] sm:$0xf]
    %v381 = vld [vmem:[%s10 + $0x18] sm:$0xff]
    %v382 = vld [vmem:[%s10 + $0x20] sm:$0xf]
    %v383 = vld [vmem:[%s10 + $0x24] sm:$0xff]
    %v384 = vld [vmem:[%s10 + $0x2c] sm:$0xf]
    %v385 = vld [vmem:[%s10 + $0x30] sm:$0xff]
    %v386 = vld [vmem:[%s10 + $0x38] sm:$0xf]
    %v387 = vld [vmem:[%s10 + $0x3c] sm:$0xff]
    %v388 = vld [vmem:[%s10 + $0x44] sm:$0xf]
    %v389 = vld [vmem:[%s10 + $0x48] sm:$0xff]
    %v390 = vld [vmem:[%s10 + $0x50] sm:$0xf]
    %v391 = vld [vmem:[%s10 + $0x54] sm:$0xff]
    %v392 = vld [vmem:[%s10 + $0x5c] sm:$0xf]
    %v393 = vld [vmem:[%s10 + $0x60] sm:$0xff]
    %v394 = vld [vmem:[%s10 + $0x68] sm:$0xf]
    %v395 = vld [vmem:[%s10 + $0x6c] sm:$0xff]
    %v396 = vld [vmem:[%s10 + $0x74] sm:$0xf]
    %v397 = vld [vmem:[%s10 + $0x78] sm:$0xff]
    %v398 = vld [vmem:[%s10 + $0x80] sm:$0xf]
    %v399 = vld [vmem:[%s10 + $0x84] sm:$0xff]
    %v400 = vld [vmem:[%s10 + $0x8c] sm:$0xf]
    %v401 = vld [vmem:[%s10 + $0x90] sm:$0xff]
    %v402 = vld [vmem:[%s10 + $0x98] sm:$0xf]
    %v403 = vld [vmem:[%s10 + $0x9c] sm:$0xff]
    %v404 = vld [vmem:[%s10 + $0xa4] sm:$0xf]
    %v405 = vld [vmem:[%s10 + $0xa8] sm:$0xff]
    %v406 = vld [vmem:[%s10 + $0xb0] sm:$0xf]
    %v407 = vld [vmem:[%s10 + $0xb4] sm:$0xff]
    %v408 = vld [vmem:[%s10 + $0xbc] sm:$0xf]
    %v409 = vld [vmem:[%s12] sm:$0x7]
    %v411 = vperm.slane %v409, 0
    %v412 = vperm.slane %v409, 1
    %v413 = vperm.slane %v409, 2
    %v425 = vunpack.c.l.b16 %v369
    %v426 = vunpack.c.l.b16 %v370
    %v427 = vunpack.c.l.b16 %v371
    %v428 = vunpack.c.l.b16 %v372
    %v429 = vunpack.c.l.b16 %v373
    %v430 = vunpack.c.l.b16 %v374
    %v431 = vunpack.c.l.b16 %v375
    %v432 = vunpack.c.l.b16 %v376
    %v433 = vpack.c.b16 %v426, %v425
    %v434 = vpack.c.b16 %v428, %v427
    %v435 = vpack.c.b16 %v430, %v429
    %v436 = vpack.c.b16 %v432, %v431
    %v473 = vunpack.c.l.b16 %v377
    %v474 = vunpack.c.h.b16 %v377
    %v475 = vunpack.c.l.b16 %v378
    %v476 = vunpack.c.l.b16 %v379
    %v477 = vunpack.c.h.b16 %v379
    %v478 = vunpack.c.l.b16 %v380
    %v479 = vunpack.c.l.b16 %v381
    %v480 = vunpack.c.h.b16 %v381
    %v481 = vunpack.c.l.b16 %v382
    %v482 = vunpack.c.l.b16 %v383
    %v483 = vunpack.c.h.b16 %v383
    %v484 = vunpack.c.l.b16 %v384
    %v485 = vunpack.c.l.b16 %v385
    %v486 = vunpack.c.h.b16 %v385
    %v487 = vunpack.c.l.b16 %v386
    %v488 = vunpack.c.l.b16 %v387
    %v489 = vunpack.c.h.b16 %v387
    %v490 = vunpack.c.l.b16 %v388
    %v491 = vunpack.c.l.b16 %v389
    %v492 = vunpack.c.h.b16 %v389
    %v493 = vunpack.c.l.b16 %v390
    %v494 = vunpack.c.l.b16 %v391
    %v495 = vunpack.c.h.b16 %v391
    %v496 = vunpack.c.l.b16 %v392
    %v497 = vunpack.c.l.b16 %v393
    %v498 = vunpack.c.h.b16 %v393
    %v499 = vunpack.c.l.b16 %v394
    %v500 = vunpack.c.l.b16 %v395
    %v501 = vunpack.c.h.b16 %v395
    %v502 = vunpack.c.l.b16 %v396
    %v503 = vunpack.c.l.b16 %v397
    %v504 = vunpack.c.h.b16 %v397
    %v505 = vunpack.c.l.b16 %v398
    %v506 = vunpack.c.l.b16 %v399
    %v507 = vunpack.c.h.b16 %v399
    %v508 = vunpack.c.l.b16 %v400
    %v509 = vunpack.c.l.b16 %v401
    %v510 = vunpack.c.h.b16 %v401
    %v511 = vunpack.c.l.b16 %v402
    %v512 = vunpack.c.l.b16 %v403
    %v513 = vunpack.c.h.b16 %v403
    %v514 = vunpack.c.l.b16 %v404
    %v515 = vunpack.c.l.b16 %v405
    %v516 = vunpack.c.h.b16 %v405
    %v517 = vunpack.c.l.b16 %v406
    %v518 = vunpack.c.l.b16 %v407
    %v519 = vunpack.c.h.b16 %v407
    %v520 = vunpack.c.l.b16 %v408
    %v521 = vpack.c.b16 %v476, %v473
    %v522 = vpack.c.b16 %v477, %v474
    %v523 = vpack.c.b16 %v478, %v475
    %v524 = vpack.c.b16 %v482, %v479
    %v525 = vpack.c.b16 %v483, %v480
    %v526 = vpack.c.b16 %v484, %v481
    %v527 = vpack.c.b16 %v488, %v485
    %v528 = vpack.c.b16 %v489, %v486
    %v529 = vpack.c.b16 %v490, %v487
    %v530 = vpack.c.b16 %v494, %v491
    %v531 = vpack.c.b16 %v495, %v492
    %v532 = vpack.c.b16 %v496, %v493
    %v533 = vpack.c.b16 %v500, %v497
    %v534 = vpack.c.b16 %v501, %v498
    %v535 = vpack.c.b16 %v502, %v499
    %v536 = vpack.c.b16 %v506, %v503
    %v537 = vpack.c.b16 %v507, %v504
    %v538 = vpack.c.b16 %v508, %v505
    %v539 = vpack.c.b16 %v512, %v509
    %v540 = vpack.c.b16 %v513, %v510
    %v541 = vpack.c.b16 %v514, %v511
    %v542 = vpack.c.b16 %v518, %v515
    %v543 = vpack.c.b16 %v519, %v516
    %v544 = vpack.c.b16 %v520, %v517
    %569 = vmatpush.bf16.msra.mxu0 %v542
    %570 = vmatpush.bf16.msra.mxu0 %v539
    %571 = vmatpush.bf16.msra.mxu0 %v536
    %572 = vmatpush.bf16.msra.mxu0 %v533
    %573 = vmatpush.bf16.msra.mxu0 %v530
    %574 = vmatpush.bf16.msra.mxu0 %v527
    %575 = vmatpush.bf16.msra.mxu0 %v524
    %576 = vmatpush.bf16.msra.mxu0 %v521
    %577 = vmatmul.bf16.gmra.mxu0 %v433
    %v578 = vpop.f32.mrf.mxu0
    %v579 = vadd.f32 %v411, %v578
    %v580 = vpop.f32.mrf.mxu0
    %v581 = vadd.f32 %v411, %v580
    %582 = vmatmul.bf16.gmra.mxu0 %v434
    %v583 = vpop.f32.mrf.mxu0
    %v584 = vadd.f32 %v411, %v583
    %v585 = vpop.f32.mrf.mxu0
    %v586 = vadd.f32 %v411, %v585
    %587 = vmatmul.bf16.gmra.mxu0 %v435
    %v588 = vpop.f32.mrf.mxu0
    %v589 = vadd.f32 %v411, %v588
    %v590 = vpop.f32.mrf.mxu0
    %v591 = vadd.f32 %v411, %v590
    %592 = vmatmul.bf16.gmra.mxu0 %v436
    %v593 = vpop.f32.mrf.mxu0
    %v594 = vadd.f32 %v411, %v593
    %v595 = vpop.f32.mrf.mxu0
    %v596 = vadd.f32 %v411, %v595
    %597 = vdwg.mxu0
    %598 = vmatpush.bf16.msra.mxu0 %v543
    %599 = vmatpush.bf16.msra.mxu0 %v540
    %600 = vmatpush.bf16.msra.mxu0 %v537
    %601 = vmatpush.bf16.msra.mxu0 %v534
    %602 = vmatpush.bf16.msra.mxu0 %v531
    %603 = vmatpush.bf16.msra.mxu0 %v528
    %604 = vmatpush.bf16.msra.mxu0 %v525
    %605 = vmatpush.bf16.msra.mxu0 %v522
    %606 = vmatmul.bf16.gmra.mxu0 %v433
    %v607 = vpop.f32.mrf.mxu0
    %v608 = vadd.f32 %v412, %v607
    %v609 = vpop.f32.mrf.mxu0
    %v610 = vadd.f32 %v412, %v609
    %611 = vmatmul.bf16.gmra.mxu0 %v434
    %v612 = vpop.f32.mrf.mxu0
    %v613 = vadd.f32 %v412, %v612
    %v614 = vpop.f32.mrf.mxu0
    %v615 = vadd.f32 %v412, %v614
    %616 = vmatmul.bf16.gmra.mxu0 %v435
    %v617 = vpop.f32.mrf.mxu0
    %v618 = vadd.f32 %v412, %v617
    %v619 = vpop.f32.mrf.mxu0
    %v620 = vadd.f32 %v412, %v619
    %621 = vmatmul.bf16.gmra.mxu0 %v436
    %v622 = vpop.f32.mrf.mxu0
    %v623 = vadd.f32 %v412, %v622
    %v624 = vpop.f32.mrf.mxu0
    %v625 = vadd.f32 %v412, %v624
    %626 = vdwg.mxu0
    %627 = vmatpush.bf16.msra.mxu0 %v544
    %628 = vmatpush.bf16.msra.mxu0 %v541
    %629 = vmatpush.bf16.msra.mxu0 %v538
    %630 = vmatpush.bf16.msra.mxu0 %v535
    %631 = vmatpush.bf16.msra.mxu0 %v532
    %632 = vmatpush.bf16.msra.mxu0 %v529
    %633 = vmatpush.bf16.msra.mxu0 %v526
    %634 = vmatpush.bf16.msra.mxu0 %v523
    %635 = vmatmul.bf16.gmra.mxu0 %v433
    %v636 = vpop.f32.mrf.mxu0
    %v637 = vadd.f32 %v413, %v636
    %v638 = vpop.f32.mrf.mxu0
    %v639 = vadd.f32 %v413, %v638
    %640 = vmatmul.bf16.gmra.mxu0 %v434
    %v641 = vpop.f32.mrf.mxu0
    %v642 = vadd.f32 %v413, %v641
    %v643 = vpop.f32.mrf.mxu0
    %v644 = vadd.f32 %v413, %v643
    %645 = vmatmul.bf16.gmra.mxu0 %v435
    %v646 = vpop.f32.mrf.mxu0
    %v647 = vadd.f32 %v413, %v646
    %v648 = vpop.f32.mrf.mxu0
    %v649 = vadd.f32 %v413, %v648
    %650 = vmatmul.bf16.gmra.mxu0 %v436
    %v651 = vpop.f32.mrf.mxu0
    %v652 = vadd.f32 %v413, %v651
    %v653 = vpop.f32.mrf.mxu0
    %v654 = vadd.f32 %v413, %v653
    %655 = vdwg.mxu0
    %656 = vst [vmem:[#allocation3] sm:$0xff] %v579
    %657 = vst [vmem:[#allocation3 + $0x8] sm:$0xff] %v608
    %658 = vst [vmem:[#allocation3 + $0x10] sm:$0xff] %v637
    %659 = vst [vmem:[#allocation3 + $0x18] sm:$0xff] %v581
    %660 = vst [vmem:[#allocation3 + $0x20] sm:$0xff] %v610
    %661 = vst [vmem:[#allocation3 + $0x28] sm:$0xff] %v639
    %662 = vst [vmem:[#allocation3 + $0x30] sm:$0xff] %v584
    %663 = vst [vmem:[#allocation3 + $0x38] sm:$0xff] %v613
    %664 = vst [vmem:[#allocation3 + $0x40] sm:$0xff] %v642
    %665 = vst [vmem:[#allocation3 + $0x48] sm:$0xff] %v586
    %666 = vst [vmem:[#allocation3 + $0x50] sm:$0xff] %v615
    %667 = vst [vmem:[#allocation3 + $0x58] sm:$0xff] %v644
    %668 = vst [vmem:[#allocation3 + $0x60] sm:$0xff] %v589
    %669 = vst [vmem:[#allocation3 + $0x68] sm:$0xff] %v618
    %670 = vst [vmem:[#allocation3 + $0x70] sm:$0xff] %v647
    %671 = vst [vmem:[#allocation3 + $0x78] sm:$0xff] %v591
    %672 = vst [vmem:[#allocation3 + $0x80] sm:$0xff] %v620
    %673 = vst [vmem:[#allocation3 + $0x88] sm:$0xff] %v649
    %674 = vst [vmem:[#allocation3 + $0x90] sm:$0xff] %v594
    %675 = vst [vmem:[#allocation3 + $0x98] sm:$0xff] %v623
    %676 = vst [vmem:[#allocation3 + $0xa0] sm:$0xff] %v652
    %677 = vst [vmem:[#allocation3 + $0xa8] sm:$0xff] %v596
    %678 = vst [vmem:[#allocation3 + $0xb0] sm:$0xff] %v625
    %679 = vst [vmem:[#allocation3 + $0xb8] sm:$0xff] %v654
    %v680 = vld [vmem:[%s7] sm:$0x1]
    %v682 = vperm.slane %v680, 0
    %v684 = vld [vmem:[%s5] sm:$0xff]
    %v685 = vld [vmem:[%s5 + $0x8] sm:$0xf]
    %v686 = vld [vmem:[%s5 + $0xc] sm:$0xff]
    %v687 = vld [vmem:[%s5 + $0x14] sm:$0xf]
    %v688 = vld [vmem:[%s5 + $0x18] sm:$0xff]
    %v689 = vld [vmem:[%s5 + $0x20] sm:$0xf]
    %v690 = vld [vmem:[%s5 + $0x24] sm:$0xff]
    %v691 = vld [vmem:[%s5 + $0x2c] sm:$0xf]
    %v692 = vld [vmem:[%s5 + $0x30] sm:$0xff]
    %v693 = vld [vmem:[%s5 + $0x38] sm:$0xf]
    %v694 = vld [vmem:[%s5 + $0x3c] sm:$0xff]
    %v695 = vld [vmem:[%s5 + $0x44] sm:$0xf]
    %v696 = vld [vmem:[%s5 + $0x48] sm:$0xff]
    %v697 = vld [vmem:[%s5 + $0x50] sm:$0xf]
    %v698 = vld [vmem:[%s5 + $0x54] sm:$0xff]
    %v699 = vld [vmem:[%s5 + $0x5c] sm:$0xf]
    %v700 = vld [vmem:[%s5 + $0x60] sm:$0xff]
    %v701 = vld [vmem:[%s5 + $0x68] sm:$0xf]
    %v702 = vld [vmem:[%s5 + $0x6c] sm:$0xff]
    %v703 = vld [vmem:[%s5 + $0x74] sm:$0xf]
    %v704 = vld [vmem:[%s5 + $0x78] sm:$0xff]
    %v705 = vld [vmem:[%s5 + $0x80] sm:$0xf]
    %v706 = vld [vmem:[%s5 + $0x84] sm:$0xff]
    %v707 = vld [vmem:[%s5 + $0x8c] sm:$0xf]
    %v708 = vld [vmem:[%s5 + $0x90] sm:$0xff]
    %v709 = vld [vmem:[%s5 + $0x98] sm:$0xf]
    %v710 = vld [vmem:[%s5 + $0x9c] sm:$0xff]
    %v711 = vld [vmem:[%s5 + $0xa4] sm:$0xf]
    %v712 = vld [vmem:[%s5 + $0xa8] sm:$0xff]
    %v713 = vld [vmem:[%s5 + $0xb0] sm:$0xf]
    %v714 = vld [vmem:[%s5 + $0xb4] sm:$0xff]
    %v715 = vld [vmem:[%s5 + $0xbc] sm:$0xf]
    %v748 = vunpack.c.l.b16 %v684
    %v749 = vunpack.c.h.b16 %v684
    %v750 = vunpack.c.l.b16 %v685
    %v751 = vunpack.c.l.b16 %v686
    %v752 = vunpack.c.h.b16 %v686
    %v753 = vunpack.c.l.b16 %v687
    %v754 = vunpack.c.l.b16 %v688
    %v755 = vunpack.c.h.b16 %v688
    %v756 = vunpack.c.l.b16 %v689
    %v757 = vunpack.c.l.b16 %v690
    %v758 = vunpack.c.h.b16 %v690
    %v759 = vunpack.c.l.b16 %v691
    %v760 = vunpack.c.l.b16 %v692
    %v761 = vunpack.c.h.b16 %v692
    %v762 = vunpack.c.l.b16 %v693
    %v763 = vunpack.c.l.b16 %v694
    %v764 = vunpack.c.h.b16 %v694
    %v765 = vunpack.c.l.b16 %v695
    %v766 = vunpack.c.l.b16 %v696
    %v767 = vunpack.c.h.b16 %v696
    %v768 = vunpack.c.l.b16 %v697
    %v769 = vunpack.c.l.b16 %v698
    %v770 = vunpack.c.h.b16 %v698
    %v771 = vunpack.c.l.b16 %v699
    %v772 = vunpack.c.l.b16 %v700
    %v773 = vunpack.c.h.b16 %v700
    %v774 = vunpack.c.l.b16 %v701
    %v775 = vunpack.c.l.b16 %v702
    %v776 = vunpack.c.h.b16 %v702
    %v777 = vunpack.c.l.b16 %v703
    %v778 = vunpack.c.l.b16 %v704
    %v779 = vunpack.c.h.b16 %v704
    %v780 = vunpack.c.l.b16 %v705
    %v781 = vunpack.c.l.b16 %v706
    %v782 = vunpack.c.h.b16 %v706
    %v783 = vunpack.c.l.b16 %v707
    %v784 = vunpack.c.l.b16 %v708
    %v785 = vunpack.c.h.b16 %v708
    %v786 = vunpack.c.l.b16 %v709
    %v787 = vunpack.c.l.b16 %v710
    %v788 = vunpack.c.h.b16 %v710
    %v789 = vunpack.c.l.b16 %v711
    %v790 = vunpack.c.l.b16 %v712
    %v791 = vunpack.c.h.b16 %v712
    %v792 = vunpack.c.l.b16 %v713
    %v793 = vunpack.c.l.b16 %v714
    %v794 = vunpack.c.h.b16 %v714
    %v795 = vunpack.c.l.b16 %v715
    %v796 = vpack.c.b16 %v751, %v748
    %v797 = vpack.c.b16 %v752, %v749
    %v798 = vpack.c.b16 %v753, %v750
    %v799 = vpack.c.b16 %v757, %v754
    %v800 = vpack.c.b16 %v758, %v755
    %v801 = vpack.c.b16 %v759, %v756
    %v802 = vpack.c.b16 %v763, %v760
    %v803 = vpack.c.b16 %v764, %v761
    %v804 = vpack.c.b16 %v765, %v762
    %v805 = vpack.c.b16 %v769, %v766
    %v806 = vpack.c.b16 %v770, %v767
    %v807 = vpack.c.b16 %v771, %v768
    %v808 = vpack.c.b16 %v775, %v772
    %v809 = vpack.c.b16 %v776, %v773
    %v810 = vpack.c.b16 %v777, %v774
    %v811 = vpack.c.b16 %v781, %v778
    %v812 = vpack.c.b16 %v782, %v779
    %v813 = vpack.c.b16 %v783, %v780
    %v814 = vpack.c.b16 %v787, %v784
    %v815 = vpack.c.b16 %v788, %v785
    %v816 = vpack.c.b16 %v789, %v786
    %v817 = vpack.c.b16 %v793, %v790
    %v818 = vpack.c.b16 %v794, %v791
    %v819 = vpack.c.b16 %v795, %v792
    %844 = vmatpush.bf16.msra.mxu0 %v817
    %845 = vmatpush.bf16.msra.mxu0 %v814
    %846 = vmatpush.bf16.msra.mxu0 %v811
    %847 = vmatpush.bf16.msra.mxu0 %v808
    %848 = vmatpush.bf16.msra.mxu0 %v805
    %849 = vmatpush.bf16.msra.mxu0 %v802
    %850 = vmatpush.bf16.msra.mxu0 %v799
    %851 = vmatpush.bf16.msra.mxu0 %v796
    %852 = vmatmul.bf16.gmra.mxu0 0
    %v853 = vpop.f32.mrf.mxu0
    %v854 = vadd.f32 0.0, %v853
    %v855 = vpop.f32.mrf.mxu0
    %856 = vdwg.mxu0
    %857 = vmatpush.bf16.msra.mxu0 %v818
    %858 = vmatpush.bf16.msra.mxu0 %v815
    %859 = vmatpush.bf16.msra.mxu0 %v812
    %860 = vmatpush.bf16.msra.mxu0 %v809
    %861 = vmatpush.bf16.msra.mxu0 %v806
    %862 = vmatpush.bf16.msra.mxu0 %v803
    %863 = vmatpush.bf16.msra.mxu0 %v800
    %864 = vmatpush.bf16.msra.mxu0 %v797
    %865 = vmatmul.bf16.gmra.mxu0 0
    %v866 = vpop.f32.mrf.mxu0
    %v867 = vadd.f32 0.0, %v866
    %v868 = vpop.f32.mrf.mxu0
    %869 = vdwg.mxu0
    %870 = vmatpush.bf16.msra.mxu0 %v819
    %871 = vmatpush.bf16.msra.mxu0 %v816
    %872 = vmatpush.bf16.msra.mxu0 %v813
    %873 = vmatpush.bf16.msra.mxu0 %v810
    %874 = vmatpush.bf16.msra.mxu0 %v807
    %875 = vmatpush.bf16.msra.mxu0 %v804
    %876 = vmatpush.bf16.msra.mxu0 %v801
    %877 = vmatpush.bf16.msra.mxu0 %v798
    %878 = vmatmul.bf16.gmra.mxu0 0
    %v879 = vpop.f32.mrf.mxu0
    %v880 = vadd.f32 0.0, %v879
    %v881 = vpop.f32.mrf.mxu0
    %882 = vdwg.mxu0
    %v883 = vld [vmem:[#allocation2] sm:$0xff]
    %v884 = vld [vmem:[#allocation2 + $0x8] sm:$0xff]
    %v885 = vld [vmem:[#allocation2 + $0x10] sm:$0xff]
    %v886 = vadd.f32 %v883, %v854
    %v887 = vxor.u32 %v886, 2147483648
    %v888 = vmul.f32 %v887, 1.442695
    %v889 = vpow.pop %v888
    %v890 = vadd.f32 %v889, 1.0
    %v891 = vrcp.pop %v890
    %v892 = vmul.f32 %v890, %v891
    %v893 = vsub.f32 1.0, %v892
    %v894 = vmul.f32 %v891, %v893
    %v895 = vadd.f32 %v891, %v894
    %vm896 = vweird.f32 %v890
    %vm897 = vweird.f32 %v891
    %vm898 = vmor %vm896, %vm897
    %v899 = vsel %vm898, %v891, %v895
    %v900 = vand.u32 2147483647, %v890
    %vm901 = vcmp.eq.f32.partialorder %v900, 8.507059e+37
    %v902 = vand.u32 %v890, 2147483648
    %v903 = vor.u32 1.1754944e-38, %v902
    %v904 = vsel %vm901, %v903, %v899
    %v905 = vmul.f32 1.0, %v904
    %v906 = vadd.f32 %v884, %v867
    %v907 = vxor.u32 %v906, 2147483648
    %v908 = vmul.f32 %v907, 1.442695
    %v909 = vpow.pop %v908
    %v910 = vadd.f32 %v909, 1.0
    %v911 = vrcp.pop %v910
    %v912 = vmul.f32 %v910, %v911
    %v913 = vsub.f32 1.0, %v912
    %v914 = vmul.f32 %v911, %v913
    %v915 = vadd.f32 %v911, %v914
    %vm916 = vweird.f32 %v910
    %vm917 = vweird.f32 %v911
    %vm918 = vmor %vm916, %vm917
    %v919 = vsel %vm918, %v911, %v915
    %v920 = vand.u32 2147483647, %v910
    %vm921 = vcmp.eq.f32.partialorder %v920, 8.507059e+37
    %v922 = vand.u32 %v910, 2147483648
    %v923 = vor.u32 1.1754944e-38, %v922
    %v924 = vsel %vm921, %v923, %v919
    %v925 = vmul.f32 1.0, %v924
    %v926 = vadd.f32 %v880, %v682
    %v927 = vmul.f32 %v905, %v926
    %v928 = vadd.f32 %v885, %v927
    %v929 = vtanh.pop %v928
    %v930 = vsub.f32 1.0, %v925
    %v931 = vmul.f32 %v930, %v929
    %v932 = vmul.f32 %v925, 0.0
    %v933 = vadd.f32 %v931, %v932
    %v934 = vpack.c.bf16 %v933, %v933
    %935 = vmatpush.bf16.msra.mxu0 %v817
    %936 = vmatpush.bf16.msra.mxu0 %v814
    %937 = vmatpush.bf16.msra.mxu0 %v811
    %938 = vmatpush.bf16.msra.mxu0 %v808
    %939 = vmatpush.bf16.msra.mxu0 %v805
    %940 = vmatpush.bf16.msra.mxu0 %v802
    %941 = vmatpush.bf16.msra.mxu0 %v799
    %942 = vmatpush.bf16.msra.mxu0 %v796
    %943 = vmatmul.bf16.gmra.mxu0 %v934
    %v944 = vpop.f32.mrf.mxu0
    %v945 = vadd.f32 0.0, %v944
    %v946 = vpop.f32.mrf.mxu0
    %947 = vdwg.mxu0
    %948 = vmatpush.bf16.msra.mxu0 %v818
    %949 = vmatpush.bf16.msra.mxu0 %v815
    %950 = vmatpush.bf16.msra.mxu0 %v812
    %951 = vmatpush.bf16.msra.mxu0 %v809
    %952 = vmatpush.bf16.msra.mxu0 %v806
    %953 = vmatpush.bf16.msra.mxu0 %v803
    %954 = vmatpush.bf16.msra.mxu0 %v800
    %955 = vmatpush.bf16.msra.mxu0 %v797
    %956 = vmatmul.bf16.gmra.mxu0 %v934
    %v957 = vpop.f32.mrf.mxu0
    %v958 = vadd.f32 0.0, %v957
    %v959 = vpop.f32.mrf.mxu0
    %960 = vdwg.mxu0
    %961 = vmatpush.bf16.msra.mxu0 %v819
    %962 = vmatpush.bf16.msra.mxu0 %v816
    %963 = vmatpush.bf16.msra.mxu0 %v813
    %964 = vmatpush.bf16.msra.mxu0 %v810
    %965 = vmatpush.bf16.msra.mxu0 %v807
    %966 = vmatpush.bf16.msra.mxu0 %v804
    %967 = vmatpush.bf16.msra.mxu0 %v801
    %968 = vmatpush.bf16.msra.mxu0 %v798
    %969 = vmatmul.bf16.gmra.mxu0 %v934
    %v970 = vpop.f32.mrf.mxu0
    %v971 = vadd.f32 0.0, %v970
    %v972 = vpop.f32.mrf.mxu0
    %973 = vdwg.mxu0
    %s974 = scalar_lea.vmem [#allocation2], 24
    %v975 = vld [vmem:[%s974] sm:$0xff]
    %v976 = vld [vmem:[%s974 + $0x8] sm:$0xff]
    %v977 = vld [vmem:[%s974 + $0x10] sm:$0xff]
    %v978 = vadd.f32 %v975, %v945
    %v979 = vxor.u32 %v978, 2147483648
    %v980 = vmul.f32 %v979, 1.442695
    %v981 = vpow.pop %v980
    %v982 = vadd.f32 %v981, 1.0
    %v983 = vrcp.pop %v982
    %v984 = vmul.f32 %v982, %v983
    %v985 = vsub.f32 1.0, %v984
    %v986 = vmul.f32 %v983, %v985
    %v987 = vadd.f32 %v983, %v986
    %vm988 = vweird.f32 %v982
    %vm989 = vweird.f32 %v983
    %vm990 = vmor %vm988, %vm989
    %v991 = vsel %vm990, %v983, %v987
    %v992 = vand.u32 2147483647, %v982
    %vm993 = vcmp.eq.f32.partialorder %v992, 8.507059e+37
    %v994 = vand.u32 %v982, 2147483648
    %v995 = vor.u32 1.1754944e-38, %v994
    %v996 = vsel %vm993, %v995, %v991
    %v997 = vmul.f32 1.0, %v996
    %v998 = vadd.f32 %v976, %v958
    %v999 = vxor.u32 %v998, 2147483648
    %v1000 = vmul.f32 %v999, 1.442695
    %v1001 = vpow.pop %v1000
    %v1002 = vadd.f32 %v1001, 1.0
    %v1003 = vrcp.pop %v1002
    %v1004 = vmul.f32 %v1002, %v1003
    %v1005 = vsub.f32 1.0, %v1004
    %v1006 = vmul.f32 %v1003, %v1005
    %v1007 = vadd.f32 %v1003, %v1006
    %vm1008 = vweird.f32 %v1002
    %vm1009 = vweird.f32 %v1003
    %vm1010 = vmor %vm1008, %vm1009
    %v1011 = vsel %vm1010, %v1003, %v1007
    %v1012 = vand.u32 2147483647, %v1002
    %vm1013 = vcmp.eq.f32.partialorder %v1012, 8.507059e+37
    %v1014 = vand.u32 %v1002, 2147483648
    %v1015 = vor.u32 1.1754944e-38, %v1014
    %v1016 = vsel %vm1013, %v1015, %v1011
    %v1017 = vmul.f32 1.0, %v1016
    %v1018 = vadd.f32 %v971, %v682
    %v1019 = vmul.f32 %v997, %v1018
    %v1020 = vadd.f32 %v977, %v1019
    %v1021 = vtanh.pop %v1020
    %v1022 = vsub.f32 1.0, %v1017
    %v1023 = vmul.f32 %v1022, %v1021
    %v1024 = vmul.f32 %v1017, %v933
    %v1025 = vadd.f32 %v1023, %v1024
    %v1026 = vpack.c.bf16 %v1025, %v1025
    %1027 = vmatpush.bf16.msra.mxu0 %v817
    %1028 = vmatpush.bf16.msra.mxu0 %v814
    %1029 = vmatpush.bf16.msra.mxu0 %v811
    %1030 = vmatpush.bf16.msra.mxu0 %v808
    %1031 = vmatpush.bf16.msra.mxu0 %v805
    %1032 = vmatpush.bf16.msra.mxu0 %v802
    %1033 = vmatpush.bf16.msra.mxu0 %v799
    %1034 = vmatpush.bf16.msra.mxu0 %v796
    %1035 = vmatmul.bf16.gmra.mxu0 %v1026
    %v1036 = vpop.f32.mrf.mxu0
    %v1037 = vadd.f32 0.0, %v1036
    %v1038 = vpop.f32.mrf.mxu0
    %1039 = vdwg.mxu0
    %1040 = vmatpush.bf16.msra.mxu0 %v818
    %1041 = vmatpush.bf16.msra.mxu0 %v815
    %1042 = vmatpush.bf16.msra.mxu0 %v812
    %1043 = vmatpush.bf16.msra.mxu0 %v809
    %1044 = vmatpush.bf16.msra.mxu0 %v806
    %1045 = vmatpush.bf16.msra.mxu0 %v803
    %1046 = vmatpush.bf16.msra.mxu0 %v800
    %1047 = vmatpush.bf16.msra.mxu0 %v797
    %1048 = vmatmul.bf16.gmra.mxu0 %v1026
    %v1049 = vpop.f32.mrf.mxu0
    %v1050 = vadd.f32 0.0, %v1049
    %v1051 = vpop.f32.mrf.mxu0
    %1052 = vdwg.mxu0
    %1053 = vmatpush.bf16.msra.mxu0 %v819
    %1054 = vmatpush.bf16.msra.mxu0 %v816
    %1055 = vmatpush.bf16.msra.mxu0 %v813
    %1056 = vmatpush.bf16.msra.mxu0 %v810
    %1057 = vmatpush.bf16.msra.mxu0 %v807
    %1058 = vmatpush.bf16.msra.mxu0 %v804
    %1059 = vmatpush.bf16.msra.mxu0 %v801
    %1060 = vmatpush.bf16.msra.mxu0 %v798
    %1061 = vmatmul.bf16.gmra.mxu0 %v1026
    %v1062 = vpop.f32.mrf.mxu0
    %v1063 = vadd.f32 0.0, %v1062
    %v1064 = vpop.f32.mrf.mxu0
    %1065 = vdwg.mxu0
    %s1066 = scalar_lea.vmem [#allocation2], 48
    %v1067 = vld [vmem:[%s1066] sm:$0xff]
    %v1068 = vld [vmem:[%s1066 + $0x8] sm:$0xff]
    %v1069 = vld [vmem:[%s1066 + $0x10] sm:$0xff]
    %v1070 = vadd.f32 %v1067, %v1037
    %v1071 = vxor.u32 %v1070, 2147483648
    %v1072 = vmul.f32 %v1071, 1.442695
    %v1073 = vpow.pop %v1072
    %v1074 = vadd.f32 %v1073, 1.0
    %v1075 = vrcp.pop %v1074
    %v1076 = vmul.f32 %v1074, %v1075
    %v1077 = vsub.f32 1.0, %v1076
    %v1078 = vmul.f32 %v1075, %v1077
    %v1079 = vadd.f32 %v1075, %v1078
    %vm1080 = vweird.f32 %v1074
    %vm1081 = vweird.f32 %v1075
    %vm1082 = vmor %vm1080, %vm1081
    %v1083 = vsel %vm1082, %v1075, %v1079
    %v1084 = vand.u32 2147483647, %v1074
    %vm1085 = vcmp.eq.f32.partialorder %v1084, 8.507059e+37
    %v1086 = vand.u32 %v1074, 2147483648
    %v1087 = vor.u32 1.1754944e-38, %v1086
    %v1088 = vsel %vm1085, %v1087, %v1083
    %v1089 = vmul.f32 1.0, %v1088
    %v1090 = vadd.f32 %v1068, %v1050
    %v1091 = vxor.u32 %v1090, 2147483648
    %v1092 = vmul.f32 %v1091, 1.442695
    %v1093 = vpow.pop %v1092
    %v1094 = vadd.f32 %v1093, 1.0
    %v1095 = vrcp.pop %v1094
    %v1096 = vmul.f32 %v1094, %v1095
    %v1097 = vsub.f32 1.0, %v1096
    %v1098 = vmul.f32 %v1095, %v1097
    %v1099 = vadd.f32 %v1095, %v1098
    %vm1100 = vweird.f32 %v1094
    %vm1101 = vweird.f32 %v1095
    %vm1102 = vmor %vm1100, %vm1101
    %v1103 = vsel %vm1102, %v1095, %v1099
    %v1104 = vand.u32 2147483647, %v1094
    %vm1105 = vcmp.eq.f32.partialorder %v1104, 8.507059e+37
    %v1106 = vand.u32 %v1094, 2147483648
    %v1107 = vor.u32 1.1754944e-38, %v1106
    %v1108 = vsel %vm1105, %v1107, %v1103
    %v1109 = vmul.f32 1.0, %v1108
    %v1110 = vadd.f32 %v1063, %v682
    %v1111 = vmul.f32 %v1089, %v1110
    %v1112 = vadd.f32 %v1069, %v1111
    %v1113 = vtanh.pop %v1112
    %v1114 = vsub.f32 1.0, %v1109
    %v1115 = vmul.f32 %v1114, %v1113
    %v1116 = vmul.f32 %v1109, %v1025
    %v1117 = vadd.f32 %v1115, %v1116
    %v1118 = vpack.c.bf16 %v1117, %v1117
    %1119 = vmatpush.bf16.msra.mxu0 %v817
    %1120 = vmatpush.bf16.msra.mxu0 %v814
    %1121 = vmatpush.bf16.msra.mxu0 %v811
    %1122 = vmatpush.bf16.msra.mxu0 %v808
    %1123 = vmatpush.bf16.msra.mxu0 %v805
    %1124 = vmatpush.bf16.msra.mxu0 %v802
    %1125 = vmatpush.bf16.msra.mxu0 %v799
    %1126 = vmatpush.bf16.msra.mxu0 %v796
    %1127 = vmatmul.bf16.gmra.mxu0 %v1118
    %v1128 = vpop.f32.mrf.mxu0
    %v1129 = vadd.f32 0.0, %v1128
    %v1130 = vpop.f32.mrf.mxu0
    %1131 = vdwg.mxu0
    %1132 = vmatpush.bf16.msra.mxu0 %v818
    %1133 = vmatpush.bf16.msra.mxu0 %v815
    %1134 = vmatpush.bf16.msra.mxu0 %v812
    %1135 = vmatpush.bf16.msra.mxu0 %v809
    %1136 = vmatpush.bf16.msra.mxu0 %v806
    %1137 = vmatpush.bf16.msra.mxu0 %v803
    %1138 = vmatpush.bf16.msra.mxu0 %v800
    %1139 = vmatpush.bf16.msra.mxu0 %v797
    %1140 = vmatmul.bf16.gmra.mxu0 %v1118
    %v1141 = vpop.f32.mrf.mxu0
    %v1142 = vadd.f32 0.0, %v1141
    %v1143 = vpop.f32.mrf.mxu0
    %1144 = vdwg.mxu0
    %1145 = vmatpush.bf16.msra.mxu0 %v819
    %1146 = vmatpush.bf16.msra.mxu0 %v816
    %1147 = vmatpush.bf16.msra.mxu0 %v813
    %1148 = vmatpush.bf16.msra.mxu0 %v810
    %1149 = vmatpush.bf16.msra.mxu0 %v807
    %1150 = vmatpush.bf16.msra.mxu0 %v804
    %1151 = vmatpush.bf16.msra.mxu0 %v801
    %1152 = vmatpush.bf16.msra.mxu0 %v798
    %1153 = vmatmul.bf16.gmra.mxu0 %v1118
    %v1154 = vpop.f32.mrf.mxu0
    %v1155 = vadd.f32 0.0, %v1154
    %v1156 = vpop.f32.mrf.mxu0
    %1157 = vdwg.mxu0
    %s1158 = scalar_lea.vmem [#allocation2], 72
    %v1159 = vld [vmem:[%s1158] sm:$0xff]
    %v1160 = vld [vmem:[%s1158 + $0x8] sm:$0xff]
    %v1161 = vld [vmem:[%s1158 + $0x10] sm:$0xff]
    %v1162 = vadd.f32 %v1159, %v1129
    %v1163 = vxor.u32 %v1162, 2147483648
    %v1164 = vmul.f32 %v1163, 1.442695
    %v1165 = vpow.pop %v1164
    %v1166 = vadd.f32 %v1165, 1.0
    %v1167 = vrcp.pop %v1166
    %v1168 = vmul.f32 %v1166, %v1167
    %v1169 = vsub.f32 1.0, %v1168
    %v1170 = vmul.f32 %v1167, %v1169
    %v1171 = vadd.f32 %v1167, %v1170
    %vm1172 = vweird.f32 %v1166
    %vm1173 = vweird.f32 %v1167
    %vm1174 = vmor %vm1172, %vm1173
    %v1175 = vsel %vm1174, %v1167, %v1171
    %v1176 = vand.u32 2147483647, %v1166
    %vm1177 = vcmp.eq.f32.partialorder %v1176, 8.507059e+37
    %v1178 = vand.u32 %v1166, 2147483648
    %v1179 = vor.u32 1.1754944e-38, %v1178
    %v1180 = vsel %vm1177, %v1179, %v1175
    %v1181 = vmul.f32 1.0, %v1180
    %v1182 = vadd.f32 %v1160, %v1142
    %v1183 = vxor.u32 %v1182, 2147483648
    %v1184 = vmul.f32 %v1183, 1.442695
    %v1185 = vpow.pop %v1184
    %v1186 = vadd.f32 %v1185, 1.0
    %v1187 = vrcp.pop %v1186
    %v1188 = vmul.f32 %v1186, %v1187
    %v1189 = vsub.f32 1.0, %v1188
    %v1190 = vmul.f32 %v1187, %v1189
    %v1191 = vadd.f32 %v1187, %v1190
    %vm1192 = vweird.f32 %v1186
    %vm1193 = vweird.f32 %v1187
    %vm1194 = vmor %vm1192, %vm1193
    %v1195 = vsel %vm1194, %v1187, %v1191
    %v1196 = vand.u32 2147483647, %v1186
    %vm1197 = vcmp.eq.f32.partialorder %v1196, 8.507059e+37
    %v1198 = vand.u32 %v1186, 2147483648
    %v1199 = vor.u32 1.1754944e-38, %v1198
    %v1200 = vsel %vm1197, %v1199, %v1195
    %v1201 = vmul.f32 1.0, %v1200
    %v1202 = vadd.f32 %v1155, %v682
    %v1203 = vmul.f32 %v1181, %v1202
    %v1204 = vadd.f32 %v1161, %v1203
    %v1205 = vtanh.pop %v1204
    %v1206 = vsub.f32 1.0, %v1201
    %v1207 = vmul.f32 %v1206, %v1205
    %v1208 = vmul.f32 %v1201, %v1117
    %v1209 = vadd.f32 %v1207, %v1208
    %v1210 = vpack.c.bf16 %v1209, %v1209
    %1211 = vmatpush.bf16.msra.mxu0 %v817
    %1212 = vmatpush.bf16.msra.mxu0 %v814
    %1213 = vmatpush.bf16.msra.mxu0 %v811
    %1214 = vmatpush.bf16.msra.mxu0 %v808
    %1215 = vmatpush.bf16.msra.mxu0 %v805
    %1216 = vmatpush.bf16.msra.mxu0 %v802
    %1217 = vmatpush.bf16.msra.mxu0 %v799
    %1218 = vmatpush.bf16.msra.mxu0 %v796
    %1219 = vmatmul.bf16.gmra.mxu0 %v1210
    %v1220 = vpop.f32.mrf.mxu0
    %v1221 = vadd.f32 0.0, %v1220
    %v1222 = vpop.f32.mrf.mxu0
    %1223 = vdwg.mxu0
    %1224 = vmatpush.bf16.msra.mxu0 %v818
    %1225 = vmatpush.bf16.msra.mxu0 %v815
    %1226 = vmatpush.bf16.msra.mxu0 %v812
    %1227 = vmatpush.bf16.msra.mxu0 %v809
    %1228 = vmatpush.bf16.msra.mxu0 %v806
    %1229 = vmatpush.bf16.msra.mxu0 %v803
    %1230 = vmatpush.bf16.msra.mxu0 %v800
    %1231 = vmatpush.bf16.msra.mxu0 %v797
    %1232 = vmatmul.bf16.gmra.mxu0 %v1210
    %v1233 = vpop.f32.mrf.mxu0
    %v1234 = vadd.f32 0.0, %v1233
    %v1235 = vpop.f32.mrf.mxu0
    %1236 = vdwg.mxu0
    %1237 = vmatpush.bf16.msra.mxu0 %v819
    %1238 = vmatpush.bf16.msra.mxu0 %v816
    %1239 = vmatpush.bf16.msra.mxu0 %v813
    %1240 = vmatpush.bf16.msra.mxu0 %v810
    %1241 = vmatpush.bf16.msra.mxu0 %v807
    %1242 = vmatpush.bf16.msra.mxu0 %v804
    %1243 = vmatpush.bf16.msra.mxu0 %v801
    %1244 = vmatpush.bf16.msra.mxu0 %v798
    %1245 = vmatmul.bf16.gmra.mxu0 %v1210
    %v1246 = vpop.f32.mrf.mxu0
    %v1247 = vadd.f32 0.0, %v1246
    %v1248 = vpop.f32.mrf.mxu0
    %1249 = vdwg.mxu0
    %s1250 = scalar_lea.vmem [#allocation2], 96
    %v1251 = vld [vmem:[%s1250] sm:$0xff]
    %v1252 = vld [vmem:[%s1250 + $0x8] sm:$0xff]
    %v1253 = vld [vmem:[%s1250 + $0x10] sm:$0xff]
    %v1254 = vadd.f32 %v1251, %v1221
    %v1255 = vxor.u32 %v1254, 2147483648
    %v1256 = vmul.f32 %v1255, 1.442695
    %v1257 = vpow.pop %v1256
    %v1258 = vadd.f32 %v1257, 1.0
    %v1259 = vrcp.pop %v1258
    %v1260 = vmul.f32 %v1258, %v1259
    %v1261 = vsub.f32 1.0, %v1260
    %v1262 = vmul.f32 %v1259, %v1261
    %v1263 = vadd.f32 %v1259, %v1262
    %vm1264 = vweird.f32 %v1258
    %vm1265 = vweird.f32 %v1259
    %vm1266 = vmor %vm1264, %vm1265
    %v1267 = vsel %vm1266, %v1259, %v1263
    %v1268 = vand.u32 2147483647, %v1258
    %vm1269 = vcmp.eq.f32.partialorder %v1268, 8.507059e+37
    %v1270 = vand.u32 %v1258, 2147483648
    %v1271 = vor.u32 1.1754944e-38, %v1270
    %v1272 = vsel %vm1269, %v1271, %v1267
    %v1273 = vmul.f32 1.0, %v1272
    %v1274 = vadd.f32 %v1252, %v1234
    %v1275 = vxor.u32 %v1274, 2147483648
    %v1276 = vmul.f32 %v1275, 1.442695
    %v1277 = vpow.pop %v1276
    %v1278 = vadd.f32 %v1277, 1.0
    %v1279 = vrcp.pop %v1278
    %v1280 = vmul.f32 %v1278, %v1279
    %v1281 = vsub.f32 1.0, %v1280
    %v1282 = vmul.f32 %v1279, %v1281
    %v1283 = vadd.f32 %v1279, %v1282
    %vm1284 = vweird.f32 %v1278
    %vm1285 = vweird.f32 %v1279
    %vm1286 = vmor %vm1284, %vm1285
    %v1287 = vsel %vm1286, %v1279, %v1283
    %v1288 = vand.u32 2147483647, %v1278
    %vm1289 = vcmp.eq.f32.partialorder %v1288, 8.507059e+37
    %v1290 = vand.u32 %v1278, 2147483648
    %v1291 = vor.u32 1.1754944e-38, %v1290
    %v1292 = vsel %vm1289, %v1291, %v1287
    %v1293 = vmul.f32 1.0, %v1292
    %v1294 = vadd.f32 %v1247, %v682
    %v1295 = vmul.f32 %v1273, %v1294
    %v1296 = vadd.f32 %v1253, %v1295
    %v1297 = vtanh.pop %v1296
    %v1298 = vsub.f32 1.0, %v1293
    %v1299 = vmul.f32 %v1298, %v1297
    %v1300 = vmul.f32 %v1293, %v1209
    %v1301 = vadd.f32 %v1299, %v1300
    %v1302 = vpack.c.bf16 %v1301, %v1301
    %1303 = vmatpush.bf16.msra.mxu0 %v817
    %1304 = vmatpush.bf16.msra.mxu0 %v814
    %1305 = vmatpush.bf16.msra.mxu0 %v811
    %1306 = vmatpush.bf16.msra.mxu0 %v808
    %1307 = vmatpush.bf16.msra.mxu0 %v805
    %1308 = vmatpush.bf16.msra.mxu0 %v802
    %1309 = vmatpush.bf16.msra.mxu0 %v799
    %1310 = vmatpush.bf16.msra.mxu0 %v796
    %1311 = vmatmul.bf16.gmra.mxu0 %v1302
    %v1312 = vpop.f32.mrf.mxu0
    %v1313 = vadd.f32 0.0, %v1312
    %v1314 = vpop.f32.mrf.mxu0
    %1315 = vdwg.mxu0
    %1316 = vmatpush.bf16.msra.mxu0 %v818
    %1317 = vmatpush.bf16.msra.mxu0 %v815
    %1318 = vmatpush.bf16.msra.mxu0 %v812
    %1319 = vmatpush.bf16.msra.mxu0 %v809
    %1320 = vmatpush.bf16.msra.mxu0 %v806
    %1321 = vmatpush.bf16.msra.mxu0 %v803
    %1322 = vmatpush.bf16.msra.mxu0 %v800
    %1323 = vmatpush.bf16.msra.mxu0 %v797
    %1324 = vmatmul.bf16.gmra.mxu0 %v1302
    %v1325 = vpop.f32.mrf.mxu0
    %v1326 = vadd.f32 0.0, %v1325
    %v1327 = vpop.f32.mrf.mxu0
    %1328 = vdwg.mxu0
    %1329 = vmatpush.bf16.msra.mxu0 %v819
    %1330 = vmatpush.bf16.msra.mxu0 %v816
    %1331 = vmatpush.bf16.msra.mxu0 %v813
    %1332 = vmatpush.bf16.msra.mxu0 %v810
    %1333 = vmatpush.bf16.msra.mxu0 %v807
    %1334 = vmatpush.bf16.msra.mxu0 %v804
    %1335 = vmatpush.bf16.msra.mxu0 %v801
    %1336 = vmatpush.bf16.msra.mxu0 %v798
    %1337 = vmatmul.bf16.gmra.mxu0 %v1302
    %v1338 = vpop.f32.mrf.mxu0
    %v1339 = vadd.f32 0.0, %v1338
    %v1340 = vpop.f32.mrf.mxu0
    %1341 = vdwg.mxu0
    %s1342 = scalar_lea.vmem [#allocation2], 120
    %v1343 = vld [vmem:[%s1342] sm:$0xff]
    %v1344 = vld [vmem:[%s1342 + $0x8] sm:$0xff]
    %v1345 = vld [vmem:[%s1342 + $0x10] sm:$0xff]
    %v1346 = vadd.f32 %v1343, %v1313
    %v1347 = vxor.u32 %v1346, 2147483648
    %v1348 = vmul.f32 %v1347, 1.442695
    %v1349 = vpow.pop %v1348
    %v1350 = vadd.f32 %v1349, 1.0
    %v1351 = vrcp.pop %v1350
    %v1352 = vmul.f32 %v1350, %v1351
    %v1353 = vsub.f32 1.0, %v1352
    %v1354 = vmul.f32 %v1351, %v1353
    %v1355 = vadd.f32 %v1351, %v1354
    %vm1356 = vweird.f32 %v1350
    %vm1357 = vweird.f32 %v1351
    %vm1358 = vmor %vm1356, %vm1357
    %v1359 = vsel %vm1358, %v1351, %v1355
    %v1360 = vand.u32 2147483647, %v1350
    %vm1361 = vcmp.eq.f32.partialorder %v1360, 8.507059e+37
    %v1362 = vand.u32 %v1350, 2147483648
    %v1363 = vor.u32 1.1754944e-38, %v1362
    %v1364 = vsel %vm1361, %v1363, %v1359
    %v1365 = vmul.f32 1.0, %v1364
    %v1366 = vadd.f32 %v1344, %v1326
    %v1367 = vxor.u32 %v1366, 2147483648
    %v1368 = vmul.f32 %v1367, 1.442695
    %v1369 = vpow.pop %v1368
    %v1370 = vadd.f32 %v1369, 1.0
    %v1371 = vrcp.pop %v1370
    %v1372 = vmul.f32 %v1370, %v1371
    %v1373 = vsub.f32 1.0, %v1372
    %v1374 = vmul.f32 %v1371, %v1373
    %v1375 = vadd.f32 %v1371, %v1374
    %vm1376 = vweird.f32 %v1370
    %vm1377 = vweird.f32 %v1371
    %vm1378 = vmor %vm1376, %vm1377
    %v1379 = vsel %vm1378, %v1371, %v1375
    %v1380 = vand.u32 2147483647, %v1370
    %vm1381 = vcmp.eq.f32.partialorder %v1380, 8.507059e+37
    %v1382 = vand.u32 %v1370, 2147483648
    %v1383 = vor.u32 1.1754944e-38, %v1382
    %v1384 = vsel %vm1381, %v1383, %v1379
    %v1385 = vmul.f32 1.0, %v1384
    %v1386 = vadd.f32 %v1339, %v682
    %v1387 = vmul.f32 %v1365, %v1386
    %v1388 = vadd.f32 %v1345, %v1387
    %v1389 = vtanh.pop %v1388
    %v1390 = vsub.f32 1.0, %v1385
    %v1391 = vmul.f32 %v1390, %v1389
    %v1392 = vmul.f32 %v1385, %v1301
    %v1393 = vadd.f32 %v1391, %v1392
    %v1394 = vpack.c.bf16 %v1393, %v1393
    %1395 = vmatpush.bf16.msra.mxu0 %v817
    %1396 = vmatpush.bf16.msra.mxu0 %v814
    %1397 = vmatpush.bf16.msra.mxu0 %v811
    %1398 = vmatpush.bf16.msra.mxu0 %v808
    %1399 = vmatpush.bf16.msra.mxu0 %v805
    %1400 = vmatpush.bf16.msra.mxu0 %v802
    %1401 = vmatpush.bf16.msra.mxu0 %v799
    %1402 = vmatpush.bf16.msra.mxu0 %v796
    %1403 = vmatmul.bf16.gmra.mxu0 %v1394
    %v1404 = vpop.f32.mrf.mxu0
    %v1405 = vadd.f32 0.0, %v1404
    %v1406 = vpop.f32.mrf.mxu0
    %1407 = vdwg.mxu0
    %1408 = vmatpush.bf16.msra.mxu0 %v818
    %1409 = vmatpush.bf16.msra.mxu0 %v815
    %1410 = vmatpush.bf16.msra.mxu0 %v812
    %1411 = vmatpush.bf16.msra.mxu0 %v809
    %1412 = vmatpush.bf16.msra.mxu0 %v806
    %1413 = vmatpush.bf16.msra.mxu0 %v803
    %1414 = vmatpush.bf16.msra.mxu0 %v800
    %1415 = vmatpush.bf16.msra.mxu0 %v797
    %1416 = vmatmul.bf16.gmra.mxu0 %v1394
    %v1417 = vpop.f32.mrf.mxu0
    %v1418 = vadd.f32 0.0, %v1417
    %v1419 = vpop.f32.mrf.mxu0
    %1420 = vdwg.mxu0
    %1421 = vmatpush.bf16.msra.mxu0 %v819
    %1422 = vmatpush.bf16.msra.mxu0 %v816
    %1423 = vmatpush.bf16.msra.mxu0 %v813
    %1424 = vmatpush.bf16.msra.mxu0 %v810
    %1425 = vmatpush.bf16.msra.mxu0 %v807
    %1426 = vmatpush.bf16.msra.mxu0 %v804
    %1427 = vmatpush.bf16.msra.mxu0 %v801
    %1428 = vmatpush.bf16.msra.mxu0 %v798
    %1429 = vmatmul.bf16.gmra.mxu0 %v1394
    %v1430 = vpop.f32.mrf.mxu0
    %v1431 = vadd.f32 0.0, %v1430
    %v1432 = vpop.f32.mrf.mxu0
    %1433 = vdwg.mxu0
    %s1434 = scalar_lea.vmem [#allocation2], 144
    %v1435 = vld [vmem:[%s1434] sm:$0xff]
    %v1436 = vld [vmem:[%s1434 + $0x8] sm:$0xff]
    %v1437 = vld [vmem:[%s1434 + $0x10] sm:$0xff]
    %v1438 = vadd.f32 %v1435, %v1405
    %v1439 = vxor.u32 %v1438, 2147483648
    %v1440 = vmul.f32 %v1439, 1.442695
    %v1441 = vpow.pop %v1440
    %v1442 = vadd.f32 %v1441, 1.0
    %v1443 = vrcp.pop %v1442
    %v1444 = vmul.f32 %v1442, %v1443
    %v1445 = vsub.f32 1.0, %v1444
    %v1446 = vmul.f32 %v1443, %v1445
    %v1447 = vadd.f32 %v1443, %v1446
    %vm1448 = vweird.f32 %v1442
    %vm1449 = vweird.f32 %v1443
    %vm1450 = vmor %vm1448, %vm1449
    %v1451 = vsel %vm1450, %v1443, %v1447
    %v1452 = vand.u32 2147483647, %v1442
    %vm1453 = vcmp.eq.f32.partialorder %v1452, 8.507059e+37
    %v1454 = vand.u32 %v1442, 2147483648
    %v1455 = vor.u32 1.1754944e-38, %v1454
    %v1456 = vsel %vm1453, %v1455, %v1451
    %v1457 = vmul.f32 1.0, %v1456
    %v1458 = vadd.f32 %v1436, %v1418
    %v1459 = vxor.u32 %v1458, 2147483648
    %v1460 = vmul.f32 %v1459, 1.442695
    %v1461 = vpow.pop %v1460
    %v1462 = vadd.f32 %v1461, 1.0
    %v1463 = vrcp.pop %v1462
    %v1464 = vmul.f32 %v1462, %v1463
    %v1465 = vsub.f32 1.0, %v1464
    %v1466 = vmul.f32 %v1463, %v1465
    %v1467 = vadd.f32 %v1463, %v1466
    %vm1468 = vweird.f32 %v1462
    %vm1469 = vweird.f32 %v1463
    %vm1470 = vmor %vm1468, %vm1469
    %v1471 = vsel %vm1470, %v1463, %v1467
    %v1472 = vand.u32 2147483647, %v1462
    %vm1473 = vcmp.eq.f32.partialorder %v1472, 8.507059e+37
    %v1474 = vand.u32 %v1462, 2147483648
    %v1475 = vor.u32 1.1754944e-38, %v1474
    %v1476 = vsel %vm1473, %v1475, %v1471
    %v1477 = vmul.f32 1.0, %v1476
    %v1478 = vadd.f32 %v1431, %v682
    %v1479 = vmul.f32 %v1457, %v1478
    %v1480 = vadd.f32 %v1437, %v1479
    %v1481 = vtanh.pop %v1480
    %v1482 = vsub.f32 1.0, %v1477
    %v1483 = vmul.f32 %v1482, %v1481
    %v1484 = vmul.f32 %v1477, %v1393
    %v1485 = vadd.f32 %v1483, %v1484
    %v1486 = vpack.c.bf16 %v1485, %v1485
    %1487 = vmatpush.bf16.msra.mxu0 %v817
    %1488 = vmatpush.bf16.msra.mxu0 %v814
    %1489 = vmatpush.bf16.msra.mxu0 %v811
    %1490 = vmatpush.bf16.msra.mxu0 %v808
    %1491 = vmatpush.bf16.msra.mxu0 %v805
    %1492 = vmatpush.bf16.msra.mxu0 %v802
    %1493 = vmatpush.bf16.msra.mxu0 %v799
    %1494 = vmatpush.bf16.msra.mxu0 %v796
    %1495 = vmatmul.bf16.gmra.mxu0 %v1486
    %v1496 = vpop.f32.mrf.mxu0
    %v1497 = vadd.f32 0.0, %v1496
    %v1498 = vpop.f32.mrf.mxu0
    %1499 = vdwg.mxu0
    %1500 = vmatpush.bf16.msra.mxu0 %v818
    %1501 = vmatpush.bf16.msra.mxu0 %v815
    %1502 = vmatpush.bf16.msra.mxu0 %v812
    %1503 = vmatpush.bf16.msra.mxu0 %v809
    %1504 = vmatpush.bf16.msra.mxu0 %v806
    %1505 = vmatpush.bf16.msra.mxu0 %v803
    %1506 = vmatpush.bf16.msra.mxu0 %v800
    %1507 = vmatpush.bf16.msra.mxu0 %v797
    %1508 = vmatmul.bf16.gmra.mxu0 %v1486
    %v1509 = vpop.f32.mrf.mxu0
    %v1510 = vadd.f32 0.0, %v1509
    %v1511 = vpop.f32.mrf.mxu0
    %1512 = vdwg.mxu0
    %1513 = vmatpush.bf16.msra.mxu0 %v819
    %1514 = vmatpush.bf16.msra.mxu0 %v816
    %1515 = vmatpush.bf16.msra.mxu0 %v813
    %1516 = vmatpush.bf16.msra.mxu0 %v810
    %1517 = vmatpush.bf16.msra.mxu0 %v807
    %1518 = vmatpush.bf16.msra.mxu0 %v804
    %1519 = vmatpush.bf16.msra.mxu0 %v801
    %1520 = vmatpush.bf16.msra.mxu0 %v798
    %1521 = vmatmul.bf16.gmra.mxu0 %v1486
    %v1522 = vpop.f32.mrf.mxu0
    %v1523 = vadd.f32 0.0, %v1522
    %v1524 = vpop.f32.mrf.mxu0
    %1525 = vdwg.mxu0
    %s1526 = scalar_lea.vmem [#allocation2], 168
    %v1527 = vld [vmem:[%s1526] sm:$0xff]
    %v1528 = vld [vmem:[%s1526 + $0x8] sm:$0xff]
    %v1529 = vld [vmem:[%s1526 + $0x10] sm:$0xff]
    %v1530 = vadd.f32 %v1527, %v1497
    %v1531 = vxor.u32 %v1530, 2147483648
    %v1532 = vmul.f32 %v1531, 1.442695
    %v1533 = vpow.pop %v1532
    %v1534 = vadd.f32 %v1533, 1.0
    %v1535 = vrcp.pop %v1534
    %v1536 = vmul.f32 %v1534, %v1535
    %v1537 = vsub.f32 1.0, %v1536
    %v1538 = vmul.f32 %v1535, %v1537
    %v1539 = vadd.f32 %v1535, %v1538
    %vm1540 = vweird.f32 %v1534
    %vm1541 = vweird.f32 %v1535
    %vm1542 = vmor %vm1540, %vm1541
    %v1543 = vsel %vm1542, %v1535, %v1539
    %v1544 = vand.u32 2147483647, %v1534
    %vm1545 = vcmp.eq.f32.partialorder %v1544, 8.507059e+37
    %v1546 = vand.u32 %v1534, 2147483648
    %v1547 = vor.u32 1.1754944e-38, %v1546
    %v1548 = vsel %vm1545, %v1547, %v1543
    %v1549 = vmul.f32 1.0, %v1548
    %v1550 = vadd.f32 %v1528, %v1510
    %v1551 = vxor.u32 %v1550, 2147483648
    %v1552 = vmul.f32 %v1551, 1.442695
    %v1553 = vpow.pop %v1552
    %v1554 = vadd.f32 %v1553, 1.0
    %v1555 = vrcp.pop %v1554
    %v1556 = vmul.f32 %v1554, %v1555
    %v1557 = vsub.f32 1.0, %v1556
    %v1558 = vmul.f32 %v1555, %v1557
    %v1559 = vadd.f32 %v1555, %v1558
    %vm1560 = vweird.f32 %v1554
    %vm1561 = vweird.f32 %v1555
    %vm1562 = vmor %vm1560, %vm1561
    %v1563 = vsel %vm1562, %v1555, %v1559
    %v1564 = vand.u32 2147483647, %v1554
    %vm1565 = vcmp.eq.f32.partialorder %v1564, 8.507059e+37
    %v1566 = vand.u32 %v1554, 2147483648
    %v1567 = vor.u32 1.1754944e-38, %v1566
    %v1568 = vsel %vm1565, %v1567, %v1563
    %v1569 = vmul.f32 1.0, %v1568
    %v1570 = vadd.f32 %v1523, %v682
    %v1571 = vmul.f32 %v1549, %v1570
    %v1572 = vadd.f32 %v1529, %v1571
    %v1573 = vtanh.pop %v1572
    %v1574 = vsub.f32 1.0, %v1569
    %v1575 = vmul.f32 %v1574, %v1573
    %v1576 = vmul.f32 %v1569, %v1485
    %v1577 = vadd.f32 %v1575, %v1576
    %v1578 = vpack.c.bf16 %v1577, %v1577
    %v1579 = vld [vmem:[%s8] sm:$0xff]
    %v1580 = vld [vmem:[%s8 + $0x8] sm:$0xff]
    %v1581 = vld [vmem:[%s8 + $0x10] sm:$0xff]
    %v1582 = vld [vmem:[%s8 + $0x18] sm:$0xff]
    %v1583 = vld [vmem:[%s8 + $0x20] sm:$0xff]
    %v1584 = vld [vmem:[%s8 + $0x28] sm:$0xff]
    %v1585 = vld [vmem:[%s8 + $0x30] sm:$0xff]
    %v1586 = vld [vmem:[%s8 + $0x38] sm:$0xff]
    %v1587 = vld [vmem:[%s8 + $0x40] sm:$0xff]
    %v1588 = vld [vmem:[%s8 + $0x48] sm:$0xff]
    %v1589 = vld [vmem:[%s8 + $0x50] sm:$0xff]
    %v1590 = vld [vmem:[%s8 + $0x58] sm:$0xff]
    %v1591 = vld [vmem:[%s8 + $0x60] sm:$0xff]
    %v1592 = vld [vmem:[%s8 + $0x68] sm:$0xff]
    %v1593 = vld [vmem:[%s8 + $0x70] sm:$0xff]
    %v1594 = vld [vmem:[%s8 + $0x78] sm:$0xff]
    %v1595 = vld [vmem:[%s9] sm:$0x3]
    %v1597 = vperm.slane %v1595, 0
    %v1598 = vperm.slane %v1595, 1
    %v1617 = vunpack.c.l.b16 %v1579
    %v1618 = vunpack.c.h.b16 %v1579
    %v1619 = vunpack.c.l.b16 %v1580
    %v1620 = vunpack.c.h.b16 %v1580
    %v1621 = vunpack.c.l.b16 %v1581
    %v1622 = vunpack.c.h.b16 %v1581
    %v1623 = vunpack.c.l.b16 %v1582
    %v1624 = vunpack.c.h.b16 %v1582
    %v1625 = vunpack.c.l.b16 %v1583
    %v1626 = vunpack.c.h.b16 %v1583
    %v1627 = vunpack.c.l.b16 %v1584
    %v1628 = vunpack.c.h.b16 %v1584
    %v1629 = vunpack.c.l.b16 %v1585
    %v1630 = vunpack.c.h.b16 %v1585
    %v1631 = vunpack.c.l.b16 %v1586
    %v1632 = vunpack.c.h.b16 %v1586
    %v1633 = vunpack.c.l.b16 %v1587
    %v1634 = vunpack.c.h.b16 %v1587
    %v1635 = vunpack.c.l.b16 %v1588
    %v1636 = vunpack.c.h.b16 %v1588
    %v1637 = vunpack.c.l.b16 %v1589
    %v1638 = vunpack.c.h.b16 %v1589
    %v1639 = vunpack.c.l.b16 %v1590
    %v1640 = vunpack.c.h.b16 %v1590
    %v1641 = vunpack.c.l.b16 %v1591
    %v1642 = vunpack.c.h.b16 %v1591
    %v1643 = vunpack.c.l.b16 %v1592
    %v1644 = vunpack.c.h.b16 %v1592
    %v1645 = vunpack.c.l.b16 %v1593
    %v1646 = vunpack.c.h.b16 %v1593
    %v1647 = vunpack.c.l.b16 %v1594
    %v1648 = vunpack.c.h.b16 %v1594
    %v1649 = vpack.c.b16 %v1619, %v1617
    %v1650 = vpack.c.b16 %v1620, %v1618
    %v1651 = vpack.c.b16 %v1623, %v1621
    %v1652 = vpack.c.b16 %v1624, %v1622
    %v1653 = vpack.c.b16 %v1627, %v1625
    %v1654 = vpack.c.b16 %v1628, %v1626
    %v1655 = vpack.c.b16 %v1631, %v1629
    %v1656 = vpack.c.b16 %v1632, %v1630
    %v1657 = vpack.c.b16 %v1635, %v1633
    %v1658 = vpack.c.b16 %v1636, %v1634
    %v1659 = vpack.c.b16 %v1639, %v1637
    %v1660 = vpack.c.b16 %v1640, %v1638
    %v1661 = vpack.c.b16 %v1643, %v1641
    %v1662 = vpack.c.b16 %v1644, %v1642
    %v1663 = vpack.c.b16 %v1647, %v1645
    %v1664 = vpack.c.b16 %v1648, %v1646
    %1681 = vmatpush.bf16.msra.mxu0 %v1663
    %1682 = vmatpush.bf16.msra.mxu0 %v1661
    %1683 = vmatpush.bf16.msra.mxu0 %v1659
    %1684 = vmatpush.bf16.msra.mxu0 %v1657
    %1685 = vmatpush.bf16.msra.mxu0 %v1655
    %1686 = vmatpush.bf16.msra.mxu0 %v1653
    %1687 = vmatpush.bf16.msra.mxu0 %v1651
    %1688 = vmatpush.bf16.msra.mxu0 %v1649
    %1689 = vmatmul.bf16.gmra.mxu0 %v1578
    %v1690 = vpop.f32.mrf.mxu0
    %v1691 = vadd.f32 %v1597, %v1690
    %v1692 = vpop.f32.mrf.mxu0
    %1693 = vdwg.mxu0
    %1694 = vmatpush.bf16.msra.mxu0 %v1664
    %1695 = vmatpush.bf16.msra.mxu0 %v1662
    %1696 = vmatpush.bf16.msra.mxu0 %v1660
    %1697 = vmatpush.bf16.msra.mxu0 %v1658
    %1698 = vmatpush.bf16.msra.mxu0 %v1656
    %1699 = vmatpush.bf16.msra.mxu0 %v1654
    %1700 = vmatpush.bf16.msra.mxu0 %v1652
    %1701 = vmatpush.bf16.msra.mxu0 %v1650
    %1702 = vmatmul.bf16.gmra.mxu0 %v1578
    %v1703 = vpop.f32.mrf.mxu0
    %v1704 = vadd.f32 %v1598, %v1703
    %v1705 = vpop.f32.mrf.mxu0
    %1706 = vdwg.mxu0
    %v1707 = vmul.f32 %v1704, 1.442695
    %v1708 = vpow.pop %v1707
    %v1709 = vmul.f32 %v1691, %v1691
    %v1710 = vadd.f32 %v1708, %v1709
    %v1711 = vsub.f32 %v1710, 1.0
    %v1712 = vsub.f32 %v1711, %v1704
    %1713 = vadd.xlane.f32.xlu0 %v1712
    %v1714 = vpop.xlane.xlu0 %1713
    %v1715 = vmul.f32 %v1714, 0.5
    %v1716 = vrot.slane %v1715, 4
    %v1717 = vadd.f32 %v1715, %v1716
    %v1718 = vrot.slane %v1717, 2
    %v1719 = vadd.f32 %v1717, %v1718
    %v1720 = vrot.slane %v1719, 1
    %v1721 = vadd.f32 %v1719, %v1720
    %v1722 = vrcp.pop 8.0
    %v1723 = vmul.f32 8.0, %v1722
    %v1724 = vsub.f32 1.0, %v1723
    %v1725 = vmul.f32 %v1722, %v1724
    %v1726 = vadd.f32 %v1722, %v1725
    %vm1727 = vweird.f32 %v1722
    %v1728 = vsel %vm1727, %v1722, %v1726
    %v1729 = vmul.f32 %v1721, %v1728
    %vm1730 = vcmask 0
    %1731 = vst.msk [vmem:[#allocation6] sm:$0x1] %vm1730, %v1729
    %v1732 = vmul.f32 %v1704, 0.5
    %v1733 = vmul.f32 %v1732, 1.442695
    %v1734 = vpow.pop %v1733
    %v1735 = vld [vmem:[%s2] sm:$0x1]
    %v1737 = vperm.slane %v1735, 0
    %v1739 = vmul.f32 %v1734, %v1737
    %v1740 = vadd.f32 %v1691, %v1739
    %v1741 = vmul.f32 %v1740, %v1740
    %1742 = vadd.xlane.f32.xlu0 %v1741
    %v1743 = vpop.xlane.xlu0 %1742
    %v1744 = vrot.slane %v1743, 4
    %v1745 = vadd.f32 %v1743, %v1744
    %v1746 = vrot.slane %v1745, 2
    %v1747 = vadd.f32 %v1745, %v1746
    %v1748 = vrot.slane %v1747, 1
    %v1749 = vadd.f32 %v1747, %v1748
    %v1750 = vrsqrt.pop %v1749
    %v1751 = vmul.f32 %v1750, %v1749
    %v1752 = vmul.f32 %v1751, %v1750
    %v1753 = vmul.f32 0.5, %v1752
    %v1754 = vsub.f32 1.5, %v1753
    %v1755 = vmul.f32 %v1750, %v1754
    %vm1756 = vweird.f32 %v1749
    %vm1757 = vweird.f32 %v1750
    %vm1758 = vmor %vm1756, %vm1757
    %v1759 = vsel %vm1758, %v1750, %v1755
    %v1760 = vmul.f32 %v1740, %v1759
    %v1761 = vpack.c.bf16 %v1760, %v1760
    %v1762 = vld [vmem:[%s11] sm:$0xff]
    %v1763 = vld [vmem:[%s11 + $0x8] sm:$0xff]
    %v1764 = vld [vmem:[%s11 + $0x10] sm:$0xff]
    %v1765 = vld [vmem:[%s11 + $0x18] sm:$0xff]
    %v1766 = vld [vmem:[%s11 + $0x20] sm:$0xff]
    %v1767 = vld [vmem:[%s11 + $0x28] sm:$0xff]
    %v1768 = vld [vmem:[%s11 + $0x30] sm:$0xff]
    %v1769 = vld [vmem:[%s11 + $0x38] sm:$0xff]
    %v1770 = vld [vmem:[%s11 + $0x40] sm:$0xff]
    %v1771 = vld [vmem:[%s11 + $0x48] sm:$0xff]
    %v1772 = vld [vmem:[%s11 + $0x50] sm:$0xff]
    %v1773 = vld [vmem:[%s11 + $0x58] sm:$0xff]
    %v1774 = vld [vmem:[%s11 + $0x60] sm:$0xff]
    %v1775 = vld [vmem:[%s11 + $0x68] sm:$0xff]
    %v1776 = vld [vmem:[%s11 + $0x70] sm:$0xff]
    %v1777 = vld [vmem:[%s11 + $0x78] sm:$0xff]
    %v1778 = vld [vmem:[%s11 + $0x80] sm:$0xff]
    %v1779 = vld [vmem:[%s11 + $0x88] sm:$0xff]
    %v1780 = vld [vmem:[%s11 + $0x90] sm:$0xff]
    %v1781 = vld [vmem:[%s11 + $0x98] sm:$0xff]
    %v1782 = vld [vmem:[%s11 + $0xa0] sm:$0xff]
    %v1783 = vld [vmem:[%s11 + $0xa8] sm:$0xff]
    %v1784 = vld [vmem:[%s11 + $0xb0] sm:$0xff]
    %v1785 = vld [vmem:[%s11 + $0xb8] sm:$0xff]
    %v1786 = vld [vmem:[%s11 + $0xc0] sm:$0xff]
    %v1787 = vld [vmem:[%s11 + $0xc8] sm:$0xff]
    %v1788 = vld [vmem:[%s11 + $0xd0] sm:$0xff]
    %v1789 = vld [vmem:[%s11 + $0xd8] sm:$0xff]
    %v1790 = vld [vmem:[%s11 + $0xe0] sm:$0xff]
    %v1791 = vld [vmem:[%s11 + $0xe8] sm:$0xff]
    %v1792 = vld [vmem:[%s11 + $0xf0] sm:$0xff]
    %v1793 = vld [vmem:[%s11 + $0xf8] sm:$0xff]
    %v1794 = vld [vmem:[%s11 + $0x100] sm:$0xff]
    %v1795 = vld [vmem:[%s11 + $0x108] sm:$0xff]
    %v1796 = vld [vmem:[%s11 + $0x110] sm:$0xff]
    %v1797 = vld [vmem:[%s11 + $0x118] sm:$0xff]
    %v1798 = vld [vmem:[%s11 + $0x120] sm:$0xff]
    %v1799 = vld [vmem:[%s11 + $0x128] sm:$0xff]
    %v1800 = vld [vmem:[%s11 + $0x130] sm:$0xff]
    %v1801 = vld [vmem:[%s11 + $0x138] sm:$0xff]
    %v1802 = vld [vmem:[%s11 + $0x140] sm:$0xff]
    %v1803 = vld [vmem:[%s11 + $0x148] sm:$0xff]
    %v1804 = vld [vmem:[%s11 + $0x150] sm:$0xff]
    %v1805 = vld [vmem:[%s11 + $0x158] sm:$0xff]
    %v1806 = vld [vmem:[%s11 + $0x160] sm:$0xff]
    %v1807 = vld [vmem:[%s11 + $0x168] sm:$0xff]
    %v1808 = vld [vmem:[%s11 + $0x170] sm:$0xff]
    %v1809 = vld [vmem:[%s11 + $0x178] sm:$0xff]
    %v1858 = vunpack.c.l.b16 %v1762
    %v1859 = vunpack.c.h.b16 %v1762
    %v1860 = vunpack.c.l.b16 %v1763
    %v1861 = vunpack.c.h.b16 %v1763
    %v1862 = vunpack.c.l.b16 %v1764
    %v1863 = vunpack.c.h.b16 %v1764
    %v1864 = vunpack.c.l.b16 %v1765
    %v1865 = vunpack.c.h.b16 %v1765
    %v1866 = vunpack.c.l.b16 %v1766
    %v1867 = vunpack.c.h.b16 %v1766
    %v1868 = vunpack.c.l.b16 %v1767
    %v1869 = vunpack.c.h.b16 %v1767
    %v1870 = vunpack.c.l.b16 %v1768
    %v1871 = vunpack.c.h.b16 %v1768
    %v1872 = vunpack.c.l.b16 %v1769
    %v1873 = vunpack.c.h.b16 %v1769
    %v1874 = vunpack.c.l.b16 %v1770
    %v1875 = vunpack.c.h.b16 %v1770
    %v1876 = vunpack.c.l.b16 %v1771
    %v1877 = vunpack.c.h.b16 %v1771
    %v1878 = vunpack.c.l.b16 %v1772
    %v1879 = vunpack.c.h.b16 %v1772
    %v1880 = vunpack.c.l.b16 %v1773
    %v1881 = vunpack.c.h.b16 %v1773
    %v1882 = vunpack.c.l.b16 %v1774
    %v1883 = vunpack.c.h.b16 %v1774
    %v1884 = vunpack.c.l.b16 %v1775
    %v1885 = vunpack.c.h.b16 %v1775
    %v1886 = vunpack.c.l.b16 %v1776
    %v1887 = vunpack.c.h.b16 %v1776
    %v1888 = vunpack.c.l.b16 %v1777
    %v1889 = vunpack.c.h.b16 %v1777
    %v1890 = vunpack.c.l.b16 %v1778
    %v1891 = vunpack.c.h.b16 %v1778
    %v1892 = vunpack.c.l.b16 %v1779
    %v1893 = vunpack.c.h.b16 %v1779
    %v1894 = vunpack.c.l.b16 %v1780
    %v1895 = vunpack.c.h.b16 %v1780
    %v1896 = vunpack.c.l.b16 %v1781
    %v1897 = vunpack.c.h.b16 %v1781
    %v1898 = vunpack.c.l.b16 %v1782
    %v1899 = vunpack.c.h.b16 %v1782
    %v1900 = vunpack.c.l.b16 %v1783
    %v1901 = vunpack.c.h.b16 %v1783
    %v1902 = vunpack.c.l.b16 %v1784
    %v1903 = vunpack.c.h.b16 %v1784
    %v1904 = vunpack.c.l.b16 %v1785
    %v1905 = vunpack.c.h.b16 %v1785
    %v1906 = vunpack.c.l.b16 %v1786
    %v1907 = vunpack.c.h.b16 %v1786
    %v1908 = vunpack.c.l.b16 %v1787
    %v1909 = vunpack.c.h.b16 %v1787
    %v1910 = vunpack.c.l.b16 %v1788
    %v1911 = vunpack.c.h.b16 %v1788
    %v1912 = vunpack.c.l.b16 %v1789
    %v1913 = vunpack.c.h.b16 %v1789
    %v1914 = vunpack.c.l.b16 %v1790
    %v1915 = vunpack.c.h.b16 %v1790
    %v1916 = vunpack.c.l.b16 %v1791
    %v1917 = vunpack.c.h.b16 %v1791
    %v1918 = vunpack.c.l.b16 %v1792
    %v1919 = vunpack.c.h.b16 %v1792
    %v1920 = vunpack.c.l.b16 %v1793
    %v1921 = vunpack.c.h.b16 %v1793
    %v1922 = vunpack.c.l.b16 %v1794
    %v1923 = vunpack.c.h.b16 %v1794
    %v1924 = vunpack.c.l.b16 %v1795
    %v1925 = vunpack.c.h.b16 %v1795
    %v1926 = vunpack.c.l.b16 %v1796
    %v1927 = vunpack.c.h.b16 %v1796
    %v1928 = vunpack.c.l.b16 %v1797
    %v1929 = vunpack.c.h.b16 %v1797
    %v1930 = vunpack.c.l.b16 %v1798
    %v1931 = vunpack.c.h.b16 %v1798
    %v1932 = vunpack.c.l.b16 %v1799
    %v1933 = vunpack.c.h.b16 %v1799
    %v1934 = vunpack.c.l.b16 %v1800
    %v1935 = vunpack.c.h.b16 %v1800
    %v1936 = vunpack.c.l.b16 %v1801
    %v1937 = vunpack.c.h.b16 %v1801
    %v1938 = vunpack.c.l.b16 %v1802
    %v1939 = vunpack.c.h.b16 %v1802
    %v1940 = vunpack.c.l.b16 %v1803
    %v1941 = vunpack.c.h.b16 %v1803
    %v1942 = vunpack.c.l.b16 %v1804
    %v1943 = vunpack.c.h.b16 %v1804
    %v1944 = vunpack.c.l.b16 %v1805
    %v1945 = vunpack.c.h.b16 %v1805
    %v1946 = vunpack.c.l.b16 %v1806
    %v1947 = vunpack.c.h.b16 %v1806
    %v1948 = vunpack.c.l.b16 %v1807
    %v1949 = vunpack.c.h.b16 %v1807
    %v1950 = vunpack.c.l.b16 %v1808
    %v1951 = vunpack.c.h.b16 %v1808
    %v1952 = vunpack.c.l.b16 %v1809
    %v1953 = vunpack.c.h.b16 %v1809
    %v1954 = vpack.c.b16 %v1864, %v1858
    %v1955 = vpack.c.b16 %v1865, %v1859
    %v1956 = vpack.c.b16 %v1866, %v1860
    %v1957 = vpack.c.b16 %v1867, %v1861
    %v1958 = vpack.c.b16 %v1868, %v1862
    %v1959 = vpack.c.b16 %v1869, %v1863
    %v1960 = vpack.c.b16 %v1876, %v1870
    %v1961 = vpack.c.b16 %v1877, %v1871
    %v1962 = vpack.c.b16 %v1878, %v1872
    %v1963 = vpack.c.b16 %v1879, %v1873
    %v1964 = vpack.c.b16 %v1880, %v1874
    %v1965 = vpack.c.b16 %v1881, %v1875
    %v1966 = vpack.c.b16 %v1888, %v1882
    %v1967 = vpack.c.b16 %v1889, %v1883
    %v1968 = vpack.c.b16 %v1890, %v1884
    %v1969 = vpack.c.b16 %v1891, %v1885
    %v1970 = vpack.c.b16 %v1892, %v1886
    %v1971 = vpack.c.b16 %v1893, %v1887
    %v1972 = vpack.c.b16 %v1900, %v1894
    %v1973 = vpack.c.b16 %v1901, %v1895
    %v1974 = vpack.c.b16 %v1902, %v1896
    %v1975 = vpack.c.b16 %v1903, %v1897
    %v1976 = vpack.c.b16 %v1904, %v1898
    %v1977 = vpack.c.b16 %v1905, %v1899
    %v1978 = vpack.c.b16 %v1912, %v1906
    %v1979 = vpack.c.b16 %v1913, %v1907
    %v1980 = vpack.c.b16 %v1914, %v1908
    %v1981 = vpack.c.b16 %v1915, %v1909
    %v1982 = vpack.c.b16 %v1916, %v1910
    %v1983 = vpack.c.b16 %v1917, %v1911
    %v1984 = vpack.c.b16 %v1924, %v1918
    %v1985 = vpack.c.b16 %v1925, %v1919
    %v1986 = vpack.c.b16 %v1926, %v1920
    %v1987 = vpack.c.b16 %v1927, %v1921
    %v1988 = vpack.c.b16 %v1928, %v1922
    %v1989 = vpack.c.b16 %v1929, %v1923
    %v1990 = vpack.c.b16 %v1936, %v1930
    %v1991 = vpack.c.b16 %v1937, %v1931
    %v1992 = vpack.c.b16 %v1938, %v1932
    %v1993 = vpack.c.b16 %v1939, %v1933
    %v1994 = vpack.c.b16 %v1940, %v1934
    %v1995 = vpack.c.b16 %v1941, %v1935
    %v1996 = vpack.c.b16 %v1948, %v1942
    %v1997 = vpack.c.b16 %v1949, %v1943
    %v1998 = vpack.c.b16 %v1950, %v1944
    %v1999 = vpack.c.b16 %v1951, %v1945
    %v2000 = vpack.c.b16 %v1952, %v1946
    %v2001 = vpack.c.b16 %v1953, %v1947
    %2050 = vmatpush.bf16.msra.mxu0 %v1996
    %2051 = vmatpush.bf16.msra.mxu0 %v1990
    %2052 = vmatpush.bf16.msra.mxu0 %v1984
    %2053 = vmatpush.bf16.msra.mxu0 %v1978
    %2054 = vmatpush.bf16.msra.mxu0 %v1972
    %2055 = vmatpush.bf16.msra.mxu0 %v1966
    %2056 = vmatpush.bf16.msra.mxu0 %v1960
    %2057 = vmatpush.bf16.msra.mxu0 %v1954
    %2058 = vmatmul.bf16.gmra.mxu0 %v1761
    %v2059 = vpop.f32.mrf.mxu0
    %v2060 = vadd.f32 0.0, %v2059
    %v2061 = vpop.f32.mrf.mxu0
    %2062 = vdwg.mxu0
    %2063 = vmatpush.bf16.msra.mxu0 %v1997
    %2064 = vmatpush.bf16.msra.mxu0 %v1991
    %2065 = vmatpush.bf16.msra.mxu0 %v1985
    %2066 = vmatpush.bf16.msra.mxu0 %v1979
    %2067 = vmatpush.bf16.msra.mxu0 %v1973
    %2068 = vmatpush.bf16.msra.mxu0 %v1967
    %2069 = vmatpush.bf16.msra.mxu0 %v1961
    %2070 = vmatpush.bf16.msra.mxu0 %v1955
    %2071 = vmatmul.bf16.gmra.mxu0 %v1761
    %v2072 = vpop.f32.mrf.mxu0
    %v2073 = vadd.f32 0.0, %v2072
    %v2074 = vpop.f32.mrf.mxu0
    %2075 = vdwg.mxu0
    %2076 = vmatpush.bf16.msra.mxu0 %v1998
    %2077 = vmatpush.bf16.msra.mxu0 %v1992
    %2078 = vmatpush.bf16.msra.mxu0 %v1986
    %2079 = vmatpush.bf16.msra.mxu0 %v1980
    %2080 = vmatpush.bf16.msra.mxu0 %v1974
    %2081 = vmatpush.bf16.msra.mxu0 %v1968
    %2082 = vmatpush.bf16.msra.mxu0 %v1962
    %2083 = vmatpush.bf16.msra.mxu0 %v1956
    %2084 = vmatmul.bf16.gmra.mxu0 %v1761
    %v2085 = vpop.f32.mrf.mxu0
    %v2086 = vadd.f32 0.0, %v2085
    %v2087 = vpop.f32.mrf.mxu0
    %2088 = vdwg.mxu0
    %2089 = vmatpush.bf16.msra.mxu0 %v1999
    %2090 = vmatpush.bf16.msra.mxu0 %v1993
    %2091 = vmatpush.bf16.msra.mxu0 %v1987
    %2092 = vmatpush.bf16.msra.mxu0 %v1981
    %2093 = vmatpush.bf16.msra.mxu0 %v1975
    %2094 = vmatpush.bf16.msra.mxu0 %v1969
    %2095 = vmatpush.bf16.msra.mxu0 %v1963
    %2096 = vmatpush.bf16.msra.mxu0 %v1957
    %2097 = vmatmul.bf16.gmra.mxu0 %v1761
    %v2098 = vpop.f32.mrf.mxu0
    %v2099 = vadd.f32 0.0, %v2098
    %v2100 = vpop.f32.mrf.mxu0
    %2101 = vdwg.mxu0
    %2102 = vmatpush.bf16.msra.mxu0 %v2000
    %2103 = vmatpush.bf16.msra.mxu0 %v1994
    %2104 = vmatpush.bf16.msra.mxu0 %v1988
    %2105 = vmatpush.bf16.msra.mxu0 %v1982
    %2106 = vmatpush.bf16.msra.mxu0 %v1976
    %2107 = vmatpush.bf16.msra.mxu0 %v1970
    %2108 = vmatpush.bf16.msra.mxu0 %v1964
    %2109 = vmatpush.bf16.msra.mxu0 %v1958
    %2110 = vmatmul.bf16.gmra.mxu0 %v1761
    %v2111 = vpop.f32.mrf.mxu0
    %v2112 = vadd.f32 0.0, %v2111
    %v2113 = vpop.f32.mrf.mxu0
    %2114 = vdwg.mxu0
    %2115 = vmatpush.bf16.msra.mxu0 %v2001
    %2116 = vmatpush.bf16.msra.mxu0 %v1995
    %2117 = vmatpush.bf16.msra.mxu0 %v1989
    %2118 = vmatpush.bf16.msra.mxu0 %v1983
    %2119 = vmatpush.bf16.msra.mxu0 %v1977
    %2120 = vmatpush.bf16.msra.mxu0 %v1971
    %2121 = vmatpush.bf16.msra.mxu0 %v1965
    %2122 = vmatpush.bf16.msra.mxu0 %v1959
    %2123 = vmatmul.bf16.gmra.mxu0 %v1761
    %v2124 = vpop.f32.mrf.mxu0
    %v2125 = vadd.f32 0.0, %v2124
    %v2126 = vpop.f32.mrf.mxu0
    %2127 = vdwg.mxu0
    %v2128 = vld [vmem:[#allocation3] sm:$0xff]
    %v2129 = vld [vmem:[#allocation3 + $0x8] sm:$0xff]
    %v2130 = vld [vmem:[#allocation3 + $0x10] sm:$0xff]
    %v2131 = vld [vmem:[#allocation3 + $0x18] sm:$0xff]
    %v2132 = vld [vmem:[#allocation3 + $0x20] sm:$0xff]
    %v2133 = vld [vmem:[#allocation3 + $0x28] sm:$0xff]
    %v2134 = vld [vmem:[#allocation3 + $0x30] sm:$0xff]
    %v2135 = vld [vmem:[#allocation3 + $0x38] sm:$0xff]
    %v2136 = vld [vmem:[#allocation3 + $0x40] sm:$0xff]
    %v2137 = vld [vmem:[#allocation3 + $0x48] sm:$0xff]
    %v2138 = vld [vmem:[#allocation3 + $0x50] sm:$0xff]
    %v2139 = vld [vmem:[#allocation3 + $0x58] sm:$0xff]
    %v2140 = vld [vmem:[#allocation3 + $0x60] sm:$0xff]
    %v2141 = vld [vmem:[#allocation3 + $0x68] sm:$0xff]
    %v2142 = vld [vmem:[#allocation3 + $0x70] sm:$0xff]
    %v2143 = vld [vmem:[#allocation3 + $0x78] sm:$0xff]
    %v2144 = vld [vmem:[#allocation3 + $0x80] sm:$0xff]
    %v2145 = vld [vmem:[#allocation3 + $0x88] sm:$0xff]
    %v2146 = vld [vmem:[#allocation3 + $0x90] sm:$0xff]
    %v2147 = vld [vmem:[#allocation3 + $0x98] sm:$0xff]
    %v2148 = vld [vmem:[#allocation3 + $0xa0] sm:$0xff]
    %v2149 = vld [vmem:[#allocation3 + $0xa8] sm:$0xff]
    %v2150 = vld [vmem:[#allocation3 + $0xb0] sm:$0xff]
    %v2151 = vld [vmem:[#allocation3 + $0xb8] sm:$0xff]
    %v2152 = vadd.f32 %v2128, %v2060
    %v2153 = vadd.f32 %v2129, %v2073
    %v2154 = vadd.f32 %v2130, %v2086
    %v2155 = vadd.f32 %v2131, %v2060
    %v2156 = vadd.f32 %v2132, %v2073
    %v2157 = vadd.f32 %v2133, %v2086
    %v2158 = vadd.f32 %v2134, %v2060
    %v2159 = vadd.f32 %v2135, %v2073
    %v2160 = vadd.f32 %v2136, %v2086
    %v2161 = vadd.f32 %v2137, %v2060
    %v2162 = vadd.f32 %v2138, %v2073
    %v2163 = vadd.f32 %v2139, %v2086
    %v2164 = vadd.f32 %v2140, %v2060
    %v2165 = vadd.f32 %v2141, %v2073
    %v2166 = vadd.f32 %v2142, %v2086
    %v2167 = vadd.f32 %v2143, %v2060
    %v2168 = vadd.f32 %v2144, %v2073
    %v2169 = vadd.f32 %v2145, %v2086
    %v2170 = vadd.f32 %v2146, %v2060
    %v2171 = vadd.f32 %v2147, %v2073
    %v2172 = vadd.f32 %v2148, %v2086
    %v2173 = vadd.f32 %v2149, %v2060
    %v2174 = vadd.f32 %v2150, %v2073
    %v2175 = vadd.f32 %v2151, %v2086
    %2176 = vst [vmem:[#allocation3] sm:$0xff] %v2152
    %2177 = vst [vmem:[#allocation3 + $0x8] sm:$0xff] %v2153
    %2178 = vst [vmem:[#allocation3 + $0x10] sm:$0xff] %v2154
    %2179 = vst [vmem:[#allocation3 + $0x18] sm:$0xff] %v2155
    %2180 = vst [vmem:[#allocation3 + $0x20] sm:$0xff] %v2156
    %2181 = vst [vmem:[#allocation3 + $0x28] sm:$0xff] %v2157
    %2182 = vst [vmem:[#allocation3 + $0x30] sm:$0xff] %v2158
    %2183 = vst [vmem:[#allocation3 + $0x38] sm:$0xff] %v2159
    %2184 = vst [vmem:[#allocation3 + $0x40] sm:$0xff] %v2160
    %2185 = vst [vmem:[#allocation3 + $0x48] sm:$0xff] %v2161
    %2186 = vst [vmem:[#allocation3 + $0x50] sm:$0xff] %v2162
    %2187 = vst [vmem:[#allocation3 + $0x58] sm:$0xff] %v2163
    %2188 = vst [vmem:[#allocation3 + $0x60] sm:$0xff] %v2164
    %2189 = vst [vmem:[#allocation3 + $0x68] sm:$0xff] %v2165
    %2190 = vst [vmem:[#allocation3 + $0x70] sm:$0xff] %v2166
    %2191 = vst [vmem:[#allocation3 + $0x78] sm:$0xff] %v2167
    %2192 = vst [vmem:[#allocation3 + $0x80] sm:$0xff] %v2168
    %2193 = vst [vmem:[#allocation3 + $0x88] sm:$0xff] %v2169
    %2194 = vst [vmem:[#allocation3 + $0x90] sm:$0xff] %v2170
    %2195 = vst [vmem:[#allocation3 + $0x98] sm:$0xff] %v2171
    %2196 = vst [vmem:[#allocation3 + $0xa0] sm:$0xff] %v2172
    %2197 = vst [vmem:[#allocation3 + $0xa8] sm:$0xff] %v2173
    %2198 = vst [vmem:[#allocation3 + $0xb0] sm:$0xff] %v2174
    %2199 = vst [vmem:[#allocation3 + $0xb8] sm:$0xff] %v2175
    %v2200 = vld [vmem:[%s13] sm:$0x1]
    %v2202 = vperm.slane %v2200, 0
    %v2204 = vld [vmem:[%s15] sm:$0x3]
    %v2206 = vperm.slane %v2204, 0
    %v2207 = vperm.slane %v2204, 1
    %v2210 = vld [vmem:[#allocation3] sm:$0xff]
    %v2211 = vld [vmem:[#allocation3 + $0x8] sm:$0xff]
    %v2212 = vld [vmem:[#allocation3 + $0x10] sm:$0xff]
    %v2213 = vadd.f32 %v2210, %v2099
    %v2214 = vxor.u32 %v2213, 2147483648
    %v2215 = vmul.f32 %v2214, 1.442695
    %v2216 = vpow.pop %v2215
    %v2217 = vadd.f32 %v2216, 1.0
    %v2218 = vrcp.pop %v2217
    %v2219 = vmul.f32 %v2217, %v2218
    %v2220 = vsub.f32 1.0, %v2219
    %v2221 = vmul.f32 %v2218, %v2220
    %v2222 = vadd.f32 %v2218, %v2221
    %vm2223 = vweird.f32 %v2217
    %vm2224 = vweird.f32 %v2218
    %vm2225 = vmor %vm2223, %vm2224
    %v2226 = vsel %vm2225, %v2218, %v2222
    %v2227 = vand.u32 2147483647, %v2217
    %vm2228 = vcmp.eq.f32.partialorder %v2227, 8.507059e+37
    %v2229 = vand.u32 %v2217, 2147483648
    %v2230 = vor.u32 1.1754944e-38, %v2229
    %v2231 = vsel %vm2228, %v2230, %v2226
    %v2232 = vmul.f32 1.0, %v2231
    %v2233 = vadd.f32 %v2211, %v2112
    %v2234 = vxor.u32 %v2233, 2147483648
    %v2235 = vmul.f32 %v2234, 1.442695
    %v2236 = vpow.pop %v2235
    %v2237 = vadd.f32 %v2236, 1.0
    %v2238 = vrcp.pop %v2237
    %v2239 = vmul.f32 %v2237, %v2238
    %v2240 = vsub.f32 1.0, %v2239
    %v2241 = vmul.f32 %v2238, %v2240
    %v2242 = vadd.f32 %v2238, %v2241
    %vm2243 = vweird.f32 %v2237
    %vm2244 = vweird.f32 %v2238
    %vm2245 = vmor %vm2243, %vm2244
    %v2246 = vsel %vm2245, %v2238, %v2242
    %v2247 = vand.u32 2147483647, %v2237
    %vm2248 = vcmp.eq.f32.partialorder %v2247, 8.507059e+37
    %v2249 = vand.u32 %v2237, 2147483648
    %v2250 = vor.u32 1.1754944e-38, %v2249
    %v2251 = vsel %vm2248, %v2250, %v2246
    %v2252 = vmul.f32 1.0, %v2251
    %v2253 = vadd.f32 %v2125, %v2202
    %v2254 = vmul.f32 %v2232, %v2253
    %v2255 = vadd.f32 %v2212, %v2254
    %v2256 = vtanh.pop %v2255
    %v2257 = vsub.f32 1.0, %v2252
    %v2258 = vmul.f32 %v2257, %v2256
    %v2259 = vmul.f32 %v2252, %v1760
    %v2260 = vadd.f32 %v2258, %v2259
    %v2261 = vpack.c.bf16 %v2260, %v2260
    %v2262 = vld [vmem:[%s14] sm:$0xff]
    %v2263 = vld [vmem:[%s14 + $0x8] sm:$0xff]
    %v2264 = vld [vmem:[%s14 + $0x10] sm:$0xf]
    %v2265 = vld [vmem:[%s14 + $0x14] sm:$0xff]
    %v2266 = vld [vmem:[%s14 + $0x1c] sm:$0xff]
    %v2267 = vld [vmem:[%s14 + $0x24] sm:$0xf]
    %v2268 = vld [vmem:[%s14 + $0x28] sm:$0xff]
    %v2269 = vld [vmem:[%s14 + $0x30] sm:$0xff]
    %v2270 = vld [vmem:[%s14 + $0x38] sm:$0xf]
    %v2271 = vld [vmem:[%s14 + $0x3c] sm:$0xff]
    %v2272 = vld [vmem:[%s14 + $0x44] sm:$0xff]
    %v2273 = vld [vmem:[%s14 + $0x4c] sm:$0xf]
    %v2274 = vld [vmem:[%s14 + $0x50] sm:$0xff]
    %v2275 = vld [vmem:[%s14 + $0x58] sm:$0xff]
    %v2276 = vld [vmem:[%s14 + $0x60] sm:$0xf]
    %v2277 = vld [vmem:[%s14 + $0x64] sm:$0xff]
    %v2278 = vld [vmem:[%s14 + $0x6c] sm:$0xff]
    %v2279 = vld [vmem:[%s14 + $0x74] sm:$0xf]
    %v2280 = vld [vmem:[%s14 + $0x78] sm:$0xff]
    %v2281 = vld [vmem:[%s14 + $0x80] sm:$0xff]
    %v2282 = vld [vmem:[%s14 + $0x88] sm:$0xf]
    %v2283 = vld [vmem:[%s14 + $0x8c] sm:$0xff]
    %v2284 = vld [vmem:[%s14 + $0x94] sm:$0xff]
    %v2285 = vld [vmem:[%s14 + $0x9c] sm:$0xf]
    %v2286 = vld [vmem:[%s14 + $0xa0] sm:$0xff]
    %v2287 = vld [vmem:[%s14 + $0xa8] sm:$0xff]
    %v2288 = vld [vmem:[%s14 + $0xb0] sm:$0xf]
    %v2289 = vld [vmem:[%s14 + $0xb4] sm:$0xff]
    %v2290 = vld [vmem:[%s14 + $0xbc] sm:$0xff]
    %v2291 = vld [vmem:[%s14 + $0xc4] sm:$0xf]
    %v2292 = vld [vmem:[%s14 + $0xc8] sm:$0xff]
    %v2293 = vld [vmem:[%s14 + $0xd0] sm:$0xff]
    %v2294 = vld [vmem:[%s14 + $0xd8] sm:$0xf]
    %v2295 = vld [vmem:[%s14 + $0xdc] sm:$0xff]
    %v2296 = vld [vmem:[%s14 + $0xe4] sm:$0xff]
    %v2297 = vld [vmem:[%s14 + $0xec] sm:$0xf]
    %v2298 = vld [vmem:[%s14 + $0xf0] sm:$0xff]
    %v2299 = vld [vmem:[%s14 + $0xf8] sm:$0xff]
    %v2300 = vld [vmem:[%s14 + $0x100] sm:$0xf]
    %v2301 = vld [vmem:[%s14 + $0x104] sm:$0xff]
    %v2302 = vld [vmem:[%s14 + $0x10c] sm:$0xff]
    %v2303 = vld [vmem:[%s14 + $0x114] sm:$0xf]
    %v2304 = vld [vmem:[%s14 + $0x118] sm:$0xff]
    %v2305 = vld [vmem:[%s14 + $0x120] sm:$0xff]
    %v2306 = vld [vmem:[%s14 + $0x128] sm:$0xf]
    %v2307 = vld [vmem:[%s14 + $0x12c] sm:$0xff]
    %v2308 = vld [vmem:[%s14 + $0x134] sm:$0xff]
    %v2309 = vld [vmem:[%s14 + $0x13c] sm:$0xf]
    %v2358 = vunpack.c.l.b16 %v2262
    %v2359 = vunpack.c.h.b16 %v2262
    %v2360 = vunpack.c.l.b16 %v2263
    %v2361 = vunpack.c.h.b16 %v2263
    %v2362 = vunpack.c.l.b16 %v2264
    %v2363 = vunpack.c.l.b16 %v2265
    %v2364 = vunpack.c.h.b16 %v2265
    %v2365 = vunpack.c.l.b16 %v2266
    %v2366 = vunpack.c.h.b16 %v2266
    %v2367 = vunpack.c.l.b16 %v2267
    %v2368 = vunpack.c.l.b16 %v2268
    %v2369 = vunpack.c.h.b16 %v2268
    %v2370 = vunpack.c.l.b16 %v2269
    %v2371 = vunpack.c.h.b16 %v2269
    %v2372 = vunpack.c.l.b16 %v2270
    %v2373 = vunpack.c.l.b16 %v2271
    %v2374 = vunpack.c.h.b16 %v2271
    %v2375 = vunpack.c.l.b16 %v2272
    %v2376 = vunpack.c.h.b16 %v2272
    %v2377 = vunpack.c.l.b16 %v2273
    %v2378 = vunpack.c.l.b16 %v2274
    %v2379 = vunpack.c.h.b16 %v2274
    %v2380 = vunpack.c.l.b16 %v2275
    %v2381 = vunpack.c.h.b16 %v2275
    %v2382 = vunpack.c.l.b16 %v2276
    %v2383 = vunpack.c.l.b16 %v2277
    %v2384 = vunpack.c.h.b16 %v2277
    %v2385 = vunpack.c.l.b16 %v2278
    %v2386 = vunpack.c.h.b16 %v2278
    %v2387 = vunpack.c.l.b16 %v2279
    %v2388 = vunpack.c.l.b16 %v2280
    %v2389 = vunpack.c.h.b16 %v2280
    %v2390 = vunpack.c.l.b16 %v2281
    %v2391 = vunpack.c.h.b16 %v2281
    %v2392 = vunpack.c.l.b16 %v2282
    %v2393 = vunpack.c.l.b16 %v2283
    %v2394 = vunpack.c.h.b16 %v2283
    %v2395 = vunpack.c.l.b16 %v2284
    %v2396 = vunpack.c.h.b16 %v2284
    %v2397 = vunpack.c.l.b16 %v2285
    %v2398 = vunpack.c.l.b16 %v2286
    %v2399 = vunpack.c.h.b16 %v2286
    %v2400 = vunpack.c.l.b16 %v2287
    %v2401 = vunpack.c.h.b16 %v2287
    %v2402 = vunpack.c.l.b16 %v2288
    %v2403 = vunpack.c.l.b16 %v2289
    %v2404 = vunpack.c.h.b16 %v2289
    %v2405 = vunpack.c.l.b16 %v2290
    %v2406 = vunpack.c.h.b16 %v2290
    %v2407 = vunpack.c.l.b16 %v2291
    %v2408 = vunpack.c.l.b16 %v2292
    %v2409 = vunpack.c.h.b16 %v2292
    %v2410 = vunpack.c.l.b16 %v2293
    %v2411 = vunpack.c.h.b16 %v2293
    %v2412 = vunpack.c.l.b16 %v2294
    %v2413 = vunpack.c.l.b16 %v2295
    %v2414 = vunpack.c.h.b16 %v2295
    %v2415 = vunpack.c.l.b16 %v2296
    %v2416 = vunpack.c.h.b16 %v2296
    %v2417 = vunpack.c.l.b16 %v2297
    %v2418 = vunpack.c.l.b16 %v2298
    %v2419 = vunpack.c.h.b16 %v2298
    %v2420 = vunpack.c.l.b16 %v2299
    %v2421 = vunpack.c.h.b16 %v2299
    %v2422 = vunpack.c.l.b16 %v2300
    %v2423 = vunpack.c.l.b16 %v2301
    %v2424 = vunpack.c.h.b16 %v2301
    %v2425 = vunpack.c.l.b16 %v2302
    %v2426 = vunpack.c.h.b16 %v2302
    %v2427 = vunpack.c.l.b16 %v2303
    %v2428 = vunpack.c.l.b16 %v2304
    %v2429 = vunpack.c.h.b16 %v2304
    %v2430 = vunpack.c.l.b16 %v2305
    %v2431 = vunpack.c.h.b16 %v2305
    %v2432 = vunpack.c.l.b16 %v2306
    %v2433 = vunpack.c.l.b16 %v2307
    %v2434 = vunpack.c.h.b16 %v2307
    %v2435 = vunpack.c.l.b16 %v2308
    %v2436 = vunpack.c.h.b16 %v2308
    %v2437 = vunpack.c.l.b16 %v2309
    %v2438 = vpack.c.b16 %v2363, %v2358
    %v2439 = vpack.c.b16 %v2364, %v2359
    %v2440 = vpack.c.b16 %v2365, %v2360
    %v2441 = vpack.c.b16 %v2366, %v2361
    %v2442 = vpack.c.b16 %v2367, %v2362
    %v2443 = vpack.c.b16 %v2373, %v2368
    %v2444 = vpack.c.b16 %v2374, %v2369
    %v2445 = vpack.c.b16 %v2375, %v2370
    %v2446 = vpack.c.b16 %v2376, %v2371
    %v2447 = vpack.c.b16 %v2377, %v2372
    %v2448 = vpack.c.b16 %v2383, %v2378
    %v2449 = vpack.c.b16 %v2384, %v2379
    %v2450 = vpack.c.b16 %v2385, %v2380
    %v2451 = vpack.c.b16 %v2386, %v2381
    %v2452 = vpack.c.b16 %v2387, %v2382
    %v2453 = vpack.c.b16 %v2393, %v2388
    %v2454 = vpack.c.b16 %v2394, %v2389
    %v2455 = vpack.c.b16 %v2395, %v2390
    %v2456 = vpack.c.b16 %v2396, %v2391
    %v2457 = vpack.c.b16 %v2397, %v2392
    %v2458 = vpack.c.b16 %v2403, %v2398
    %v2459 = vpack.c.b16 %v2404, %v2399
    %v2460 = vpack.c.b16 %v2405, %v2400
    %v2461 = vpack.c.b16 %v2406, %v2401
    %v2462 = vpack.c.b16 %v2407, %v2402
    %v2463 = vpack.c.b16 %v2413, %v2408
    %v2464 = vpack.c.b16 %v2414, %v2409
    %v2465 = vpack.c.b16 %v2415, %v2410
    %v2466 = vpack.c.b16 %v2416, %v2411
    %v2467 = vpack.c.b16 %v2417, %v2412
    %v2468 = vpack.c.b16 %v2423, %v2418
    %v2469 = vpack.c.b16 %v2424, %v2419
    %v2470 = vpack.c.b16 %v2425, %v2420
    %v2471 = vpack.c.b16 %v2426, %v2421
    %v2472 = vpack.c.b16 %v2427, %v2422
    %v2473 = vpack.c.b16 %v2433, %v2428
    %v2474 = vpack.c.b16 %v2434, %v2429
    %v2475 = vpack.c.b16 %v2435, %v2430
    %v2476 = vpack.c.b16 %v2436, %v2431
    %v2477 = vpack.c.b16 %v2437, %v2432
    %2518 = vmatpush.bf16.msra.mxu0 %v2473
    %2519 = vmatpush.bf16.msra.mxu0 %v2468
    %2520 = vmatpush.bf16.msra.mxu0 %v2463
    %2521 = vmatpush.bf16.msra.mxu0 %v2458
    %2522 = vmatpush.bf16.msra.mxu0 %v2453
    %2523 = vmatpush.bf16.msra.mxu0 %v2448
    %2524 = vmatpush.bf16.msra.mxu0 %v2443
    %2525 = vmatpush.bf16.msra.mxu0 %v2438
    %2526 = vmatmul.bf16.gmra.mxu0 %v2261
    %v2527 = vpop.f32.mrf.mxu0
    %v2528 = vadd.f32 0.0, %v2527
    %v2529 = vpop.f32.mrf.mxu0
    %2530 = vdwg.mxu0
    %2531 = vmatpush.bf16.msra.mxu0 %v2474
    %2532 = vmatpush.bf16.msra.mxu0 %v2469
    %2533 = vmatpush.bf16.msra.mxu0 %v2464
    %2534 = vmatpush.bf16.msra.mxu0 %v2459
    %2535 = vmatpush.bf16.msra.mxu0 %v2454
    %2536 = vmatpush.bf16.msra.mxu0 %v2449
    %2537 = vmatpush.bf16.msra.mxu0 %v2444
    %2538 = vmatpush.bf16.msra.mxu0 %v2439
    %2539 = vmatmul.bf16.gmra.mxu0 %v2261
    %v2540 = vpop.f32.mrf.mxu0
    %v2541 = vadd.f32 0.0, %v2540
    %v2542 = vpop.f32.mrf.mxu0
    %2543 = vdwg.mxu0
    %2544 = vmatpush.bf16.msra.mxu0 %v2475
    %2545 = vmatpush.bf16.msra.mxu0 %v2470
    %2546 = vmatpush.bf16.msra.mxu0 %v2465
    %2547 = vmatpush.bf16.msra.mxu0 %v2460
    %2548 = vmatpush.bf16.msra.mxu0 %v2455
    %2549 = vmatpush.bf16.msra.mxu0 %v2450
    %2550 = vmatpush.bf16.msra.mxu0 %v2445
    %2551 = vmatpush.bf16.msra.mxu0 %v2440
    %2552 = vmatmul.bf16.gmra.mxu0 %v2261
    %v2553 = vpop.f32.mrf.mxu0
    %v2554 = vadd.f32 0.0, %v2553
    %v2555 = vpop.f32.mrf.mxu0
    %2556 = vdwg.mxu0
    %2557 = vmatpush.bf16.msra.mxu0 %v2476
    %2558 = vmatpush.bf16.msra.mxu0 %v2471
    %2559 = vmatpush.bf16.msra.mxu0 %v2466
    %2560 = vmatpush.bf16.msra.mxu0 %v2461
    %2561 = vmatpush.bf16.msra.mxu0 %v2456
    %2562 = vmatpush.bf16.msra.mxu0 %v2451
    %2563 = vmatpush.bf16.msra.mxu0 %v2446
    %2564 = vmatpush.bf16.msra.mxu0 %v2441
    %2565 = vmatmul.bf16.gmra.mxu0 %v2261
    %v2566 = vpop.f32.mrf.mxu0
    %v2567 = vadd.f32 0.0, %v2566
    %v2568 = vpop.f32.mrf.mxu0
    %2569 = vdwg.mxu0
    %2570 = vmatpush.bf16.msra.mxu0 %v2477
    %2571 = vmatpush.bf16.msra.mxu0 %v2472
    %2572 = vmatpush.bf16.msra.mxu0 %v2467
    %2573 = vmatpush.bf16.msra.mxu0 %v2462
    %2574 = vmatpush.bf16.msra.mxu0 %v2457
    %2575 = vmatpush.bf16.msra.mxu0 %v2452
    %2576 = vmatpush.bf16.msra.mxu0 %v2447
    %2577 = vmatpush.bf16.msra.mxu0 %v2442
    %2578 = vmatmul.bf16.gmra.mxu0 %v2261
    %v2579 = vpop.f32.mrf.mxu0
    %v2580 = vadd.f32 0.0, %v2579
    %v2581 = vpop.f32.mrf.mxu0
    %2582 = vdwg.mxu0
    %v2583 = vadd.f32 %v2567, %v2206
    %v2584 = vadd.f32 %v2580, %v2207
    %v2585 = vmax.f32 %v2583, %v2584
    %2586 = vmax.xlane.f32.xlu0 %v2585
    %v2587 = vpop.xlane.xlu0 %2586
    %v2588 = vsub.f32 %v2583, %v2587
    %v2589 = vsub.f32 %v2584, %v2587
    %v2590 = vmul.f32 %v2588, 1.442695
    %v2591 = vpow.pop %v2590
    %v2592 = vmul.f32 %v2589, 1.442695
    %v2593 = vpow.pop %v2592
    %v2594 = vadd.f32 %v2591, %v2593
    %2595 = vadd.xlane.f32.xlu0 %v2594
    %v2596 = vpop.xlane.xlu0 %2595
    %v2597 = vlog2.pop %v2596
    %v2598 = vmul.f32 %v2597, 0.6931472
    %v2599 = vadd.f32 %v2587, %v2598
    %v2600 = vld [vmem:[%s3] sm:$0xff]
    %v2601 = vld [vmem:[%s3 + $0x8] sm:$0xff]
    %v2602 = vmul.f32 %v2600, %v2583
    %v2603 = vmul.f32 %v2601, %v2584
    %v2604 = vadd.f32 %v2602, %v2603
    %2605 = vadd.xlane.f32.xlu0 %v2604
    %v2606 = vpop.xlane.xlu0 %2605
    %v2607 = vsub.f32 %v2599, %v2606
    %v2608 = vadd.f32 %v2607, 0.0
    %s2609 = scalar_lea.vmem [#allocation3], 24
    %v2610 = vld [vmem:[%s2609] sm:$0xff]
    %v2611 = vld [vmem:[%s2609 + $0x8] sm:$0xff]
    %v2612 = vld [vmem:[%s2609 + $0x10] sm:$0xff]
    %v2613 = vadd.f32 %v2610, %v2528
    %v2614 = vxor.u32 %v2613, 2147483648
    %v2615 = vmul.f32 %v2614, 1.442695
    %v2616 = vpow.pop %v2615
    %v2617 = vadd.f32 %v2616, 1.0
    %v2618 = vrcp.pop %v2617
    %v2619 = vmul.f32 %v2617, %v2618
    %v2620 = vsub.f32 1.0, %v2619
    %v2621 = vmul.f32 %v2618, %v2620
    %v2622 = vadd.f32 %v2618, %v2621
    %vm2623 = vweird.f32 %v2617
    %vm2624 = vweird.f32 %v2618
    %vm2625 = vmor %vm2623, %vm2624
    %v2626 = vsel %vm2625, %v2618, %v2622
    %v2627 = vand.u32 2147483647, %v2617
    %vm2628 = vcmp.eq.f32.partialorder %v2627, 8.507059e+37
    %v2629 = vand.u32 %v2617, 2147483648
    %v2630 = vor.u32 1.1754944e-38, %v2629
    %v2631 = vsel %vm2628, %v2630, %v2626
    %v2632 = vmul.f32 1.0, %v2631
    %v2633 = vadd.f32 %v2611, %v2541
    %v2634 = vxor.u32 %v2633, 2147483648
    %v2635 = vmul.f32 %v2634, 1.442695
    %v2636 = vpow.pop %v2635
    %v2637 = vadd.f32 %v2636, 1.0
    %v2638 = vrcp.pop %v2637
    %v2639 = vmul.f32 %v2637, %v2638
    %v2640 = vsub.f32 1.0, %v2639
    %v2641 = vmul.f32 %v2638, %v2640
    %v2642 = vadd.f32 %v2638, %v2641
    %vm2643 = vweird.f32 %v2637
    %vm2644 = vweird.f32 %v2638
    %vm2645 = vmor %vm2643, %vm2644
    %v2646 = vsel %vm2645, %v2638, %v2642
    %v2647 = vand.u32 2147483647, %v2637
    %vm2648 = vcmp.eq.f32.partialorder %v2647, 8.507059e+37
    %v2649 = vand.u32 %v2637, 2147483648
    %v2650 = vor.u32 1.1754944e-38, %v2649
    %v2651 = vsel %vm2648, %v2650, %v2646
    %v2652 = vmul.f32 1.0, %v2651
    %v2653 = vadd.f32 %v2554, %v2202
    %v2654 = vmul.f32 %v2632, %v2653
    %v2655 = vadd.f32 %v2612, %v2654
    %v2656 = vtanh.pop %v2655
    %v2657 = vsub.f32 1.0, %v2652
    %v2658 = vmul.f32 %v2657, %v2656
    %v2659 = vmul.f32 %v2652, %v2260
    %v2660 = vadd.f32 %v2658, %v2659
    %v2661 = vpack.c.bf16 %v2660, %v2660
    %2662 = vmatpush.bf16.msra.mxu0 %v2473
    %2663 = vmatpush.bf16.msra.mxu0 %v2468
    %2664 = vmatpush.bf16.msra.mxu0 %v2463
    %2665 = vmatpush.bf16.msra.mxu0 %v2458
    %2666 = vmatpush.bf16.msra.mxu0 %v2453
    %2667 = vmatpush.bf16.msra.mxu0 %v2448
    %2668 = vmatpush.bf16.msra.mxu0 %v2443
    %2669 = vmatpush.bf16.msra.mxu0 %v2438
    %2670 = vmatmul.bf16.gmra.mxu0 %v2661
    %v2671 = vpop.f32.mrf.mxu0
    %v2672 = vadd.f32 0.0, %v2671
    %v2673 = vpop.f32.mrf.mxu0
    %2674 = vdwg.mxu0
    %2675 = vmatpush.bf16.msra.mxu0 %v2474
    %2676 = vmatpush.bf16.msra.mxu0 %v2469
    %2677 = vmatpush.bf16.msra.mxu0 %v2464
    %2678 = vmatpush.bf16.msra.mxu0 %v2459
    %2679 = vmatpush.bf16.msra.mxu0 %v2454
    %2680 = vmatpush.bf16.msra.mxu0 %v2449
    %2681 = vmatpush.bf16.msra.mxu0 %v2444
    %2682 = vmatpush.bf16.msra.mxu0 %v2439
    %2683 = vmatmul.bf16.gmra.mxu0 %v2661
    %v2684 = vpop.f32.mrf.mxu0
    %v2685 = vadd.f32 0.0, %v2684
    %v2686 = vpop.f32.mrf.mxu0
    %2687 = vdwg.mxu0
    %2688 = vmatpush.bf16.msra.mxu0 %v2475
    %2689 = vmatpush.bf16.msra.mxu0 %v2470
    %2690 = vmatpush.bf16.msra.mxu0 %v2465
    %2691 = vmatpush.bf16.msra.mxu0 %v2460
    %2692 = vmatpush.bf16.msra.mxu0 %v2455
    %2693 = vmatpush.bf16.msra.mxu0 %v2450
    %2694 = vmatpush.bf16.msra.mxu0 %v2445
    %2695 = vmatpush.bf16.msra.mxu0 %v2440
    %2696 = vmatmul.bf16.gmra.mxu0 %v2661
    %v2697 = vpop.f32.mrf.mxu0
    %v2698 = vadd.f32 0.0, %v2697
    %v2699 = vpop.f32.mrf.mxu0
    %2700 = vdwg.mxu0
    %2701 = vmatpush.bf16.msra.mxu0 %v2476
    %2702 = vmatpush.bf16.msra.mxu0 %v2471
    %2703 = vmatpush.bf16.msra.mxu0 %v2466
    %2704 = vmatpush.bf16.msra.mxu0 %v2461
    %2705 = vmatpush.bf16.msra.mxu0 %v2456
    %2706 = vmatpush.bf16.msra.mxu0 %v2451
    %2707 = vmatpush.bf16.msra.mxu0 %v2446
    %2708 = vmatpush.bf16.msra.mxu0 %v2441
    %2709 = vmatmul.bf16.gmra.mxu0 %v2661
    %v2710 = vpop.f32.mrf.mxu0
    %v2711 = vadd.f32 0.0, %v2710
    %v2712 = vpop.f32.mrf.mxu0
    %2713 = vdwg.mxu0
    %2714 = vmatpush.bf16.msra.mxu0 %v2477
    %2715 = vmatpush.bf16.msra.mxu0 %v2472
    %2716 = vmatpush.bf16.msra.mxu0 %v2467
    %2717 = vmatpush.bf16.msra.mxu0 %v2462
    %2718 = vmatpush.bf16.msra.mxu0 %v2457
    %2719 = vmatpush.bf16.msra.mxu0 %v2452
    %2720 = vmatpush.bf16.msra.mxu0 %v2447
    %2721 = vmatpush.bf16.msra.mxu0 %v2442
    %2722 = vmatmul.bf16.gmra.mxu0 %v2661
    %v2723 = vpop.f32.mrf.mxu0
    %v2724 = vadd.f32 0.0, %v2723
    %v2725 = vpop.f32.mrf.mxu0
    %2726 = vdwg.mxu0
    %v2727 = vadd.f32 %v2711, %v2206
    %v2728 = vadd.f32 %v2724, %v2207
    %v2729 = vmax.f32 %v2727, %v2728
    %2730 = vmax.xlane.f32.xlu0 %v2729
    %v2731 = vpop.xlane.xlu0 %2730
    %v2732 = vsub.f32 %v2727, %v2731
    %v2733 = vsub.f32 %v2728, %v2731
    %v2734 = vmul.f32 %v2732, 1.442695
    %v2735 = vpow.pop %v2734
    %v2736 = vmul.f32 %v2733, 1.442695
    %v2737 = vpow.pop %v2736
    %v2738 = vadd.f32 %v2735, %v2737
    %2739 = vadd.xlane.f32.xlu0 %v2738
    %v2740 = vpop.xlane.xlu0 %2739
    %v2741 = vlog2.pop %v2740
    %v2742 = vmul.f32 %v2741, 0.6931472
    %v2743 = vadd.f32 %v2731, %v2742
    %s2744 = scalar_lea.vmem %s3, 16
    %v2745 = vld [vmem:[%s2744] sm:$0xff]
    %v2746 = vld [vmem:[%s2744 + $0x8] sm:$0xff]
    %v2747 = vmul.f32 %v2745, %v2727
    %v2748 = vmul.f32 %v2746, %v2728
    %v2749 = vadd.f32 %v2747, %v2748
    %2750 = vadd.xlane.f32.xlu0 %v2749
    %v2751 = vpop.xlane.xlu0 %2750
    %v2752 = vsub.f32 %v2743, %v2751
    %v2753 = vadd.f32 %v2608, %v2752
    %s2754 = scalar_lea.vmem [#allocation3], 48
    %v2755 = vld [vmem:[%s2754] sm:$0xff]
    %v2756 = vld [vmem:[%s2754 + $0x8] sm:$0xff]
    %v2757 = vld [vmem:[%s2754 + $0x10] sm:$0xff]
    %v2758 = vadd.f32 %v2755, %v2672
    %v2759 = vxor.u32 %v2758, 2147483648
    %v2760 = vmul.f32 %v2759, 1.442695
    %v2761 = vpow.pop %v2760
    %v2762 = vadd.f32 %v2761, 1.0
    %v2763 = vrcp.pop %v2762
    %v2764 = vmul.f32 %v2762, %v2763
    %v2765 = vsub.f32 1.0, %v2764
    %v2766 = vmul.f32 %v2763, %v2765
    %v2767 = vadd.f32 %v2763, %v2766
    %vm2768 = vweird.f32 %v2762
    %vm2769 = vweird.f32 %v2763
    %vm2770 = vmor %vm2768, %vm2769
    %v2771 = vsel %vm2770, %v2763, %v2767
    %v2772 = vand.u32 2147483647, %v2762
    %vm2773 = vcmp.eq.f32.partialorder %v2772, 8.507059e+37
    %v2774 = vand.u32 %v2762, 2147483648
    %v2775 = vor.u32 1.1754944e-38, %v2774
    %v2776 = vsel %vm2773, %v2775, %v2771
    %v2777 = vmul.f32 1.0, %v2776
    %v2778 = vadd.f32 %v2756, %v2685
    %v2779 = vxor.u32 %v2778, 2147483648
    %v2780 = vmul.f32 %v2779, 1.442695
    %v2781 = vpow.pop %v2780
    %v2782 = vadd.f32 %v2781, 1.0
    %v2783 = vrcp.pop %v2782
    %v2784 = vmul.f32 %v2782, %v2783
    %v2785 = vsub.f32 1.0, %v2784
    %v2786 = vmul.f32 %v2783, %v2785
    %v2787 = vadd.f32 %v2783, %v2786
    %vm2788 = vweird.f32 %v2782
    %vm2789 = vweird.f32 %v2783
    %vm2790 = vmor %vm2788, %vm2789
    %v2791 = vsel %vm2790, %v2783, %v2787
    %v2792 = vand.u32 2147483647, %v2782
    %vm2793 = vcmp.eq.f32.partialorder %v2792, 8.507059e+37
    %v2794 = vand.u32 %v2782, 2147483648
    %v2795 = vor.u32 1.1754944e-38, %v2794
    %v2796 = vsel %vm2793, %v2795, %v2791
    %v2797 = vmul.f32 1.0, %v2796
    %v2798 = vadd.f32 %v2698, %v2202
    %v2799 = vmul.f32 %v2777, %v2798
    %v2800 = vadd.f32 %v2757, %v2799
    %v2801 = vtanh.pop %v2800
    %v2802 = vsub.f32 1.0, %v2797
    %v2803 = vmul.f32 %v2802, %v2801
    %v2804 = vmul.f32 %v2797, %v2660
    %v2805 = vadd.f32 %v2803, %v2804
    %v2806 = vpack.c.bf16 %v2805, %v2805
    %2807 = vmatpush.bf16.msra.mxu0 %v2473
    %2808 = vmatpush.bf16.msra.mxu0 %v2468
    %2809 = vmatpush.bf16.msra.mxu0 %v2463
    %2810 = vmatpush.bf16.msra.mxu0 %v2458
    %2811 = vmatpush.bf16.msra.mxu0 %v2453
    %2812 = vmatpush.bf16.msra.mxu0 %v2448
    %2813 = vmatpush.bf16.msra.mxu0 %v2443
    %2814 = vmatpush.bf16.msra.mxu0 %v2438
    %2815 = vmatmul.bf16.gmra.mxu0 %v2806
    %v2816 = vpop.f32.mrf.mxu0
    %v2817 = vadd.f32 0.0, %v2816
    %v2818 = vpop.f32.mrf.mxu0
    %2819 = vdwg.mxu0
    %2820 = vmatpush.bf16.msra.mxu0 %v2474
    %2821 = vmatpush.bf16.msra.mxu0 %v2469
    %2822 = vmatpush.bf16.msra.mxu0 %v2464
    %2823 = vmatpush.bf16.msra.mxu0 %v2459
    %2824 = vmatpush.bf16.msra.mxu0 %v2454
    %2825 = vmatpush.bf16.msra.mxu0 %v2449
    %2826 = vmatpush.bf16.msra.mxu0 %v2444
    %2827 = vmatpush.bf16.msra.mxu0 %v2439
    %2828 = vmatmul.bf16.gmra.mxu0 %v2806
    %v2829 = vpop.f32.mrf.mxu0
    %v2830 = vadd.f32 0.0, %v2829
    %v2831 = vpop.f32.mrf.mxu0
    %2832 = vdwg.mxu0
    %2833 = vmatpush.bf16.msra.mxu0 %v2475
    %2834 = vmatpush.bf16.msra.mxu0 %v2470
    %2835 = vmatpush.bf16.msra.mxu0 %v2465
    %2836 = vmatpush.bf16.msra.mxu0 %v2460
    %2837 = vmatpush.bf16.msra.mxu0 %v2455
    %2838 = vmatpush.bf16.msra.mxu0 %v2450
    %2839 = vmatpush.bf16.msra.mxu0 %v2445
    %2840 = vmatpush.bf16.msra.mxu0 %v2440
    %2841 = vmatmul.bf16.gmra.mxu0 %v2806
    %v2842 = vpop.f32.mrf.mxu0
    %v2843 = vadd.f32 0.0, %v2842
    %v2844 = vpop.f32.mrf.mxu0
    %2845 = vdwg.mxu0
    %2846 = vmatpush.bf16.msra.mxu0 %v2476
    %2847 = vmatpush.bf16.msra.mxu0 %v2471
    %2848 = vmatpush.bf16.msra.mxu0 %v2466
    %2849 = vmatpush.bf16.msra.mxu0 %v2461
    %2850 = vmatpush.bf16.msra.mxu0 %v2456
    %2851 = vmatpush.bf16.msra.mxu0 %v2451
    %2852 = vmatpush.bf16.msra.mxu0 %v2446
    %2853 = vmatpush.bf16.msra.mxu0 %v2441
    %2854 = vmatmul.bf16.gmra.mxu0 %v2806
    %v2855 = vpop.f32.mrf.mxu0
    %v2856 = vadd.f32 0.0, %v2855
    %v2857 = vpop.f32.mrf.mxu0
    %2858 = vdwg.mxu0
    %2859 = vmatpush.bf16.msra.mxu0 %v2477
    %2860 = vmatpush.bf16.msra.mxu0 %v2472
    %2861 = vmatpush.bf16.msra.mxu0 %v2467
    %2862 = vmatpush.bf16.msra.mxu0 %v2462
    %2863 = vmatpush.bf16.msra.mxu0 %v2457
    %2864 = vmatpush.bf16.msra.mxu0 %v2452
    %2865 = vmatpush.bf16.msra.mxu0 %v2447
    %2866 = vmatpush.bf16.msra.mxu0 %v2442
    %2867 = vmatmul.bf16.gmra.mxu0 %v2806
    %v2868 = vpop.f32.mrf.mxu0
    %v2869 = vadd.f32 0.0, %v2868
    %v2870 = vpop.f32.mrf.mxu0
    %2871 = vdwg.mxu0
    %v2872 = vadd.f32 %v2856, %v2206
    %v2873 = vadd.f32 %v2869, %v2207
    %v2874 = vmax.f32 %v2872, %v2873
    %2875 = vmax.xlane.f32.xlu0 %v2874
    %v2876 = vpop.xlane.xlu0 %2875
    %v2877 = vsub.f32 %v2872, %v2876
    %v2878 = vsub.f32 %v2873, %v2876
    %v2879 = vmul.f32 %v2877, 1.442695
    %v2880 = vpow.pop %v2879
    %v2881 = vmul.f32 %v2878, 1.442695
    %v2882 = vpow.pop %v2881
    %v2883 = vadd.f32 %v2880, %v2882
    %2884 = vadd.xlane.f32.xlu0 %v2883
    %v2885 = vpop.xlane.xlu0 %2884
    %v2886 = vlog2.pop %v2885
    %v2887 = vmul.f32 %v2886, 0.6931472
    %v2888 = vadd.f32 %v2876, %v2887
    %s2889 = scalar_lea.vmem %s3, 32
    %v2890 = vld [vmem:[%s2889] sm:$0xff]
    %v2891 = vld [vmem:[%s2889 + $0x8] sm:$0xff]
    %v2892 = vmul.f32 %v2890, %v2872
    %v2893 = vmul.f32 %v2891, %v2873
    %v2894 = vadd.f32 %v2892, %v2893
    %2895 = vadd.xlane.f32.xlu0 %v2894
    %v2896 = vpop.xlane.xlu0 %2895
    %v2897 = vsub.f32 %v2888, %v2896
    %v2898 = vadd.f32 %v2753, %v2897
    %s2899 = scalar_lea.vmem [#allocation3], 72
    %v2900 = vld [vmem:[%s2899] sm:$0xff]
    %v2901 = vld [vmem:[%s2899 + $0x8] sm:$0xff]
    %v2902 = vld [vmem:[%s2899 + $0x10] sm:$0xff]
    %v2903 = vadd.f32 %v2900, %v2817
    %v2904 = vxor.u32 %v2903, 2147483648
    %v2905 = vmul.f32 %v2904, 1.442695
    %v2906 = vpow.pop %v2905
    %v2907 = vadd.f32 %v2906, 1.0
    %v2908 = vrcp.pop %v2907
    %v2909 = vmul.f32 %v2907, %v2908
    %v2910 = vsub.f32 1.0, %v2909
    %v2911 = vmul.f32 %v2908, %v2910
    %v2912 = vadd.f32 %v2908, %v2911
    %vm2913 = vweird.f32 %v2907
    %vm2914 = vweird.f32 %v2908
    %vm2915 = vmor %vm2913, %vm2914
    %v2916 = vsel %vm2915, %v2908, %v2912
    %v2917 = vand.u32 2147483647, %v2907
    %vm2918 = vcmp.eq.f32.partialorder %v2917, 8.507059e+37
    %v2919 = vand.u32 %v2907, 2147483648
    %v2920 = vor.u32 1.1754944e-38, %v2919
    %v2921 = vsel %vm2918, %v2920, %v2916
    %v2922 = vmul.f32 1.0, %v2921
    %v2923 = vadd.f32 %v2901, %v2830
    %v2924 = vxor.u32 %v2923, 2147483648
    %v2925 = vmul.f32 %v2924, 1.442695
    %v2926 = vpow.pop %v2925
    %v2927 = vadd.f32 %v2926, 1.0
    %v2928 = vrcp.pop %v2927
    %v2929 = vmul.f32 %v2927, %v2928
    %v2930 = vsub.f32 1.0, %v2929
    %v2931 = vmul.f32 %v2928, %v2930
    %v2932 = vadd.f32 %v2928, %v2931
    %vm2933 = vweird.f32 %v2927
    %vm2934 = vweird.f32 %v2928
    %vm2935 = vmor %vm2933, %vm2934
    %v2936 = vsel %vm2935, %v2928, %v2932
    %v2937 = vand.u32 2147483647, %v2927
    %vm2938 = vcmp.eq.f32.partialorder %v2937, 8.507059e+37
    %v2939 = vand.u32 %v2927, 2147483648
    %v2940 = vor.u32 1.1754944e-38, %v2939
    %v2941 = vsel %vm2938, %v2940, %v2936
    %v2942 = vmul.f32 1.0, %v2941
    %v2943 = vadd.f32 %v2843, %v2202
    %v2944 = vmul.f32 %v2922, %v2943
    %v2945 = vadd.f32 %v2902, %v2944
    %v2946 = vtanh.pop %v2945
    %v2947 = vsub.f32 1.0, %v2942
    %v2948 = vmul.f32 %v2947, %v2946
    %v2949 = vmul.f32 %v2942, %v2805
    %v2950 = vadd.f32 %v2948, %v2949
    %v2951 = vpack.c.bf16 %v2950, %v2950
    %2952 = vmatpush.bf16.msra.mxu0 %v2473
    %2953 = vmatpush.bf16.msra.mxu0 %v2468
    %2954 = vmatpush.bf16.msra.mxu0 %v2463
    %2955 = vmatpush.bf16.msra.mxu0 %v2458
    %2956 = vmatpush.bf16.msra.mxu0 %v2453
    %2957 = vmatpush.bf16.msra.mxu0 %v2448
    %2958 = vmatpush.bf16.msra.mxu0 %v2443
    %2959 = vmatpush.bf16.msra.mxu0 %v2438
    %2960 = vmatmul.bf16.gmra.mxu0 %v2951
    %v2961 = vpop.f32.mrf.mxu0
    %v2962 = vadd.f32 0.0, %v2961
    %v2963 = vpop.f32.mrf.mxu0
    %2964 = vdwg.mxu0
    %2965 = vmatpush.bf16.msra.mxu0 %v2474
    %2966 = vmatpush.bf16.msra.mxu0 %v2469
    %2967 = vmatpush.bf16.msra.mxu0 %v2464
    %2968 = vmatpush.bf16.msra.mxu0 %v2459
    %2969 = vmatpush.bf16.msra.mxu0 %v2454
    %2970 = vmatpush.bf16.msra.mxu0 %v2449
    %2971 = vmatpush.bf16.msra.mxu0 %v2444
    %2972 = vmatpush.bf16.msra.mxu0 %v2439
    %2973 = vmatmul.bf16.gmra.mxu0 %v2951
    %v2974 = vpop.f32.mrf.mxu0
    %v2975 = vadd.f32 0.0, %v2974
    %v2976 = vpop.f32.mrf.mxu0
    %2977 = vdwg.mxu0
    %2978 = vmatpush.bf16.msra.mxu0 %v2475
    %2979 = vmatpush.bf16.msra.mxu0 %v2470
    %2980 = vmatpush.bf16.msra.mxu0 %v2465
    %2981 = vmatpush.bf16.msra.mxu0 %v2460
    %2982 = vmatpush.bf16.msra.mxu0 %v2455
    %2983 = vmatpush.bf16.msra.mxu0 %v2450
    %2984 = vmatpush.bf16.msra.mxu0 %v2445
    %2985 = vmatpush.bf16.msra.mxu0 %v2440
    %2986 = vmatmul.bf16.gmra.mxu0 %v2951
    %v2987 = vpop.f32.mrf.mxu0
    %v2988 = vadd.f32 0.0, %v2987
    %v2989 = vpop.f32.mrf.mxu0
    %2990 = vdwg.mxu0
    %2991 = vmatpush.bf16.msra.mxu0 %v2476
    %2992 = vmatpush.bf16.msra.mxu0 %v2471
    %2993 = vmatpush.bf16.msra.mxu0 %v2466
    %2994 = vmatpush.bf16.msra.mxu0 %v2461
    %2995 = vmatpush.bf16.msra.mxu0 %v2456
    %2996 = vmatpush.bf16.msra.mxu0 %v2451
    %2997 = vmatpush.bf16.msra.mxu0 %v2446
    %2998 = vmatpush.bf16.msra.mxu0 %v2441
    %2999 = vmatmul.bf16.gmra.mxu0 %v2951
    %v3000 = vpop.f32.mrf.mxu0
    %v3001 = vadd.f32 0.0, %v3000
    %v3002 = vpop.f32.mrf.mxu0
    %3003 = vdwg.mxu0
    %3004 = vmatpush.bf16.msra.mxu0 %v2477
    %3005 = vmatpush.bf16.msra.mxu0 %v2472
    %3006 = vmatpush.bf16.msra.mxu0 %v2467
    %3007 = vmatpush.bf16.msra.mxu0 %v2462
    %3008 = vmatpush.bf16.msra.mxu0 %v2457
    %3009 = vmatpush.bf16.msra.mxu0 %v2452
    %3010 = vmatpush.bf16.msra.mxu0 %v2447
    %3011 = vmatpush.bf16.msra.mxu0 %v2442
    %3012 = vmatmul.bf16.gmra.mxu0 %v2951
    %v3013 = vpop.f32.mrf.mxu0
    %v3014 = vadd.f32 0.0, %v3013
    %v3015 = vpop.f32.mrf.mxu0
    %3016 = vdwg.mxu0
    %v3017 = vadd.f32 %v3001, %v2206
    %v3018 = vadd.f32 %v3014, %v2207
    %v3019 = vmax.f32 %v3017, %v3018
    %3020 = vmax.xlane.f32.xlu0 %v3019
    %v3021 = vpop.xlane.xlu0 %3020
    %v3022 = vsub.f32 %v3017, %v3021
    %v3023 = vsub.f32 %v3018, %v3021
    %v3024 = vmul.f32 %v3022, 1.442695
    %v3025 = vpow.pop %v3024
    %v3026 = vmul.f32 %v3023, 1.442695
    %v3027 = vpow.pop %v3026
    %v3028 = vadd.f32 %v3025, %v3027
    %3029 = vadd.xlane.f32.xlu0 %v3028
    %v3030 = vpop.xlane.xlu0 %3029
    %v3031 = vlog2.pop %v3030
    %v3032 = vmul.f32 %v3031, 0.6931472
    %v3033 = vadd.f32 %v3021, %v3032
    %s3034 = scalar_lea.vmem %s3, 48
    %v3035 = vld [vmem:[%s3034] sm:$0xff]
    %v3036 = vld [vmem:[%s3034 + $0x8] sm:$0xff]
    %v3037 = vmul.f32 %v3035, %v3017
    %v3038 = vmul.f32 %v3036, %v3018
    %v3039 = vadd.f32 %v3037, %v3038
    %3040 = vadd.xlane.f32.xlu0 %v3039
    %v3041 = vpop.xlane.xlu0 %3040
    %v3042 = vsub.f32 %v3033, %v3041
    %v3043 = vadd.f32 %v2898, %v3042
    %s3044 = scalar_lea.vmem [#allocation3], 96
    %v3045 = vld [vmem:[%s3044] sm:$0xff]
    %v3046 = vld [vmem:[%s3044 + $0x8] sm:$0xff]
    %v3047 = vld [vmem:[%s3044 + $0x10] sm:$0xff]
    %v3048 = vadd.f32 %v3045, %v2962
    %v3049 = vxor.u32 %v3048, 2147483648
    %v3050 = vmul.f32 %v3049, 1.442695
    %v3051 = vpow.pop %v3050
    %v3052 = vadd.f32 %v3051, 1.0
    %v3053 = vrcp.pop %v3052
    %v3054 = vmul.f32 %v3052, %v3053
    %v3055 = vsub.f32 1.0, %v3054
    %v3056 = vmul.f32 %v3053, %v3055
    %v3057 = vadd.f32 %v3053, %v3056
    %vm3058 = vweird.f32 %v3052
    %vm3059 = vweird.f32 %v3053
    %vm3060 = vmor %vm3058, %vm3059
    %v3061 = vsel %vm3060, %v3053, %v3057
    %v3062 = vand.u32 2147483647, %v3052
    %vm3063 = vcmp.eq.f32.partialorder %v3062, 8.507059e+37
    %v3064 = vand.u32 %v3052, 2147483648
    %v3065 = vor.u32 1.1754944e-38, %v3064
    %v3066 = vsel %vm3063, %v3065, %v3061
    %v3067 = vmul.f32 1.0, %v3066
    %v3068 = vadd.f32 %v3046, %v2975
    %v3069 = vxor.u32 %v3068, 2147483648
    %v3070 = vmul.f32 %v3069, 1.442695
    %v3071 = vpow.pop %v3070
    %v3072 = vadd.f32 %v3071, 1.0
    %v3073 = vrcp.pop %v3072
    %v3074 = vmul.f32 %v3072, %v3073
    %v3075 = vsub.f32 1.0, %v3074
    %v3076 = vmul.f32 %v3073, %v3075
    %v3077 = vadd.f32 %v3073, %v3076
    %vm3078 = vweird.f32 %v3072
    %vm3079 = vweird.f32 %v3073
    %vm3080 = vmor %vm3078, %vm3079
    %v3081 = vsel %vm3080, %v3073, %v3077
    %v3082 = vand.u32 2147483647, %v3072
    %vm3083 = vcmp.eq.f32.partialorder %v3082, 8.507059e+37
    %v3084 = vand.u32 %v3072, 2147483648
    %v3085 = vor.u32 1.1754944e-38, %v3084
    %v3086 = vsel %vm3083, %v3085, %v3081
    %v3087 = vmul.f32 1.0, %v3086
    %v3088 = vadd.f32 %v2988, %v2202
    %v3089 = vmul.f32 %v3067, %v3088
    %v3090 = vadd.f32 %v3047, %v3089
    %v3091 = vtanh.pop %v3090
    %v3092 = vsub.f32 1.0, %v3087
    %v3093 = vmul.f32 %v3092, %v3091
    %v3094 = vmul.f32 %v3087, %v2950
    %v3095 = vadd.f32 %v3093, %v3094
    %v3096 = vpack.c.bf16 %v3095, %v3095
    %3097 = vmatpush.bf16.msra.mxu0 %v2473
    %3098 = vmatpush.bf16.msra.mxu0 %v2468
    %3099 = vmatpush.bf16.msra.mxu0 %v2463
    %3100 = vmatpush.bf16.msra.mxu0 %v2458
    %3101 = vmatpush.bf16.msra.mxu0 %v2453
    %3102 = vmatpush.bf16.msra.mxu0 %v2448
    %3103 = vmatpush.bf16.msra.mxu0 %v2443
    %3104 = vmatpush.bf16.msra.mxu0 %v2438
    %3105 = vmatmul.bf16.gmra.mxu0 %v3096
    %v3106 = vpop.f32.mrf.mxu0
    %v3107 = vadd.f32 0.0, %v3106
    %v3108 = vpop.f32.mrf.mxu0
    %3109 = vdwg.mxu0
    %3110 = vmatpush.bf16.msra.mxu0 %v2474
    %3111 = vmatpush.bf16.msra.mxu0 %v2469
    %3112 = vmatpush.bf16.msra.mxu0 %v2464
    %3113 = vmatpush.bf16.msra.mxu0 %v2459
    %3114 = vmatpush.bf16.msra.mxu0 %v2454
    %3115 = vmatpush.bf16.msra.mxu0 %v2449
    %3116 = vmatpush.bf16.msra.mxu0 %v2444
    %3117 = vmatpush.bf16.msra.mxu0 %v2439
    %3118 = vmatmul.bf16.gmra.mxu0 %v3096
    %v3119 = vpop.f32.mrf.mxu0
    %v3120 = vadd.f32 0.0, %v3119
    %v3121 = vpop.f32.mrf.mxu0
    %3122 = vdwg.mxu0
    %3123 = vmatpush.bf16.msra.mxu0 %v2475
    %3124 = vmatpush.bf16.msra.mxu0 %v2470
    %3125 = vmatpush.bf16.msra.mxu0 %v2465
    %3126 = vmatpush.bf16.msra.mxu0 %v2460
    %3127 = vmatpush.bf16.msra.mxu0 %v2455
    %3128 = vmatpush.bf16.msra.mxu0 %v2450
    %3129 = vmatpush.bf16.msra.mxu0 %v2445
    %3130 = vmatpush.bf16.msra.mxu0 %v2440
    %3131 = vmatmul.bf16.gmra.mxu0 %v3096
    %v3132 = vpop.f32.mrf.mxu0
    %v3133 = vadd.f32 0.0, %v3132
    %v3134 = vpop.f32.mrf.mxu0
    %3135 = vdwg.mxu0
    %3136 = vmatpush.bf16.msra.mxu0 %v2476
    %3137 = vmatpush.bf16.msra.mxu0 %v2471
    %3138 = vmatpush.bf16.msra.mxu0 %v2466
    %3139 = vmatpush.bf16.msra.mxu0 %v2461
    %3140 = vmatpush.bf16.msra.mxu0 %v2456
    %3141 = vmatpush.bf16.msra.mxu0 %v2451
    %3142 = vmatpush.bf16.msra.mxu0 %v2446
    %3143 = vmatpush.bf16.msra.mxu0 %v2441
    %3144 = vmatmul.bf16.gmra.mxu0 %v3096
    %v3145 = vpop.f32.mrf.mxu0
    %v3146 = vadd.f32 0.0, %v3145
    %v3147 = vpop.f32.mrf.mxu0
    %3148 = vdwg.mxu0
    %3149 = vmatpush.bf16.msra.mxu0 %v2477
    %3150 = vmatpush.bf16.msra.mxu0 %v2472
    %3151 = vmatpush.bf16.msra.mxu0 %v2467
    %3152 = vmatpush.bf16.msra.mxu0 %v2462
    %3153 = vmatpush.bf16.msra.mxu0 %v2457
    %3154 = vmatpush.bf16.msra.mxu0 %v2452
    %3155 = vmatpush.bf16.msra.mxu0 %v2447
    %3156 = vmatpush.bf16.msra.mxu0 %v2442
    %3157 = vmatmul.bf16.gmra.mxu0 %v3096
    %v3158 = vpop.f32.mrf.mxu0
    %v3159 = vadd.f32 0.0, %v3158
    %v3160 = vpop.f32.mrf.mxu0
    %3161 = vdwg.mxu0
    %v3162 = vadd.f32 %v3146, %v2206
    %v3163 = vadd.f32 %v3159, %v2207
    %v3164 = vmax.f32 %v3162, %v3163
    %3165 = vmax.xlane.f32.xlu0 %v3164
    %v3166 = vpop.xlane.xlu0 %3165
    %v3167 = vsub.f32 %v3162, %v3166
    %v3168 = vsub.f32 %v3163, %v3166
    %v3169 = vmul.f32 %v3167, 1.442695
    %v3170 = vpow.pop %v3169
    %v3171 = vmul.f32 %v3168, 1.442695
    %v3172 = vpow.pop %v3171
    %v3173 = vadd.f32 %v3170, %v3172
    %3174 = vadd.xlane.f32.xlu0 %v3173
    %v3175 = vpop.xlane.xlu0 %3174
    %v3176 = vlog2.pop %v3175
    %v3177 = vmul.f32 %v3176, 0.6931472
    %v3178 = vadd.f32 %v3166, %v3177
    %s3179 = scalar_lea.vmem %s3, 64
    %v3180 = vld [vmem:[%s3179] sm:$0xff]
    %v3181 = vld [vmem:[%s3179 + $0x8] sm:$0xff]
    %v3182 = vmul.f32 %v3180, %v3162
    %v3183 = vmul.f32 %v3181, %v3163
    %v3184 = vadd.f32 %v3182, %v3183
    %3185 = vadd.xlane.f32.xlu0 %v3184
    %v3186 = vpop.xlane.xlu0 %3185
    %v3187 = vsub.f32 %v3178, %v3186
    %v3188 = vadd.f32 %v3043, %v3187
    %s3189 = scalar_lea.vmem [#allocation3], 120
    %v3190 = vld [vmem:[%s3189] sm:$0xff]
    %v3191 = vld [vmem:[%s3189 + $0x8] sm:$0xff]
    %v3192 = vld [vmem:[%s3189 + $0x10] sm:$0xff]
    %v3193 = vadd.f32 %v3190, %v3107
    %v3194 = vxor.u32 %v3193, 2147483648
    %v3195 = vmul.f32 %v3194, 1.442695
    %v3196 = vpow.pop %v3195
    %v3197 = vadd.f32 %v3196, 1.0
    %v3198 = vrcp.pop %v3197
    %v3199 = vmul.f32 %v3197, %v3198
    %v3200 = vsub.f32 1.0, %v3199
    %v3201 = vmul.f32 %v3198, %v3200
    %v3202 = vadd.f32 %v3198, %v3201
    %vm3203 = vweird.f32 %v3197
    %vm3204 = vweird.f32 %v3198
    %vm3205 = vmor %vm3203, %vm3204
    %v3206 = vsel %vm3205, %v3198, %v3202
    %v3207 = vand.u32 2147483647, %v3197
    %vm3208 = vcmp.eq.f32.partialorder %v3207, 8.507059e+37
    %v3209 = vand.u32 %v3197, 2147483648
    %v3210 = vor.u32 1.1754944e-38, %v3209
    %v3211 = vsel %vm3208, %v3210, %v3206
    %v3212 = vmul.f32 1.0, %v3211
    %v3213 = vadd.f32 %v3191, %v3120
    %v3214 = vxor.u32 %v3213, 2147483648
    %v3215 = vmul.f32 %v3214, 1.442695
    %v3216 = vpow.pop %v3215
    %v3217 = vadd.f32 %v3216, 1.0
    %v3218 = vrcp.pop %v3217
    %v3219 = vmul.f32 %v3217, %v3218
    %v3220 = vsub.f32 1.0, %v3219
    %v3221 = vmul.f32 %v3218, %v3220
    %v3222 = vadd.f32 %v3218, %v3221
    %vm3223 = vweird.f32 %v3217
    %vm3224 = vweird.f32 %v3218
    %vm3225 = vmor %vm3223, %vm3224
    %v3226 = vsel %vm3225, %v3218, %v3222
    %v3227 = vand.u32 2147483647, %v3217
    %vm3228 = vcmp.eq.f32.partialorder %v3227, 8.507059e+37
    %v3229 = vand.u32 %v3217, 2147483648
    %v3230 = vor.u32 1.1754944e-38, %v3229
    %v3231 = vsel %vm3228, %v3230, %v3226
    %v3232 = vmul.f32 1.0, %v3231
    %v3233 = vadd.f32 %v3133, %v2202
    %v3234 = vmul.f32 %v3212, %v3233
    %v3235 = vadd.f32 %v3192, %v3234
    %v3236 = vtanh.pop %v3235
    %v3237 = vsub.f32 1.0, %v3232
    %v3238 = vmul.f32 %v3237, %v3236
    %v3239 = vmul.f32 %v3232, %v3095
    %v3240 = vadd.f32 %v3238, %v3239
    %v3241 = vpack.c.bf16 %v3240, %v3240
    %3242 = vmatpush.bf16.msra.mxu0 %v2473
    %3243 = vmatpush.bf16.msra.mxu0 %v2468
    %3244 = vmatpush.bf16.msra.mxu0 %v2463
    %3245 = vmatpush.bf16.msra.mxu0 %v2458
    %3246 = vmatpush.bf16.msra.mxu0 %v2453
    %3247 = vmatpush.bf16.msra.mxu0 %v2448
    %3248 = vmatpush.bf16.msra.mxu0 %v2443
    %3249 = vmatpush.bf16.msra.mxu0 %v2438
    %3250 = vmatmul.bf16.gmra.mxu0 %v3241
    %v3251 = vpop.f32.mrf.mxu0
    %v3252 = vadd.f32 0.0, %v3251
    %v3253 = vpop.f32.mrf.mxu0
    %3254 = vdwg.mxu0
    %3255 = vmatpush.bf16.msra.mxu0 %v2474
    %3256 = vmatpush.bf16.msra.mxu0 %v2469
    %3257 = vmatpush.bf16.msra.mxu0 %v2464
    %3258 = vmatpush.bf16.msra.mxu0 %v2459
    %3259 = vmatpush.bf16.msra.mxu0 %v2454
    %3260 = vmatpush.bf16.msra.mxu0 %v2449
    %3261 = vmatpush.bf16.msra.mxu0 %v2444
    %3262 = vmatpush.bf16.msra.mxu0 %v2439
    %3263 = vmatmul.bf16.gmra.mxu0 %v3241
    %v3264 = vpop.f32.mrf.mxu0
    %v3265 = vadd.f32 0.0, %v3264
    %v3266 = vpop.f32.mrf.mxu0
    %3267 = vdwg.mxu0
    %3268 = vmatpush.bf16.msra.mxu0 %v2475
    %3269 = vmatpush.bf16.msra.mxu0 %v2470
    %3270 = vmatpush.bf16.msra.mxu0 %v2465
    %3271 = vmatpush.bf16.msra.mxu0 %v2460
    %3272 = vmatpush.bf16.msra.mxu0 %v2455
    %3273 = vmatpush.bf16.msra.mxu0 %v2450
    %3274 = vmatpush.bf16.msra.mxu0 %v2445
    %3275 = vmatpush.bf16.msra.mxu0 %v2440
    %3276 = vmatmul.bf16.gmra.mxu0 %v3241
    %v3277 = vpop.f32.mrf.mxu0
    %v3278 = vadd.f32 0.0, %v3277
    %v3279 = vpop.f32.mrf.mxu0
    %3280 = vdwg.mxu0
    %3281 = vmatpush.bf16.msra.mxu0 %v2476
    %3282 = vmatpush.bf16.msra.mxu0 %v2471
    %3283 = vmatpush.bf16.msra.mxu0 %v2466
    %3284 = vmatpush.bf16.msra.mxu0 %v2461
    %3285 = vmatpush.bf16.msra.mxu0 %v2456
    %3286 = vmatpush.bf16.msra.mxu0 %v2451
    %3287 = vmatpush.bf16.msra.mxu0 %v2446
    %3288 = vmatpush.bf16.msra.mxu0 %v2441
    %3289 = vmatmul.bf16.gmra.mxu0 %v3241
    %v3290 = vpop.f32.mrf.mxu0
    %v3291 = vadd.f32 0.0, %v3290
    %v3292 = vpop.f32.mrf.mxu0
    %3293 = vdwg.mxu0
    %3294 = vmatpush.bf16.msra.mxu0 %v2477
    %3295 = vmatpush.bf16.msra.mxu0 %v2472
    %3296 = vmatpush.bf16.msra.mxu0 %v2467
    %3297 = vmatpush.bf16.msra.mxu0 %v2462
    %3298 = vmatpush.bf16.msra.mxu0 %v2457
    %3299 = vmatpush.bf16.msra.mxu0 %v2452
    %3300 = vmatpush.bf16.msra.mxu0 %v2447
    %3301 = vmatpush.bf16.msra.mxu0 %v2442
    %3302 = vmatmul.bf16.gmra.mxu0 %v3241
    %v3303 = vpop.f32.mrf.mxu0
    %v3304 = vadd.f32 0.0, %v3303
    %v3305 = vpop.f32.mrf.mxu0
    %3306 = vdwg.mxu0
    %v3307 = vadd.f32 %v3291, %v2206
    %v3308 = vadd.f32 %v3304, %v2207
    %v3309 = vmax.f32 %v3307, %v3308
    %3310 = vmax.xlane.f32.xlu0 %v3309
    %v3311 = vpop.xlane.xlu0 %3310
    %v3312 = vsub.f32 %v3307, %v3311
    %v3313 = vsub.f32 %v3308, %v3311
    %v3314 = vmul.f32 %v3312, 1.442695
    %v3315 = vpow.pop %v3314
    %v3316 = vmul.f32 %v3313, 1.442695
    %v3317 = vpow.pop %v3316
    %v3318 = vadd.f32 %v3315, %v3317
    %3319 = vadd.xlane.f32.xlu0 %v3318
    %v3320 = vpop.xlane.xlu0 %3319
    %v3321 = vlog2.pop %v3320
    %v3322 = vmul.f32 %v3321, 0.6931472
    %v3323 = vadd.f32 %v3311, %v3322
    %s3324 = scalar_lea.vmem %s3, 80
    %v3325 = vld [vmem:[%s3324] sm:$0xff]
    %v3326 = vld [vmem:[%s3324 + $0x8] sm:$0xff]
    %v3327 = vmul.f32 %v3325, %v3307
    %v3328 = vmul.f32 %v3326, %v3308
    %v3329 = vadd.f32 %v3327, %v3328
    %3330 = vadd.xlane.f32.xlu0 %v3329
    %v3331 = vpop.xlane.xlu0 %3330
    %v3332 = vsub.f32 %v3323, %v3331
    %v3333 = vadd.f32 %v3188, %v3332
    %s3334 = scalar_lea.vmem [#allocation3], 144
    %v3335 = vld [vmem:[%s3334] sm:$0xff]
    %v3336 = vld [vmem:[%s3334 + $0x8] sm:$0xff]
    %v3337 = vld [vmem:[%s3334 + $0x10] sm:$0xff]
    %v3338 = vadd.f32 %v3335, %v3252
    %v3339 = vxor.u32 %v3338, 2147483648
    %v3340 = vmul.f32 %v3339, 1.442695
    %v3341 = vpow.pop %v3340
    %v3342 = vadd.f32 %v3341, 1.0
    %v3343 = vrcp.pop %v3342
    %v3344 = vmul.f32 %v3342, %v3343
    %v3345 = vsub.f32 1.0, %v3344
    %v3346 = vmul.f32 %v3343, %v3345
    %v3347 = vadd.f32 %v3343, %v3346
    %vm3348 = vweird.f32 %v3342
    %vm3349 = vweird.f32 %v3343
    %vm3350 = vmor %vm3348, %vm3349
    %v3351 = vsel %vm3350, %v3343, %v3347
    %v3352 = vand.u32 2147483647, %v3342
    %vm3353 = vcmp.eq.f32.partialorder %v3352, 8.507059e+37
    %v3354 = vand.u32 %v3342, 2147483648
    %v3355 = vor.u32 1.1754944e-38, %v3354
    %v3356 = vsel %vm3353, %v3355, %v3351
    %v3357 = vmul.f32 1.0, %v3356
    %v3358 = vadd.f32 %v3336, %v3265
    %v3359 = vxor.u32 %v3358, 2147483648
    %v3360 = vmul.f32 %v3359, 1.442695
    %v3361 = vpow.pop %v3360
    %v3362 = vadd.f32 %v3361, 1.0
    %v3363 = vrcp.pop %v3362
    %v3364 = vmul.f32 %v3362, %v3363
    %v3365 = vsub.f32 1.0, %v3364
    %v3366 = vmul.f32 %v3363, %v3365
    %v3367 = vadd.f32 %v3363, %v3366
    %vm3368 = vweird.f32 %v3362
    %vm3369 = vweird.f32 %v3363
    %vm3370 = vmor %vm3368, %vm3369
    %v3371 = vsel %vm3370, %v3363, %v3367
    %v3372 = vand.u32 2147483647, %v3362
    %vm3373 = vcmp.eq.f32.partialorder %v3372, 8.507059e+37
    %v3374 = vand.u32 %v3362, 2147483648
    %v3375 = vor.u32 1.1754944e-38, %v3374
    %v3376 = vsel %vm3373, %v3375, %v3371
    %v3377 = vmul.f32 1.0, %v3376
    %v3378 = vadd.f32 %v3278, %v2202
    %v3379 = vmul.f32 %v3357, %v3378
    %v3380 = vadd.f32 %v3337, %v3379
    %v3381 = vtanh.pop %v3380
    %v3382 = vsub.f32 1.0, %v3377
    %v3383 = vmul.f32 %v3382, %v3381
    %v3384 = vmul.f32 %v3377, %v3240
    %v3385 = vadd.f32 %v3383, %v3384
    %v3386 = vpack.c.bf16 %v3385, %v3385
    %3387 = vmatpush.bf16.msra.mxu0 %v2473
    %3388 = vmatpush.bf16.msra.mxu0 %v2468
    %3389 = vmatpush.bf16.msra.mxu0 %v2463
    %3390 = vmatpush.bf16.msra.mxu0 %v2458
    %3391 = vmatpush.bf16.msra.mxu0 %v2453
    %3392 = vmatpush.bf16.msra.mxu0 %v2448
    %3393 = vmatpush.bf16.msra.mxu0 %v2443
    %3394 = vmatpush.bf16.msra.mxu0 %v2438
    %3395 = vmatmul.bf16.gmra.mxu0 %v3386
    %v3396 = vpop.f32.mrf.mxu0
    %v3397 = vadd.f32 0.0, %v3396
    %v3398 = vpop.f32.mrf.mxu0
    %3399 = vdwg.mxu0
    %3400 = vmatpush.bf16.msra.mxu0 %v2474
    %3401 = vmatpush.bf16.msra.mxu0 %v2469
    %3402 = vmatpush.bf16.msra.mxu0 %v2464
    %3403 = vmatpush.bf16.msra.mxu0 %v2459
    %3404 = vmatpush.bf16.msra.mxu0 %v2454
    %3405 = vmatpush.bf16.msra.mxu0 %v2449
    %3406 = vmatpush.bf16.msra.mxu0 %v2444
    %3407 = vmatpush.bf16.msra.mxu0 %v2439
    %3408 = vmatmul.bf16.gmra.mxu0 %v3386
    %v3409 = vpop.f32.mrf.mxu0
    %v3410 = vadd.f32 0.0, %v3409
    %v3411 = vpop.f32.mrf.mxu0
    %3412 = vdwg.mxu0
    %3413 = vmatpush.bf16.msra.mxu0 %v2475
    %3414 = vmatpush.bf16.msra.mxu0 %v2470
    %3415 = vmatpush.bf16.msra.mxu0 %v2465
    %3416 = vmatpush.bf16.msra.mxu0 %v2460
    %3417 = vmatpush.bf16.msra.mxu0 %v2455
    %3418 = vmatpush.bf16.msra.mxu0 %v2450
    %3419 = vmatpush.bf16.msra.mxu0 %v2445
    %3420 = vmatpush.bf16.msra.mxu0 %v2440
    %3421 = vmatmul.bf16.gmra.mxu0 %v3386
    %v3422 = vpop.f32.mrf.mxu0
    %v3423 = vadd.f32 0.0, %v3422
    %v3424 = vpop.f32.mrf.mxu0
    %3425 = vdwg.mxu0
    %3426 = vmatpush.bf16.msra.mxu0 %v2476
    %3427 = vmatpush.bf16.msra.mxu0 %v2471
    %3428 = vmatpush.bf16.msra.mxu0 %v2466
    %3429 = vmatpush.bf16.msra.mxu0 %v2461
    %3430 = vmatpush.bf16.msra.mxu0 %v2456
    %3431 = vmatpush.bf16.msra.mxu0 %v2451
    %3432 = vmatpush.bf16.msra.mxu0 %v2446
    %3433 = vmatpush.bf16.msra.mxu0 %v2441
    %3434 = vmatmul.bf16.gmra.mxu0 %v3386
    %v3435 = vpop.f32.mrf.mxu0
    %v3436 = vadd.f32 0.0, %v3435
    %v3437 = vpop.f32.mrf.mxu0
    %3438 = vdwg.mxu0
    %3439 = vmatpush.bf16.msra.mxu0 %v2477
    %3440 = vmatpush.bf16.msra.mxu0 %v2472
    %3441 = vmatpush.bf16.msra.mxu0 %v2467
    %3442 = vmatpush.bf16.msra.mxu0 %v2462
    %3443 = vmatpush.bf16.msra.mxu0 %v2457
    %3444 = vmatpush.bf16.msra.mxu0 %v2452
    %3445 = vmatpush.bf16.msra.mxu0 %v2447
    %3446 = vmatpush.bf16.msra.mxu0 %v2442
    %3447 = vmatmul.bf16.gmra.mxu0 %v3386
    %v3448 = vpop.f32.mrf.mxu0
    %v3449 = vadd.f32 0.0, %v3448
    %v3450 = vpop.f32.mrf.mxu0
    %3451 = vdwg.mxu0
    %v3452 = vadd.f32 %v3436, %v2206
    %v3453 = vadd.f32 %v3449, %v2207
    %v3454 = vmax.f32 %v3452, %v3453
    %3455 = vmax.xlane.f32.xlu0 %v3454
    %v3456 = vpop.xlane.xlu0 %3455
    %v3457 = vsub.f32 %v3452, %v3456
    %v3458 = vsub.f32 %v3453, %v3456
    %v3459 = vmul.f32 %v3457, 1.442695
    %v3460 = vpow.pop %v3459
    %v3461 = vmul.f32 %v3458, 1.442695
    %v3462 = vpow.pop %v3461
    %v3463 = vadd.f32 %v3460, %v3462
    %3464 = vadd.xlane.f32.xlu0 %v3463
    %v3465 = vpop.xlane.xlu0 %3464
    %v3466 = vlog2.pop %v3465
    %v3467 = vmul.f32 %v3466, 0.6931472
    %v3468 = vadd.f32 %v3456, %v3467
    %s3469 = scalar_lea.vmem %s3, 96
    %v3470 = vld [vmem:[%s3469] sm:$0xff]
    %v3471 = vld [vmem:[%s3469 + $0x8] sm:$0xff]
    %v3472 = vmul.f32 %v3470, %v3452
    %v3473 = vmul.f32 %v3471, %v3453
    %v3474 = vadd.f32 %v3472, %v3473
    %3475 = vadd.xlane.f32.xlu0 %v3474
    %v3476 = vpop.xlane.xlu0 %3475
    %v3477 = vsub.f32 %v3468, %v3476
    %v3478 = vadd.f32 %v3333, %v3477
    %s3479 = scalar_lea.vmem [#allocation3], 168
    %v3480 = vld [vmem:[%s3479] sm:$0xff]
    %v3481 = vld [vmem:[%s3479 + $0x8] sm:$0xff]
    %v3482 = vld [vmem:[%s3479 + $0x10] sm:$0xff]
    %v3483 = vadd.f32 %v3480, %v3397
    %v3484 = vxor.u32 %v3483, 2147483648
    %v3485 = vmul.f32 %v3484, 1.442695
    %v3486 = vpow.pop %v3485
    %v3487 = vadd.f32 %v3486, 1.0
    %v3488 = vrcp.pop %v3487
    %v3489 = vmul.f32 %v3487, %v3488
    %v3490 = vsub.f32 1.0, %v3489
    %v3491 = vmul.f32 %v3488, %v3490
    %v3492 = vadd.f32 %v3488, %v3491
    %vm3493 = vweird.f32 %v3487
    %vm3494 = vweird.f32 %v3488
    %vm3495 = vmor %vm3493, %vm3494
    %v3496 = vsel %vm3495, %v3488, %v3492
    %v3497 = vand.u32 2147483647, %v3487
    %vm3498 = vcmp.eq.f32.partialorder %v3497, 8.507059e+37
    %v3499 = vand.u32 %v3487, 2147483648
    %v3500 = vor.u32 1.1754944e-38, %v3499
    %v3501 = vsel %vm3498, %v3500, %v3496
    %v3502 = vmul.f32 1.0, %v3501
    %v3503 = vadd.f32 %v3481, %v3410
    %v3504 = vxor.u32 %v3503, 2147483648
    %v3505 = vmul.f32 %v3504, 1.442695
    %v3506 = vpow.pop %v3505
    %v3507 = vadd.f32 %v3506, 1.0
    %v3508 = vrcp.pop %v3507
    %v3509 = vmul.f32 %v3507, %v3508
    %v3510 = vsub.f32 1.0, %v3509
    %v3511 = vmul.f32 %v3508, %v3510
    %v3512 = vadd.f32 %v3508, %v3511
    %vm3513 = vweird.f32 %v3507
    %vm3514 = vweird.f32 %v3508
    %vm3515 = vmor %vm3513, %vm3514
    %v3516 = vsel %vm3515, %v3508, %v3512
    %v3517 = vand.u32 2147483647, %v3507
    %vm3518 = vcmp.eq.f32.partialorder %v3517, 8.507059e+37
    %v3519 = vand.u32 %v3507, 2147483648
    %v3520 = vor.u32 1.1754944e-38, %v3519
    %v3521 = vsel %vm3518, %v3520, %v3516
    %v3522 = vmul.f32 1.0, %v3521
    %v3523 = vadd.f32 %v3423, %v2202
    %v3524 = vmul.f32 %v3502, %v3523
    %v3525 = vadd.f32 %v3482, %v3524
    %v3526 = vtanh.pop %v3525
    %v3527 = vsub.f32 1.0, %v3522
    %v3528 = vmul.f32 %v3527, %v3526
    %v3529 = vmul.f32 %v3522, %v3385
    %v3530 = vadd.f32 %v3528, %v3529
    %v3531 = vpack.c.bf16 %v3530, %v3530
    %3532 = vmatpush.bf16.msra.mxu0 %v2476
    %3533 = vmatpush.bf16.msra.mxu0 %v2471
    %3534 = vmatpush.bf16.msra.mxu0 %v2466
    %3535 = vmatpush.bf16.msra.mxu0 %v2461
    %3536 = vmatpush.bf16.msra.mxu0 %v2456
    %3537 = vmatpush.bf16.msra.mxu0 %v2451
    %3538 = vmatpush.bf16.msra.mxu0 %v2446
    %3539 = vmatpush.bf16.msra.mxu0 %v2441
    %3540 = vmatmul.bf16.gmra.mxu0 %v3531
    %v3541 = vpop.f32.mrf.mxu0
    %v3542 = vadd.f32 0.0, %v3541
    %v3543 = vpop.f32.mrf.mxu0
    %3544 = vdwg.mxu0
    %3545 = vmatpush.bf16.msra.mxu0 %v2477
    %3546 = vmatpush.bf16.msra.mxu0 %v2472
    %3547 = vmatpush.bf16.msra.mxu0 %v2467
    %3548 = vmatpush.bf16.msra.mxu0 %v2462
    %3549 = vmatpush.bf16.msra.mxu0 %v2457
    %3550 = vmatpush.bf16.msra.mxu0 %v2452
    %3551 = vmatpush.bf16.msra.mxu0 %v2447
    %3552 = vmatpush.bf16.msra.mxu0 %v2442
    %3553 = vmatmul.bf16.gmra.mxu0 %v3531
    %v3554 = vpop.f32.mrf.mxu0
    %v3555 = vadd.f32 0.0, %v3554
    %v3556 = vpop.f32.mrf.mxu0
    %3557 = vdwg.mxu0
    %v3558 = vadd.f32 %v3542, %v2206
    %v3559 = vadd.f32 %v3555, %v2207
    %v3560 = vmax.f32 %v3558, %v3559
    %3561 = vmax.xlane.f32.xlu0 %v3560
    %v3562 = vpop.xlane.xlu0 %3561
    %v3563 = vsub.f32 %v3558, %v3562
    %v3564 = vsub.f32 %v3559, %v3562
    %v3565 = vmul.f32 %v3563, 1.442695
    %v3566 = vpow.pop %v3565
    %v3567 = vmul.f32 %v3564, 1.442695
    %v3568 = vpow.pop %v3567
    %v3569 = vadd.f32 %v3566, %v3568
    %3570 = vadd.xlane.f32.xlu0 %v3569
    %v3571 = vpop.xlane.xlu0 %3570
    %v3572 = vlog2.pop %v3571
    %v3573 = vmul.f32 %v3572, 0.6931472
    %v3574 = vadd.f32 %v3562, %v3573
    %s3575 = scalar_lea.vmem %s3, 112
    %v3576 = vld [vmem:[%s3575] sm:$0xff]
    %v3577 = vld [vmem:[%s3575 + $0x8] sm:$0xff]
    %v3578 = vmul.f32 %v3576, %v3558
    %v3579 = vmul.f32 %v3577, %v3559
    %v3580 = vadd.f32 %v3578, %v3579
    %3581 = vadd.xlane.f32.xlu0 %v3580
    %v3582 = vpop.xlane.xlu0 %3581
    %v3583 = vsub.f32 %v3574, %v3582
    %v3584 = vadd.f32 %v3478, %v3583
    %v3585 = vrot.slane %v3584, 4
    %v3586 = vadd.f32 %v3584, %v3585
    %v3587 = vrot.slane %v3586, 2
    %v3588 = vadd.f32 %v3586, %v3587
    %v3589 = vrot.slane %v3588, 1
    %v3590 = vadd.f32 %v3588, %v3589
    %v3591 = vrcp.pop 64.0
    %v3592 = vmul.f32 64.0, %v3591
    %v3593 = vsub.f32 1.0, %v3592
    %v3594 = vmul.f32 %v3591, %v3593
    %v3595 = vadd.f32 %v3591, %v3594
    %vm3596 = vweird.f32 %v3591
    %v3597 = vsel %vm3596, %v3591, %v3595
    %v3598 = vmul.f32 %v3590, %v3597
    %3599 = vst.msk [vmem:[#allocation4] sm:$0x1] %vm1730, %v3598
    // Predicated region
    $region66: #{rnn_vae_forward.1} parent=1 // pred_check
      _
    $region67: #{rnn_vae_forward.1} parent=1 // pred_check_branch
      %3601 = sbr.rel (0) target = $region69
    $region68: #{rnn_vae_forward.1} parent=1 // pred_region
      %3603 = vsyncadd [#allocation5], 0
      %s3605 = sshll.u32 [#allocation4], 4
      %s3606 = int_to_ptr.vmem [resolvable:$true] %s3605
      %s3607 = sshll.u32 %s16, 4
      %s3608 = int_to_ptr.hbm [resolvable:$true] %s3607
      %3610 = dma.vmem_to_hbm [thread:$0]  %s3606, 16, %s3608, [#allocation5]
    $region69: #{rnn_vae_forward.1} parent=1 // pred_fallthru
      _
    // Predicated region
    $region70: #{rnn_vae_forward.1} parent=1 // pred_check
      _
    $region71: #{rnn_vae_forward.1} parent=1 // pred_check_branch
      %3612 = sbr.rel (0) target = $region73
    $region72: #{rnn_vae_forward.1} parent=1 // pred_region
      %3614 = vsyncadd [#allocation7], 0
      %s3616 = sshll.u32 [#allocation6], 4
      %s3617 = int_to_ptr.vmem [resolvable:$true] %s3616
      %s3618 = sshll.u32 %s17, 4
      %s3619 = int_to_ptr.hbm [resolvable:$true] %s3618
      %3621 = dma.vmem_to_hbm [thread:$0]  %s3617, 16, %s3619, [#allocation7]
    $region73: #{rnn_vae_forward.1} parent=1 // pred_fallthru
      _
    // Predicated region
    $region74: #{rnn_vae_forward.1} parent=1 // pred_check
      _
    $region75: #{rnn_vae_forward.1} parent=1 // pred_check_branch
      %3623 = sbr.rel (0) target = $region77
    $region76: #{rnn_vae_forward.1} parent=1 // pred_region
      %3625 = dma.done [#allocation5], 16
    $region77: #{rnn_vae_forward.1} parent=1 // pred_fallthru
      _
    // Predicated region
    $region78: #{rnn_vae_forward.1} parent=1 // pred_check
      _
    $region79: #{rnn_vae_forward.1} parent=1 // pred_check_branch
      %3627 = sbr.rel (0) target = $region81
    $region80: #{rnn_vae_forward.1} parent=1 // pred_region
      %3629 = dma.done [#allocation7], 16
    $region81: #{rnn_vae_forward.1} parent=1 // pred_fallthru
      _
    %3630 = vsyncpa [#allocation5], 1
    %3631 = vsyncpa [#allocation7], 1

</llo_original>
